<compile_context>
chip_gen: v5e
topology: v5e:2x2
jax: 0.10.0
libtpu: 0.0.40
codegen_flags: <defaults>
</compile_context>

<pallas_src>
import functools

import jax
import jax.numpy as jnp
from jax.experimental import pallas as pl
from jax.experimental.pallas import tpu as pltpu


def _round_up(x, m):
    return -(-x // m) * m


def _decoder_kernel(z_ref,
                    wih_ref, whh_ref, b_ref,
                    wof_ref, wor_ref, bout_ref,
                    out_ref,
                    hf_ref, hr_ref):
    """Whole Decoder.forward for one batch tile, both directions fused.

    z_ref    : (Bb, L)        latent input tile
    wih_ref  : (L, 8*Hp)      input->gates, both directions fused (f32)
    whh_ref  : (2*Hp, 8*Hp)   block-diag hidden->gates (bf16 or f32)
    b_ref    : (1, 8*Hp)      merged bias_ih + bias_hh, both directions
    wof/wor  : (Hp, O)        fc_out weight, forward / reverse halves
    bout_ref : (1, O)
    out_ref  : (T, Bb, O)     time-major output tile
    hf/hr_ref: (T, Bb, Hp)    time-major VMEM hidden history per direction
    """
    Bb = z_ref.shape[0]
    Hp2 = whh_ref.shape[0]          # 2*Hp (fwd | rev lanes)
    Hp = Hp2 // 2
    T = out_ref.shape[0]
    O = out_ref.shape[2]

    z = z_ref[...].astype(jnp.float32)
    # The input at every timestep is the same z (z.unsqueeze(1).repeat), so
    # the input projection + bias is hoisted out of the recurrence entirely.
    x_proj = jnp.dot(z, wih_ref[...], preferred_element_type=jnp.float32) \
        + b_ref[...]                                          # (Bb, 8*Hp)

    whh = whh_ref[...]              # bf16 on the perf path -> 1-pass MXU
    rdt = whh.dtype

    h = jnp.zeros((Bb, Hp2), jnp.float32)                     # [h_f | h_r]
    c = jnp.zeros((Bb, Hp2), jnp.float32)                     # [c_f | c_r]

    # T = output_window is a compile-time constant; static unroll is fine at
    # small T and gives the LLO scheduler full visibility of the chain.
    # TODO(synk): switch to lax.fori_loop + dynamic pl.ds stores if
    # output_window grows beyond ~24 (code size / vreg pressure).
    for t in range(T):
        # ONE fused recurrent matmul for both directions (block-diag whh).
        gates = x_proj + jnp.dot(h.astype(rdt), whh,
                                 preferred_element_type=jnp.float32)
        # Packed gate order (i, f, o, g), each block = [fwd Hp | rev Hp]:
        # one sigmoid slab over all sigmoid gates, one tanh for g.
        sig = jax.nn.sigmoid(gates[:, :3 * Hp2])
        i = sig[:, 0 * Hp2:1 * Hp2]
        f = sig[:, 1 * Hp2:2 * Hp2]
        o = sig[:, 2 * Hp2:3 * Hp2]
        g = jnp.tanh(gates[:, 3 * Hp2:4 * Hp2])
        c = f * c + i * g
        h = o * jnp.tanh(c)
        # Time-major, contiguous (Bb, Hp) slab stores at static indices.
        # Reverse-scan step t is the reverse hidden for output time T-1-t.
        hf_ref[t] = h[:, :Hp]
        hr_ref[T - 1 - t] = h[:, Hp:]

    # Batched output projection: Swish on both halves, one matmul per
    # direction over all (T*Bb) rows, one bulk store.
    hf = hf_ref[...]                                          # (T, Bb, Hp)
    hr = hr_ref[...]
    af = (hf * jax.nn.sigmoid(hf)).reshape(T * Bb, Hp)
    ar = (hr * jax.nn.sigmoid(hr)).reshape(T * Bb, Hp)
    y = (jnp.dot(af, wof_ref[...], preferred_element_type=jnp.float32)
         + jnp.dot(ar, wor_ref[...], preferred_element_type=jnp.float32)
         + bout_ref[...])                                     # (T*Bb, O)
    out_ref[...] = y.reshape(T, Bb, O).astype(out_ref.dtype)


def pack_params(params, hidden_dim, *, recurrent_dtype=jnp.bfloat16):
    """One-time host-side repack into the fused kernel layout.

    - PyTorch gate order (i,f,g,o) -> packed (i,f,o,g); each gate zero-padded
      to Hp = round_up(H, 128) lanes (padding provably stays inert: zero
      weights/bias -> pad preact 0 -> pad lanes of c/h stay 0).
    - Forward and reverse directions fused along the gate columns
      [i_f|i_r | f_f|f_r | o_f|o_r | g_f|g_r] with a block-diagonal
      hidden->gate weight over rows [h_f | h_r].
    - hidden->gate weight cast to `recurrent_dtype` (bf16 default) for
      single-pass MXU on the recurrent critical path.
    - fc_out weight split into forward / reverse halves.
    """
    H = hidden_dim
    Hp = _round_up(H, 128)
    order = (0, 1, 3, 2)   # torch (i, f, g, o) -> packed (i, f, o, g)
    L = params["wih_f"].shape[1]

    def split_gates(w):    # (4H, IN) -> list of 4 (H, IN) in packed order
        w4 = w.reshape(4, H, -1)
        return [w4[g] for g in order]

    gih = {"f": split_gates(params["wih_f"]), "r": split_gates(params["wih_r"])}
    ghh = {"f": split_gates(params["whh_f"]), "r": split_gates(params["whh_r"])}
    gb = {"f": split_gates((params["bih_f"] + params["bhh_f"])[:, None]),
          "r": split_gates((params["bih_r"] + params["bhh_r"])[:, None])}

    wih = jnp.zeros((L, 8 * Hp), jnp.float32)
    whh = jnp.zeros((2 * Hp, 8 * Hp), jnp.float32)
    bias = jnp.zeros((1, 8 * Hp), jnp.float32)

    for gidx in range(4):                      # packed gate index
        for didx, d in enumerate(("f", "r")):  # direction within the gate
            col0 = gidx * 2 * Hp + didx * Hp
            row0 = didx * Hp
            wih = wih.at[:, col0:col0 + H].set(gih[d][gidx].T)
            whh = whh.at[row0:row0 + H, col0:col0 + H].set(ghh[d][gidx].T)
            bias = bias.at[0, col0:col0 + H].set(gb[d][gidx][:, 0])

    w_out = params["w_out"]                    # (O, 2H)
    O = w_out.shape[0]
    wof = jnp.zeros((Hp, O), jnp.float32).at[:H, :].set(w_out[:, :H].T)
    wor = jnp.zeros((Hp, O), jnp.float32).at[:H, :].set(w_out[:, H:].T)

    return {
        "wih": wih,
        "whh": whh.astype(recurrent_dtype),
        "b": bias,
        "w_out_f": wof,
        "w_out_r": wor,
        "b_out": params["b_out"][None, :].astype(jnp.float32),
    }


def decoder_forward(z, packed, output_window, *, batch_block=8):
    """JAX wrapper: batch-parallel grid, weights resident in VMEM.

    For large B, size batch_block toward the MXU row count (128 on v5e,
    256 on v6e/v7x) but keep >= 2 grid steps so v7x's two TensorCores both
    get work.  At the shipped B=2 the grid is (1,) and this is a no-op.
    """
    B, L = z.shape
    Hp, O = packed["w_out_f"].shape
    T = output_window

    bb = min(B, batch_block)
    grid = (pl.cdiv(B, bb),)

    def resident(arr):
        n = arr.ndim
        return pl.BlockSpec(arr.shape, lambda b, n=n: (0,) * n)

    names = ("wih", "whh", "b", "w_out_f", "w_out_r", "b_out")
    in_specs = [pl.BlockSpec((bb, L), lambda b: (b, 0))]
    in_specs += [resident(packed[k]) for k in names]

    out_tb = pl.pallas_call(
        _decoder_kernel,
        out_shape=jax.ShapeDtypeStruct((T, B, O), jnp.float32),
        grid=grid,
        in_specs=in_specs,
        out_specs=pl.BlockSpec((T, bb, O), lambda b: (0, b, 0)),
        scratch_shapes=[pltpu.VMEM((T, bb, Hp), jnp.float32),
                        pltpu.VMEM((T, bb, Hp), jnp.float32)],
        compiler_params=pltpu.CompilerParams(
            dimension_semantics=("parallel",)),
    )(z, *[packed[k] for k in names])

    # Time-major -> batch-major: tiny wrapper-side layout plumbing only.
    return jnp.transpose(out_tb, (1, 0, 2))


def decoder_reference(z, params, output_window):
    """Pure-JAX reference mirroring torch.nn.LSTM(bidirectional) + Swish + Linear."""
    B, L = z.shape
    H = params["whh_f"].shape[1]
    T = output_window
    x = jnp.broadcast_to(z[:, None, :], (B, T, L))

    def run_dir(xs, wih, whh, bih, bhh):
        h = jnp.zeros((B, H), jnp.float32)
        c = jnp.zeros((B, H), jnp.float32)
        out = []
        for t in range(xs.shape[1]):
            gates = xs[:, t, :] @ wih.T + bih + h @ whh.T + bhh
            i = jax.nn.sigmoid(gates[:, 0 * H:1 * H])
            f = jax.nn.sigmoid(gates[:, 1 * H:2 * H])
            g = jnp.tanh(gates[:, 2 * H:3 * H])
            o = jax.nn.sigmoid(gates[:, 3 * H:4 * H])
            c = f * c + i * g
            h = o * jnp.tanh(c)
            out.append(h)
        return jnp.stack(out, axis=1)

    fwd = run_dir(x, params["wih_f"], params["whh_f"], params["bih_f"], params["bhh_f"])
    bwd = run_dir(x[:, ::-1, :], params["wih_r"], params["whh_r"],
                  params["bih_r"], params["bhh_r"])[:, ::-1, :]
    out = jnp.concatenate([fwd, bwd], axis=-1)
    out = out * jax.nn.sigmoid(out)
    return out @ params["w_out"].T + params["b_out"]


def init_params(key, input_size, hidden_dim, latent_dim):
    """Deterministic init with PyTorch-style uniform(-1/sqrt(H), 1/sqrt(H))."""
    ks = jax.random.split(key, 10)
    kH = 1.0 / jnp.sqrt(hidden_dim)
    kO = 1.0 / jnp.sqrt(2 * hidden_dim)
    u = lambda k, shape, s: jax.random.uniform(k, shape, jnp.float32, -s, s)
    return {
        "wih_f": u(ks[0], (4 * hidden_dim, latent_dim), kH),
        "whh_f": u(ks[1], (4 * hidden_dim, hidden_dim), kH),
        "bih_f": u(ks[2], (4 * hidden_dim,), kH),
        "bhh_f": u(ks[3], (4 * hidden_dim,), kH),
        "wih_r": u(ks[4], (4 * hidden_dim, latent_dim), kH),
        "whh_r": u(ks[5], (4 * hidden_dim, hidden_dim), kH),
        "bih_r": u(ks[6], (4 * hidden_dim,), kH),
        "bhh_r": u(ks[7], (4 * hidden_dim,), kH),
        "w_out": u(ks[8], (input_size, 2 * hidden_dim), kO),
        "b_out": u(ks[9], (input_size,), kO),
    }


if __name__ == "__main__":
    # Decoder(input_size, hidden_dim, latent_dim, output_window)
    B, input_size, hidden_dim, latent_dim, output_window = 2, 4, 16, 8, 8

    key = jax.random.PRNGKey(0)
    kz, kp = jax.random.split(key)
    z = jax.random.normal(kz, (B, latent_dim), jnp.float32)
    params = init_params(kp, input_size, hidden_dim, latent_dim)

    ref = decoder_reference(z, params, output_window)
    run = jax.jit(functools.partial(decoder_forward, output_window=output_window))

    # 1) f32 recurrence: exact-semantics check against the f32 reference.
    packed_f32 = pack_params(params, hidden_dim, recurrent_dtype=jnp.float32)
    out_f32 = jax.block_until_ready(run(z, packed_f32))
    assert out_f32.shape == (B, output_window, input_size), out_f32.shape
    assert jnp.allclose(out_f32, ref, rtol=1e-4, atol=1e-4), \
        float(jnp.max(jnp.abs(out_f32 - ref)))

    # 2) bf16 recurrent-matmul operands (default perf path for v6e/v7x),
    #    f32 accumulation; tolerance sized for an 8-step bf16 recurrence.
    packed = pack_params(params, hidden_dim)
    out = jax.block_until_ready(run(z, packed))
    assert out.shape == (B, output_window, input_size), out.shape
    assert jnp.allclose(out, ref, rtol=2e-2, atol=2e-2), \
        float(jnp.max(jnp.abs(out - ref)))

    print("KERNEL_OK")
</pallas_src>

<mosaic_0001>
module attributes {stable_mosaic.version = 11 : i64} {
  func.func @_decoder_kernel(%arg0: i32, %arg1: memref<2x8xf32, #tpu.memory_space<vmem>>, %arg2: memref<8x1024xf32, #tpu.memory_space<vmem>>, %arg3: memref<256x1024xf32, #tpu.memory_space<vmem>>, %arg4: memref<1x1024xf32, #tpu.memory_space<vmem>>, %arg5: memref<128x4xf32, #tpu.memory_space<vmem>>, %arg6: memref<128x4xf32, #tpu.memory_space<vmem>>, %arg7: memref<1x4xf32, #tpu.memory_space<vmem>>, %arg8: memref<8x2x4xf32, #tpu.memory_space<vmem>>, %arg9: memref<8x2x128xf32, #tpu.memory_space<vmem>>, %arg10: memref<8x2x128xf32, #tpu.memory_space<vmem>>) attributes {dimension_semantics = [#tpu.dimension_semantics<parallel>], iteration_bounds = array<i64: 1>, scalar_prefetch = 0 : i64, scratch_operands = 2 : i64, tpu.core_type = #tpu.core_type<tc>, window_params = [{transform_indices = @transform_0, window_bounds = array<i64: 2, 8>}, {pipeline_mode = #tpu.pipeline_mode<synchronous>, transform_indices = @transform_1, window_bounds = array<i64: 8, 1024>}, {pipeline_mode = #tpu.pipeline_mode<synchronous>, transform_indices = @transform_2, window_bounds = array<i64: 256, 1024>}, {pipeline_mode = #tpu.pipeline_mode<synchronous>, transform_indices = @transform_3, window_bounds = array<i64: 1, 1024>}, {pipeline_mode = #tpu.pipeline_mode<synchronous>, transform_indices = @transform_4, window_bounds = array<i64: 128, 4>}, {pipeline_mode = #tpu.pipeline_mode<synchronous>, transform_indices = @transform_5, window_bounds = array<i64: 128, 4>}, {pipeline_mode = #tpu.pipeline_mode<synchronous>, transform_indices = @transform_6, window_bounds = array<i64: 1, 4>}, {transform_indices = @transform_7, window_bounds = array<i64: 8, 2, 4>}]} {
    %c0 = arith.constant 0 : index
    %c0_0 = arith.constant 0 : index
    %0 = vector.load %arg1[%c0, %c0_0] : memref<2x8xf32, #tpu.memory_space<vmem>>, vector<2x8xf32>
    %c0_1 = arith.constant 0 : index
    %c0_2 = arith.constant 0 : index
    %1 = vector.load %arg2[%c0_1, %c0_2] : memref<8x1024xf32, #tpu.memory_space<vmem>>, vector<8x1024xf32>
    %cst = arith.constant dense<0.000000e+00> : vector<2x1024xf32>
    %2 = tpu.matmul %0, %1, %cst {dimension_numbers = #tpu.dot_dimension_numbers<[1], [0], [0], [1], [0, 0, 1, 1], [], []>} : vector<2x8xf32>, vector<8x1024xf32>, vector<2x1024xf32> -> vector<2x1024xf32>
    %c0_3 = arith.constant 0 : index
    %c0_4 = arith.constant 0 : index
    %3 = vector.load %arg4[%c0_3, %c0_4] : memref<1x1024xf32, #tpu.memory_space<vmem>>, vector<1x1024xf32>
    %4 = vector.broadcast %3 : vector<1x1024xf32> to vector<2x1024xf32>
    %5 = arith.addf %2, %4 : vector<2x1024xf32>
    %c0_5 = arith.constant 0 : index
    %c0_6 = arith.constant 0 : index
    %6 = vector.load %arg3[%c0_5, %c0_6] : memref<256x1024xf32, #tpu.memory_space<vmem>>, vector<256x1024xf32>
    %cst_7 = arith.constant 0.000000e+00 : f32
    %7 = vector.broadcast %cst_7 : f32 to vector<2x256xf32>
    %cst_8 = arith.constant 0.000000e+00 : f32
    %8 = vector.broadcast %cst_8 : f32 to vector<2x256xf32>
    %cst_9 = arith.constant dense<0.000000e+00> : vector<2x1024xf32>
    %9 = tpu.matmul %7, %6, %cst_9 {dimension_numbers = #tpu.dot_dimension_numbers<[1], [0], [0], [1], [0, 0, 1, 1], [], []>} : vector<2x256xf32>, vector<256x1024xf32>, vector<2x1024xf32> -> vector<2x1024xf32>
    %10 = arith.addf %5, %9 : vector<2x1024xf32>
    %11 = vector.extract_strided_slice %10 {offsets = [0, 0], sizes = [2, 768], strides = [1, 1]} : vector<2x1024xf32> to vector<2x768xf32>
    %12 = arith.negf %11 : vector<2x768xf32>
    %13 = math.exp %12 : vector<2x768xf32>
    %cst_10 = arith.constant 1.000000e+00 : f32
    %14 = vector.broadcast %cst_10 : f32 to vector<2x768xf32>
    %15 = arith.addf %14, %13 : vector<2x768xf32>
    %16 = arith.divf %14, %15 : vector<2x768xf32>
    %17 = vector.extract_strided_slice %16 {offsets = [0, 0], sizes = [2, 256], strides = [1, 1]} : vector<2x768xf32> to vector<2x256xf32>
    %18 = vector.extract_strided_slice %16 {offsets = [0, 256], sizes = [2, 256], strides = [1, 1]} : vector<2x768xf32> to vector<2x256xf32>
    %19 = vector.extract_strided_slice %16 {offsets = [0, 512], sizes = [2, 256], strides = [1, 1]} : vector<2x768xf32> to vector<2x256xf32>
    %20 = vector.extract_strided_slice %10 {offsets = [0, 768], sizes = [2, 256], strides = [1, 1]} : vector<2x1024xf32> to vector<2x256xf32>
    %21 = math.tanh %20 : vector<2x256xf32>
    %22 = arith.mulf %18, %8 : vector<2x256xf32>
    %23 = arith.mulf %17, %21 : vector<2x256xf32>
    %24 = arith.addf %22, %23 : vector<2x256xf32>
    %25 = math.tanh %24 : vector<2x256xf32>
    %26 = arith.mulf %19, %25 : vector<2x256xf32>
    %27 = vector.extract_strided_slice %26 {offsets = [0, 0], sizes = [2, 128], strides = [1, 1]} : vector<2x256xf32> to vector<2x128xf32>
    %c0_11 = arith.constant 0 : index
    %c0_12 = arith.constant 0 : index
    %c0_13 = arith.constant 0 : index
    %28 = vector.load %arg9[%c0_11, %c0_12, %c0_13] : memref<8x2x128xf32, #tpu.memory_space<vmem>>, vector<1x2x128xf32>
    %29 = vector.shape_cast %28 : vector<1x2x128xf32> to vector<2x128xf32>
    %30 = vector.shape_cast %27 : vector<2x128xf32> to vector<1x2x128xf32>
    tpu.vector_store %arg9[%c0_11, %c0_12, %c0_13], %30 {strides = array<i32>} : memref<8x2x128xf32, #tpu.memory_space<vmem>>, vector<1x2x128xf32>,
    %31 = vector.extract_strided_slice %26 {offsets = [0, 128], sizes = [2, 128], strides = [1, 1]} : vector<2x256xf32> to vector<2x128xf32>
    %c7 = arith.constant 7 : index
    %c0_14 = arith.constant 0 : index
    %c0_15 = arith.constant 0 : index
    %32 = vector.load %arg10[%c7, %c0_14, %c0_15] : memref<8x2x128xf32, #tpu.memory_space<vmem>>, vector<1x2x128xf32>
    %33 = vector.shape_cast %32 : vector<1x2x128xf32> to vector<2x128xf32>
    %34 = vector.shape_cast %31 : vector<2x128xf32> to vector<1x2x128xf32>
    tpu.vector_store %arg10[%c7, %c0_14, %c0_15], %34 {strides = array<i32>} : memref<8x2x128xf32, #tpu.memory_space<vmem>>, vector<1x2x128xf32>,
    %cst_16 = arith.constant dense<0.000000e+00> : vector<2x1024xf32>
    %35 = tpu.matmul %26, %6, %cst_16 {dimension_numbers = #tpu.dot_dimension_numbers<[1], [0], [0], [1], [0, 0, 1, 1], [], []>} : vector<2x256xf32>, vector<256x1024xf32>, vector<2x1024xf32> -> vector<2x1024xf32>
    %36 = arith.addf %5, %35 : vector<2x1024xf32>
    %37 = vector.extract_strided_slice %36 {offsets = [0, 0], sizes = [2, 768], strides = [1, 1]} : vector<2x1024xf32> to vector<2x768xf32>
    %38 = arith.negf %37 : vector<2x768xf32>
    %39 = math.exp %38 : vector<2x768xf32>
    %cst_17 = arith.constant 1.000000e+00 : f32
    %40 = vector.broadcast %cst_17 : f32 to vector<2x768xf32>
    %41 = arith.addf %40, %39 : vector<2x768xf32>
    %42 = arith.divf %40, %41 : vector<2x768xf32>
    %43 = vector.extract_strided_slice %42 {offsets = [0, 0], sizes = [2, 256], strides = [1, 1]} : vector<2x768xf32> to vector<2x256xf32>
    %44 = vector.extract_strided_slice %42 {offsets = [0, 256], sizes = [2, 256], strides = [1, 1]} : vector<2x768xf32> to vector<2x256xf32>
    %45 = vector.extract_strided_slice %42 {offsets = [0, 512], sizes = [2, 256], strides = [1, 1]} : vector<2x768xf32> to vector<2x256xf32>
    %46 = vector.extract_strided_slice %36 {offsets = [0, 768], sizes = [2, 256], strides = [1, 1]} : vector<2x1024xf32> to vector<2x256xf32>
    %47 = math.tanh %46 : vector<2x256xf32>
    %48 = arith.mulf %44, %24 : vector<2x256xf32>
    %49 = arith.mulf %43, %47 : vector<2x256xf32>
    %50 = arith.addf %48, %49 : vector<2x256xf32>
    %51 = math.tanh %50 : vector<2x256xf32>
    %52 = arith.mulf %45, %51 : vector<2x256xf32>
    %53 = vector.extract_strided_slice %52 {offsets = [0, 0], sizes = [2, 128], strides = [1, 1]} : vector<2x256xf32> to vector<2x128xf32>
    %c1 = arith.constant 1 : index
    %c0_18 = arith.constant 0 : index
    %c0_19 = arith.constant 0 : index
    %54 = vector.load %arg9[%c1, %c0_18, %c0_19] : memref<8x2x128xf32, #tpu.memory_space<vmem>>, vector<1x2x128xf32>
    %55 = vector.shape_cast %54 : vector<1x2x128xf32> to vector<2x128xf32>
    %56 = vector.shape_cast %53 : vector<2x128xf32> to vector<1x2x128xf32>
    tpu.vector_store %arg9[%c1, %c0_18, %c0_19], %56 {strides = array<i32>} : memref<8x2x128xf32, #tpu.memory_space<vmem>>, vector<1x2x128xf32>,
    %57 = vector.extract_strided_slice %52 {offsets = [0, 128], sizes = [2, 128], strides = [1, 1]} : vector<2x256xf32> to vector<2x128xf32>
    %c6 = arith.constant 6 : index
    %c0_20 = arith.constant 0 : index
    %c0_21 = arith.constant 0 : index
    %58 = vector.load %arg10[%c6, %c0_20, %c0_21] : memref<8x2x128xf32, #tpu.memory_space<vmem>>, vector<1x2x128xf32>
    %59 = vector.shape_cast %58 : vector<1x2x128xf32> to vector<2x128xf32>
    %60 = vector.shape_cast %57 : vector<2x128xf32> to vector<1x2x128xf32>
    tpu.vector_store %arg10[%c6, %c0_20, %c0_21], %60 {strides = array<i32>} : memref<8x2x128xf32, #tpu.memory_space<vmem>>, vector<1x2x128xf32>,
    %cst_22 = arith.constant dense<0.000000e+00> : vector<2x1024xf32>
    %61 = tpu.matmul %52, %6, %cst_22 {dimension_numbers = #tpu.dot_dimension_numbers<[1], [0], [0], [1], [0, 0, 1, 1], [], []>} : vector<2x256xf32>, vector<256x1024xf32>, vector<2x1024xf32> -> vector<2x1024xf32>
    %62 = arith.addf %5, %61 : vector<2x1024xf32>
    %63 = vector.extract_strided_slice %62 {offsets = [0, 0], sizes = [2, 768], strides = [1, 1]} : vector<2x1024xf32> to vector<2x768xf32>
    %64 = arith.negf %63 : vector<2x768xf32>
    %65 = math.exp %64 : vector<2x768xf32>
    %cst_23 = arith.constant 1.000000e+00 : f32
    %66 = vector.broadcast %cst_23 : f32 to vector<2x768xf32>
    %67 = arith.addf %66, %65 : vector<2x768xf32>
    %68 = arith.divf %66, %67 : vector<2x768xf32>
    %69 = vector.extract_strided_slice %68 {offsets = [0, 0], sizes = [2, 256], strides = [1, 1]} : vector<2x768xf32> to vector<2x256xf32>
    %70 = vector.extract_strided_slice %68 {offsets = [0, 256], sizes = [2, 256], strides = [1, 1]} : vector<2x768xf32> to vector<2x256xf32>
    %71 = vector.extract_strided_slice %68 {offsets = [0, 512], sizes = [2, 256], strides = [1, 1]} : vector<2x768xf32> to vector<2x256xf32>
    %72 = vector.extract_strided_slice %62 {offsets = [0, 768], sizes = [2, 256], strides = [1, 1]} : vector<2x1024xf32> to vector<2x256xf32>
    %73 = math.tanh %72 : vector<2x256xf32>
    %74 = arith.mulf %70, %50 : vector<2x256xf32>
    %75 = arith.mulf %69, %73 : vector<2x256xf32>
    %76 = arith.addf %74, %75 : vector<2x256xf32>
    %77 = math.tanh %76 : vector<2x256xf32>
    %78 = arith.mulf %71, %77 : vector<2x256xf32>
    %79 = vector.extract_strided_slice %78 {offsets = [0, 0], sizes = [2, 128], strides = [1, 1]} : vector<2x256xf32> to vector<2x128xf32>
    %c2 = arith.constant 2 : index
    %c0_24 = arith.constant 0 : index
    %c0_25 = arith.constant 0 : index
    %80 = vector.load %arg9[%c2, %c0_24, %c0_25] : memref<8x2x128xf32, #tpu.memory_space<vmem>>, vector<1x2x128xf32>
    %81 = vector.shape_cast %80 : vector<1x2x128xf32> to vector<2x128xf32>
    %82 = vector.shape_cast %79 : vector<2x128xf32> to vector<1x2x128xf32>
    tpu.vector_store %arg9[%c2, %c0_24, %c0_25], %82 {strides = array<i32>} : memref<8x2x128xf32, #tpu.memory_space<vmem>>, vector<1x2x128xf32>,
    %83 = vector.extract_strided_slice %78 {offsets = [0, 128], sizes = [2, 128], strides = [1, 1]} : vector<2x256xf32> to vector<2x128xf32>
    %c5 = arith.constant 5 : index
    %c0_26 = arith.constant 0 : index
    %c0_27 = arith.constant 0 : index
    %84 = vector.load %arg10[%c5, %c0_26, %c0_27] : memref<8x2x128xf32, #tpu.memory_space<vmem>>, vector<1x2x128xf32>
    %85 = vector.shape_cast %84 : vector<1x2x128xf32> to vector<2x128xf32>
    %86 = vector.shape_cast %83 : vector<2x128xf32> to vector<1x2x128xf32>
    tpu.vector_store %arg10[%c5, %c0_26, %c0_27], %86 {strides = array<i32>} : memref<8x2x128xf32, #tpu.memory_space<vmem>>, vector<1x2x128xf32>,
    %cst_28 = arith.constant dense<0.000000e+00> : vector<2x1024xf32>
    %87 = tpu.matmul %78, %6, %cst_28 {dimension_numbers = #tpu.dot_dimension_numbers<[1], [0], [0], [1], [0, 0, 1, 1], [], []>} : vector<2x256xf32>, vector<256x1024xf32>, vector<2x1024xf32> -> vector<2x1024xf32>
    %88 = arith.addf %5, %87 : vector<2x1024xf32>
    %89 = vector.extract_strided_slice %88 {offsets = [0, 0], sizes = [2, 768], strides = [1, 1]} : vector<2x1024xf32> to vector<2x768xf32>
    %90 = arith.negf %89 : vector<2x768xf32>
    %91 = math.exp %90 : vector<2x768xf32>
    %cst_29 = arith.constant 1.000000e+00 : f32
    %92 = vector.broadcast %cst_29 : f32 to vector<2x768xf32>
    %93 = arith.addf %92, %91 : vector<2x768xf32>
    %94 = arith.divf %92, %93 : vector<2x768xf32>
    %95 = vector.extract_strided_slice %94 {offsets = [0, 0], sizes = [2, 256], strides = [1, 1]} : vector<2x768xf32> to vector<2x256xf32>
    %96 = vector.extract_strided_slice %94 {offsets = [0, 256], sizes = [2, 256], strides = [1, 1]} : vector<2x768xf32> to vector<2x256xf32>
    %97 = vector.extract_strided_slice %94 {offsets = [0, 512], sizes = [2, 256], strides = [1, 1]} : vector<2x768xf32> to vector<2x256xf32>
    %98 = vector.extract_strided_slice %88 {offsets = [0, 768], sizes = [2, 256], strides = [1, 1]} : vector<2x1024xf32> to vector<2x256xf32>
    %99 = math.tanh %98 : vector<2x256xf32>
    %100 = arith.mulf %96, %76 : vector<2x256xf32>
    %101 = arith.mulf %95, %99 : vector<2x256xf32>
    %102 = arith.addf %100, %101 : vector<2x256xf32>
    %103 = math.tanh %102 : vector<2x256xf32>
    %104 = arith.mulf %97, %103 : vector<2x256xf32>
    %105 = vector.extract_strided_slice %104 {offsets = [0, 0], sizes = [2, 128], strides = [1, 1]} : vector<2x256xf32> to vector<2x128xf32>
    %c3 = arith.constant 3 : index
    %c0_30 = arith.constant 0 : index
    %c0_31 = arith.constant 0 : index
    %106 = vector.load %arg9[%c3, %c0_30, %c0_31] : memref<8x2x128xf32, #tpu.memory_space<vmem>>, vector<1x2x128xf32>
    %107 = vector.shape_cast %106 : vector<1x2x128xf32> to vector<2x128xf32>
    %108 = vector.shape_cast %105 : vector<2x128xf32> to vector<1x2x128xf32>
    tpu.vector_store %arg9[%c3, %c0_30, %c0_31], %108 {strides = array<i32>} : memref<8x2x128xf32, #tpu.memory_space<vmem>>, vector<1x2x128xf32>,
    %109 = vector.extract_strided_slice %104 {offsets = [0, 128], sizes = [2, 128], strides = [1, 1]} : vector<2x256xf32> to vector<2x128xf32>
    %c4 = arith.constant 4 : index
    %c0_32 = arith.constant 0 : index
    %c0_33 = arith.constant 0 : index
    %110 = vector.load %arg10[%c4, %c0_32, %c0_33] : memref<8x2x128xf32, #tpu.memory_space<vmem>>, vector<1x2x128xf32>
    %111 = vector.shape_cast %110 : vector<1x2x128xf32> to vector<2x128xf32>
    %112 = vector.shape_cast %109 : vector<2x128xf32> to vector<1x2x128xf32>
    tpu.vector_store %arg10[%c4, %c0_32, %c0_33], %112 {strides = array<i32>} : memref<8x2x128xf32, #tpu.memory_space<vmem>>, vector<1x2x128xf32>,
    %cst_34 = arith.constant dense<0.000000e+00> : vector<2x1024xf32>
    %113 = tpu.matmul %104, %6, %cst_34 {dimension_numbers = #tpu.dot_dimension_numbers<[1], [0], [0], [1], [0, 0, 1, 1], [], []>} : vector<2x256xf32>, vector<256x1024xf32>, vector<2x1024xf32> -> vector<2x1024xf32>
    %114 = arith.addf %5, %113 : vector<2x1024xf32>
    %115 = vector.extract_strided_slice %114 {offsets = [0, 0], sizes = [2, 768], strides = [1, 1]} : vector<2x1024xf32> to vector<2x768xf32>
    %116 = arith.negf %115 : vector<2x768xf32>
    %117 = math.exp %116 : vector<2x768xf32>
    %cst_35 = arith.constant 1.000000e+00 : f32
    %118 = vector.broadcast %cst_35 : f32 to vector<2x768xf32>
    %119 = arith.addf %118, %117 : vector<2x768xf32>
    %120 = arith.divf %118, %119 : vector<2x768xf32>
    %121 = vector.extract_strided_slice %120 {offsets = [0, 0], sizes = [2, 256], strides = [1, 1]} : vector<2x768xf32> to vector<2x256xf32>
    %122 = vector.extract_strided_slice %120 {offsets = [0, 256], sizes = [2, 256], strides = [1, 1]} : vector<2x768xf32> to vector<2x256xf32>
    %123 = vector.extract_strided_slice %120 {offsets = [0, 512], sizes = [2, 256], strides = [1, 1]} : vector<2x768xf32> to vector<2x256xf32>
    %124 = vector.extract_strided_slice %114 {offsets = [0, 768], sizes = [2, 256], strides = [1, 1]} : vector<2x1024xf32> to vector<2x256xf32>
    %125 = math.tanh %124 : vector<2x256xf32>
    %126 = arith.mulf %122, %102 : vector<2x256xf32>
    %127 = arith.mulf %121, %125 : vector<2x256xf32>
    %128 = arith.addf %126, %127 : vector<2x256xf32>
    %129 = math.tanh %128 : vector<2x256xf32>
    %130 = arith.mulf %123, %129 : vector<2x256xf32>
    %131 = vector.extract_strided_slice %130 {offsets = [0, 0], sizes = [2, 128], strides = [1, 1]} : vector<2x256xf32> to vector<2x128xf32>
    %c4_36 = arith.constant 4 : index
    %c0_37 = arith.constant 0 : index
    %c0_38 = arith.constant 0 : index
    %132 = vector.load %arg9[%c4_36, %c0_37, %c0_38] : memref<8x2x128xf32, #tpu.memory_space<vmem>>, vector<1x2x128xf32>
    %133 = vector.shape_cast %132 : vector<1x2x128xf32> to vector<2x128xf32>
    %134 = vector.shape_cast %131 : vector<2x128xf32> to vector<1x2x128xf32>
    tpu.vector_store %arg9[%c4_36, %c0_37, %c0_38], %134 {strides = array<i32>} : memref<8x2x128xf32, #tpu.memory_space<vmem>>, vector<1x2x128xf32>,
    %135 = vector.extract_strided_slice %130 {offsets = [0, 128], sizes = [2, 128], strides = [1, 1]} : vector<2x256xf32> to vector<2x128xf32>
    %c3_39 = arith.constant 3 : index
    %c0_40 = arith.constant 0 : index
    %c0_41 = arith.constant 0 : index
    %136 = vector.load %arg10[%c3_39, %c0_40, %c0_41] : memref<8x2x128xf32, #tpu.memory_space<vmem>>, vector<1x2x128xf32>
    %137 = vector.shape_cast %136 : vector<1x2x128xf32> to vector<2x128xf32>
    %138 = vector.shape_cast %135 : vector<2x128xf32> to vector<1x2x128xf32>
    tpu.vector_store %arg10[%c3_39, %c0_40, %c0_41], %138 {strides = array<i32>} : memref<8x2x128xf32, #tpu.memory_space<vmem>>, vector<1x2x128xf32>,
    %cst_42 = arith.constant dense<0.000000e+00> : vector<2x1024xf32>
    %139 = tpu.matmul %130, %6, %cst_42 {dimension_numbers = #tpu.dot_dimension_numbers<[1], [0], [0], [1], [0, 0, 1, 1], [], []>} : vector<2x256xf32>, vector<256x1024xf32>, vector<2x1024xf32> -> vector<2x1024xf32>
    %140 = arith.addf %5, %139 : vector<2x1024xf32>
    %141 = vector.extract_strided_slice %140 {offsets = [0, 0], sizes = [2, 768], strides = [1, 1]} : vector<2x1024xf32> to vector<2x768xf32>
    %142 = arith.negf %141 : vector<2x768xf32>
    %143 = math.exp %142 : vector<2x768xf32>
    %cst_43 = arith.constant 1.000000e+00 : f32
    %144 = vector.broadcast %cst_43 : f32 to vector<2x768xf32>
    %145 = arith.addf %144, %143 : vector<2x768xf32>
    %146 = arith.divf %144, %145 : vector<2x768xf32>
    %147 = vector.extract_strided_slice %146 {offsets = [0, 0], sizes = [2, 256], strides = [1, 1]} : vector<2x768xf32> to vector<2x256xf32>
    %148 = vector.extract_strided_slice %146 {offsets = [0, 256], sizes = [2, 256], strides = [1, 1]} : vector<2x768xf32> to vector<2x256xf32>
    %149 = vector.extract_strided_slice %146 {offsets = [0, 512], sizes = [2, 256], strides = [1, 1]} : vector<2x768xf32> to vector<2x256xf32>
    %150 = vector.extract_strided_slice %140 {offsets = [0, 768], sizes = [2, 256], strides = [1, 1]} : vector<2x1024xf32> to vector<2x256xf32>
    %151 = math.tanh %150 : vector<2x256xf32>
    %152 = arith.mulf %148, %128 : vector<2x256xf32>
    %153 = arith.mulf %147, %151 : vector<2x256xf32>
    %154 = arith.addf %152, %153 : vector<2x256xf32>
    %155 = math.tanh %154 : vector<2x256xf32>
    %156 = arith.mulf %149, %155 : vector<2x256xf32>
    %157 = vector.extract_strided_slice %156 {offsets = [0, 0], sizes = [2, 128], strides = [1, 1]} : vector<2x256xf32> to vector<2x128xf32>
    %c5_44 = arith.constant 5 : index
    %c0_45 = arith.constant 0 : index
    %c0_46 = arith.constant 0 : index
    %158 = vector.load %arg9[%c5_44, %c0_45, %c0_46] : memref<8x2x128xf32, #tpu.memory_space<vmem>>, vector<1x2x128xf32>
    %159 = vector.shape_cast %158 : vector<1x2x128xf32> to vector<2x128xf32>
    %160 = vector.shape_cast %157 : vector<2x128xf32> to vector<1x2x128xf32>
    tpu.vector_store %arg9[%c5_44, %c0_45, %c0_46], %160 {strides = array<i32>} : memref<8x2x128xf32, #tpu.memory_space<vmem>>, vector<1x2x128xf32>,
    %161 = vector.extract_strided_slice %156 {offsets = [0, 128], sizes = [2, 128], strides = [1, 1]} : vector<2x256xf32> to vector<2x128xf32>
    %c2_47 = arith.constant 2 : index
    %c0_48 = arith.constant 0 : index
    %c0_49 = arith.constant 0 : index
    %162 = vector.load %arg10[%c2_47, %c0_48, %c0_49] : memref<8x2x128xf32, #tpu.memory_space<vmem>>, vector<1x2x128xf32>
    %163 = vector.shape_cast %162 : vector<1x2x128xf32> to vector<2x128xf32>
    %164 = vector.shape_cast %161 : vector<2x128xf32> to vector<1x2x128xf32>
    tpu.vector_store %arg10[%c2_47, %c0_48, %c0_49], %164 {strides = array<i32>} : memref<8x2x128xf32, #tpu.memory_space<vmem>>, vector<1x2x128xf32>,
    %cst_50 = arith.constant dense<0.000000e+00> : vector<2x1024xf32>
    %165 = tpu.matmul %156, %6, %cst_50 {dimension_numbers = #tpu.dot_dimension_numbers<[1], [0], [0], [1], [0, 0, 1, 1], [], []>} : vector<2x256xf32>, vector<256x1024xf32>, vector<2x1024xf32> -> vector<2x1024xf32>
    %166 = arith.addf %5, %165 : vector<2x1024xf32>
    %167 = vector.extract_strided_slice %166 {offsets = [0, 0], sizes = [2, 768], strides = [1, 1]} : vector<2x1024xf32> to vector<2x768xf32>
    %168 = arith.negf %167 : vector<2x768xf32>
    %169 = math.exp %168 : vector<2x768xf32>
    %cst_51 = arith.constant 1.000000e+00 : f32
    %170 = vector.broadcast %cst_51 : f32 to vector<2x768xf32>
    %171 = arith.addf %170, %169 : vector<2x768xf32>
    %172 = arith.divf %170, %171 : vector<2x768xf32>
    %173 = vector.extract_strided_slice %172 {offsets = [0, 0], sizes = [2, 256], strides = [1, 1]} : vector<2x768xf32> to vector<2x256xf32>
    %174 = vector.extract_strided_slice %172 {offsets = [0, 256], sizes = [2, 256], strides = [1, 1]} : vector<2x768xf32> to vector<2x256xf32>
    %175 = vector.extract_strided_slice %172 {offsets = [0, 512], sizes = [2, 256], strides = [1, 1]} : vector<2x768xf32> to vector<2x256xf32>
    %176 = vector.extract_strided_slice %166 {offsets = [0, 768], sizes = [2, 256], strides = [1, 1]} : vector<2x1024xf32> to vector<2x256xf32>
    %177 = math.tanh %176 : vector<2x256xf32>
    %178 = arith.mulf %174, %154 : vector<2x256xf32>
    %179 = arith.mulf %173, %177 : vector<2x256xf32>
    %180 = arith.addf %178, %179 : vector<2x256xf32>
    %181 = math.tanh %180 : vector<2x256xf32>
    %182 = arith.mulf %175, %181 : vector<2x256xf32>
    %183 = vector.extract_strided_slice %182 {offsets = [0, 0], sizes = [2, 128], strides = [1, 1]} : vector<2x256xf32> to vector<2x128xf32>
    %c6_52 = arith.constant 6 : index
    %c0_53 = arith.constant 0 : index
    %c0_54 = arith.constant 0 : index
    %184 = vector.load %arg9[%c6_52, %c0_53, %c0_54] : memref<8x2x128xf32, #tpu.memory_space<vmem>>, vector<1x2x128xf32>
    %185 = vector.shape_cast %184 : vector<1x2x128xf32> to vector<2x128xf32>
    %186 = vector.shape_cast %183 : vector<2x128xf32> to vector<1x2x128xf32>
    tpu.vector_store %arg9[%c6_52, %c0_53, %c0_54], %186 {strides = array<i32>} : memref<8x2x128xf32, #tpu.memory_space<vmem>>, vector<1x2x128xf32>,
    %187 = vector.extract_strided_slice %182 {offsets = [0, 128], sizes = [2, 128], strides = [1, 1]} : vector<2x256xf32> to vector<2x128xf32>
    %c1_55 = arith.constant 1 : index
    %c0_56 = arith.constant 0 : index
    %c0_57 = arith.constant 0 : index
    %188 = vector.load %arg10[%c1_55, %c0_56, %c0_57] : memref<8x2x128xf32, #tpu.memory_space<vmem>>, vector<1x2x128xf32>
    %189 = vector.shape_cast %188 : vector<1x2x128xf32> to vector<2x128xf32>
    %190 = vector.shape_cast %187 : vector<2x128xf32> to vector<1x2x128xf32>
    tpu.vector_store %arg10[%c1_55, %c0_56, %c0_57], %190 {strides = array<i32>} : memref<8x2x128xf32, #tpu.memory_space<vmem>>, vector<1x2x128xf32>,
    %cst_58 = arith.constant dense<0.000000e+00> : vector<2x1024xf32>
    %191 = tpu.matmul %182, %6, %cst_58 {dimension_numbers = #tpu.dot_dimension_numbers<[1], [0], [0], [1], [0, 0, 1, 1], [], []>} : vector<2x256xf32>, vector<256x1024xf32>, vector<2x1024xf32> -> vector<2x1024xf32>
    %192 = arith.addf %5, %191 : vector<2x1024xf32>
    %193 = vector.extract_strided_slice %192 {offsets = [0, 0], sizes = [2, 768], strides = [1, 1]} : vector<2x1024xf32> to vector<2x768xf32>
    %194 = arith.negf %193 : vector<2x768xf32>
    %195 = math.exp %194 : vector<2x768xf32>
    %cst_59 = arith.constant 1.000000e+00 : f32
    %196 = vector.broadcast %cst_59 : f32 to vector<2x768xf32>
    %197 = arith.addf %196, %195 : vector<2x768xf32>
    %198 = arith.divf %196, %197 : vector<2x768xf32>
    %199 = vector.extract_strided_slice %198 {offsets = [0, 0], sizes = [2, 256], strides = [1, 1]} : vector<2x768xf32> to vector<2x256xf32>
    %200 = vector.extract_strided_slice %198 {offsets = [0, 256], sizes = [2, 256], strides = [1, 1]} : vector<2x768xf32> to vector<2x256xf32>
    %201 = vector.extract_strided_slice %198 {offsets = [0, 512], sizes = [2, 256], strides = [1, 1]} : vector<2x768xf32> to vector<2x256xf32>
    %202 = vector.extract_strided_slice %192 {offsets = [0, 768], sizes = [2, 256], strides = [1, 1]} : vector<2x1024xf32> to vector<2x256xf32>
    %203 = math.tanh %202 : vector<2x256xf32>
    %204 = arith.mulf %200, %180 : vector<2x256xf32>
    %205 = arith.mulf %199, %203 : vector<2x256xf32>
    %206 = arith.addf %204, %205 : vector<2x256xf32>
    %207 = math.tanh %206 : vector<2x256xf32>
    %208 = arith.mulf %201, %207 : vector<2x256xf32>
    %209 = vector.extract_strided_slice %208 {offsets = [0, 0], sizes = [2, 128], strides = [1, 1]} : vector<2x256xf32> to vector<2x128xf32>
    %c7_60 = arith.constant 7 : index
    %c0_61 = arith.constant 0 : index
    %c0_62 = arith.constant 0 : index
    %210 = vector.load %arg9[%c7_60, %c0_61, %c0_62] : memref<8x2x128xf32, #tpu.memory_space<vmem>>, vector<1x2x128xf32>
    %211 = vector.shape_cast %210 : vector<1x2x128xf32> to vector<2x128xf32>
    %212 = vector.shape_cast %209 : vector<2x128xf32> to vector<1x2x128xf32>
    tpu.vector_store %arg9[%c7_60, %c0_61, %c0_62], %212 {strides = array<i32>} : memref<8x2x128xf32, #tpu.memory_space<vmem>>, vector<1x2x128xf32>,
    %213 = vector.extract_strided_slice %208 {offsets = [0, 128], sizes = [2, 128], strides = [1, 1]} : vector<2x256xf32> to vector<2x128xf32>
    %c0_63 = arith.constant 0 : index
    %c0_64 = arith.constant 0 : index
    %c0_65 = arith.constant 0 : index
    %214 = vector.load %arg10[%c0_63, %c0_64, %c0_65] : memref<8x2x128xf32, #tpu.memory_space<vmem>>, vector<1x2x128xf32>
    %215 = vector.shape_cast %214 : vector<1x2x128xf32> to vector<2x128xf32>
    %216 = vector.shape_cast %213 : vector<2x128xf32> to vector<1x2x128xf32>
    tpu.vector_store %arg10[%c0_63, %c0_64, %c0_65], %216 {strides = array<i32>} : memref<8x2x128xf32, #tpu.memory_space<vmem>>, vector<1x2x128xf32>,
    %c0_66 = arith.constant 0 : index
    %c0_67 = arith.constant 0 : index
    %c0_68 = arith.constant 0 : index
    %217 = vector.load %arg9[%c0_66, %c0_67, %c0_68] : memref<8x2x128xf32, #tpu.memory_space<vmem>>, vector<8x2x128xf32>
    %c0_69 = arith.constant 0 : index
    %c0_70 = arith.constant 0 : index
    %c0_71 = arith.constant 0 : index
    %218 = vector.load %arg10[%c0_69, %c0_70, %c0_71] : memref<8x2x128xf32, #tpu.memory_space<vmem>>, vector<8x2x128xf32>
    %219 = arith.negf %217 : vector<8x2x128xf32>
    %220 = math.exp %219 : vector<8x2x128xf32>
    %cst_72 = arith.constant 1.000000e+00 : f32
    %221 = vector.broadcast %cst_72 : f32 to vector<8x2x128xf32>
    %222 = arith.addf %221, %220 : vector<8x2x128xf32>
    %223 = arith.divf %221, %222 : vector<8x2x128xf32>
    %224 = arith.mulf %217, %223 : vector<8x2x128xf32>
    %225 = vector.shape_cast %224 : vector<8x2x128xf32> to vector<16x128xf32>
    %226 = arith.negf %218 : vector<8x2x128xf32>
    %227 = math.exp %226 : vector<8x2x128xf32>
    %cst_73 = arith.constant 1.000000e+00 : f32
    %228 = vector.broadcast %cst_73 : f32 to vector<8x2x128xf32>
    %229 = arith.addf %228, %227 : vector<8x2x128xf32>
    %230 = arith.divf %228, %229 : vector<8x2x128xf32>
    %231 = arith.mulf %218, %230 : vector<8x2x128xf32>
    %232 = vector.shape_cast %231 : vector<8x2x128xf32> to vector<16x128xf32>
    %c0_74 = arith.constant 0 : index
    %c0_75 = arith.constant 0 : index
    %233 = vector.load %arg5[%c0_74, %c0_75] : memref<128x4xf32, #tpu.memory_space<vmem>>, vector<128x4xf32>
    %cst_76 = arith.constant dense<0.000000e+00> : vector<16x4xf32>
    %234 = tpu.matmul %225, %233, %cst_76 {dimension_numbers = #tpu.dot_dimension_numbers<[1], [0], [0], [1], [0, 0, 1, 1], [], []>} : vector<16x128xf32>, vector<128x4xf32>, vector<16x4xf32> -> vector<16x4xf32>
    %c0_77 = arith.constant 0 : index
    %c0_78 = arith.constant 0 : index
    %235 = vector.load %arg6[%c0_77, %c0_78] : memref<128x4xf32, #tpu.memory_space<vmem>>, vector<128x4xf32>
    %cst_79 = arith.constant dense<0.000000e+00> : vector<16x4xf32>
    %236 = tpu.matmul %232, %235, %cst_79 {dimension_numbers = #tpu.dot_dimension_numbers<[1], [0], [0], [1], [0, 0, 1, 1], [], []>} : vector<16x128xf32>, vector<128x4xf32>, vector<16x4xf32> -> vector<16x4xf32>
    %237 = arith.addf %234, %236 : vector<16x4xf32>
    %c0_80 = arith.constant 0 : index
    %c0_81 = arith.constant 0 : index
    %238 = vector.load %arg7[%c0_80, %c0_81] : memref<1x4xf32, #tpu.memory_space<vmem>>, vector<1x4xf32>
    %239 = vector.broadcast %238 : vector<1x4xf32> to vector<16x4xf32>
    %240 = arith.addf %237, %239 : vector<16x4xf32>
    %241 = vector.shape_cast %240 : vector<16x4xf32> to vector<8x2x4xf32>
    %c0_82 = arith.constant 0 : index
    %c0_83 = arith.constant 0 : index
    %c0_84 = arith.constant 0 : index
    %242 = vector.load %arg8[%c0_82, %c0_83, %c0_84] : memref<8x2x4xf32, #tpu.memory_space<vmem>>, vector<8x2x4xf32>
    tpu.vector_store %arg8[%c0_82, %c0_83, %c0_84], %241 {strides = array<i32>} : memref<8x2x4xf32, #tpu.memory_space<vmem>>, vector<8x2x4xf32>,
    return
  }
  func.func @transform_0(%arg0: i32) -> (i32, i32) {
    %c0_i32 = arith.constant 0 : i32
    %c0_i32_0 = arith.constant 0 : i32
    return %arg0, %c0_i32 : i32, i32
  }
  func.func @transform_1(%arg0: i32) -> (i32, i32) {
    %c0_i32 = arith.constant 0 : i32
    %c0_i32_0 = arith.constant 0 : i32
    %c0_i32_1 = arith.constant 0 : i32
    return %c0_i32, %c0_i32_0 : i32, i32
  }
  func.func @transform_2(%arg0: i32) -> (i32, i32) {
    %c0_i32 = arith.constant 0 : i32
    %c0_i32_0 = arith.constant 0 : i32
    %c0_i32_1 = arith.constant 0 : i32
    return %c0_i32, %c0_i32_0 : i32, i32
  }
  func.func @transform_3(%arg0: i32) -> (i32, i32) {
    %c0_i32 = arith.constant 0 : i32
    %c0_i32_0 = arith.constant 0 : i32
    %c0_i32_1 = arith.constant 0 : i32
    return %c0_i32, %c0_i32_0 : i32, i32
  }
  func.func @transform_4(%arg0: i32) -> (i32, i32) {
    %c0_i32 = arith.constant 0 : i32
    %c0_i32_0 = arith.constant 0 : i32
    %c0_i32_1 = arith.constant 0 : i32
    return %c0_i32, %c0_i32_0 : i32, i32
  }
  func.func @transform_5(%arg0: i32) -> (i32, i32) {
    %c0_i32 = arith.constant 0 : i32
    %c0_i32_0 = arith.constant 0 : i32
    %c0_i32_1 = arith.constant 0 : i32
    return %c0_i32, %c0_i32_0 : i32, i32
  }
  func.func @transform_6(%arg0: i32) -> (i32, i32) {
    %c0_i32 = arith.constant 0 : i32
    %c0_i32_0 = arith.constant 0 : i32
    %c0_i32_1 = arith.constant 0 : i32
    return %c0_i32, %c0_i32_0 : i32, i32
  }
  func.func @transform_7(%arg0: i32) -> (i32, i32, i32) {
    %c0_i32 = arith.constant 0 : i32
    %c0_i32_0 = arith.constant 0 : i32
    %c0_i32_1 = arith.constant 0 : i32
    return %c0_i32, %arg0, %c0_i32_0 : i32, i32, i32
  }
}

</mosaic_0001>

<llo_original>
// kernel: decoder_forward.1
$region0: #{decoder_forward.1}
  #allocation0 [shape = 'u32[]', space=smem, size = 0x4, offset = 0x4, fixed_abs, tag = 'smem constant byte address 0x4 - core index']
  #allocation1 [shape = 'u32[72,128]{1,0:T(1,128)}', space=vmem, size = 0x9000, scoped, tag = 'internal scratch']
  #allocation2 [shape = 'f32[8,2,128]{2,1,0:T(2,128)}', space=vmem, size = 0x2000, scoped, tag = 'scratch operand']
  #allocation3 [shape = 'f32[8,2,128]{2,1,0:T(2,128)}', space=vmem, size = 0x2000, scoped, tag = 'scratch operand']
  %s0 = inlined_call_operand.vmem [shape: f32[2,8], index: 0, kind: input, shape index: {}]
  %s1 = inlined_call_operand.vmem [shape: f32[8,1024], index: 1, kind: input, shape index: {}]
  %s2 = inlined_call_operand.hbm [shape: f32[256,1024], index: 2, kind: input, shape index: {}]
  %s3 = inlined_call_operand.vmem [shape: f32[1,1024], index: 3, kind: input, shape index: {}]
  %s4 = inlined_call_operand.vmem [shape: f32[128,4], index: 4, kind: input, shape index: {}]
  %s5 = inlined_call_operand.vmem [shape: f32[128,4], index: 5, kind: input, shape index: {}]
  %s6 = inlined_call_operand.vmem [shape: f32[1,4], index: 6, kind: input, shape index: {}]
  %s7 = inlined_call_operand.vmem [shape: f32[8,2,4], index: 7, kind: output, shape index: {}]
  %s8 = sld [smem:[#allocation0]]
  $region42: #{decoder_forward.1} parent=0
    _
  %s10 = ssub.s32 1, %s8
  %s11 = scalar_select 0, %s10, %s8
  $region1: #{decoder_forward.1} parent=0
    #allocation4 [shape = 'u8[1048576]{0}', space=vmem, size = 0x100000, scoped, tag = 'input window, operand 2, single buffered']
    #allocation5 [shape = 's32[1]{0}', space=sflag, size = 0x4, scoped, tag = 'scoped memory for decoder_forward.1']
    %12 = vsyncpa [#allocation5], 0
    // Predicated region
    $region2: #{decoder_forward.1} parent=1 // pred_check
      _
    $region3: #{decoder_forward.1} parent=1 // pred_check_branch
      %14 = sbr.rel (0) target = $region5
    $region4: #{decoder_forward.1} parent=1 // pred_region
      _
    $region5: #{decoder_forward.1} parent=1 // pred_fallthru
      _
    // Predicated region
    $region6: #{decoder_forward.1} parent=1 // pred_check
      _
    $region7: #{decoder_forward.1} parent=1 // pred_check_branch
      %16 = sbr.rel (0) target = $region9
    $region8: #{decoder_forward.1} parent=1 // pred_region
      _
    $region9: #{decoder_forward.1} parent=1 // pred_fallthru
      _
    // Predicated region
    $region10: #{decoder_forward.1} parent=1 // pred_check
      _
    $region11: #{decoder_forward.1} parent=1 // pred_check_branch
      %18 = sbr.rel (0) target = $region13
    $region12: #{decoder_forward.1} parent=1 // pred_region
      %20 = vsyncadd [#allocation5], 0
      %s21 = sshll.u32 %s2, 4
      %s22 = int_to_ptr.hbm [resolvable:$true] %s21
      %s23 = sshll.u32 [#allocation4], 4
      %s24 = int_to_ptr.vmem [resolvable:$true] %s23
      %29 = dma.hbm_to_vmem [thread:$0]  %s22, 32768, %s24, [#allocation5], 1024, 1024, 64
    $region13: #{decoder_forward.1} parent=1 // pred_fallthru
      _
    // Predicated region
    $region14: #{decoder_forward.1} parent=1 // pred_check
      _
    $region15: #{decoder_forward.1} parent=1 // pred_check_branch
      %31 = sbr.rel (0) target = $region17
    $region16: #{decoder_forward.1} parent=1 // pred_region
      _
    $region17: #{decoder_forward.1} parent=1 // pred_fallthru
      _
    // Predicated region
    $region18: #{decoder_forward.1} parent=1 // pred_check
      _
    $region19: #{decoder_forward.1} parent=1 // pred_check_branch
      %33 = sbr.rel (0) target = $region21
    $region20: #{decoder_forward.1} parent=1 // pred_region
      _
    $region21: #{decoder_forward.1} parent=1 // pred_fallthru
      _
    // Predicated region
    $region22: #{decoder_forward.1} parent=1 // pred_check
      _
    $region23: #{decoder_forward.1} parent=1 // pred_check_branch
      %35 = sbr.rel (0) target = $region25
    $region24: #{decoder_forward.1} parent=1 // pred_region
      _
    $region25: #{decoder_forward.1} parent=1 // pred_fallthru
      _
    // Predicated region
    $region26: #{decoder_forward.1} parent=1 // pred_check
      _
    $region27: #{decoder_forward.1} parent=1 // pred_check_branch
      %37 = sbr.rel (0) target = $region29
    $region28: #{decoder_forward.1} parent=1 // pred_region
      _
    $region29: #{decoder_forward.1} parent=1 // pred_fallthru
      _
    // Predicated region
    $region30: #{decoder_forward.1} parent=1 // pred_check
      _
    $region31: #{decoder_forward.1} parent=1 // pred_check_branch
      %39 = sbr.rel (0) target = $region33
    $region32: #{decoder_forward.1} parent=1 // pred_region
      %41 = dma.done [#allocation5], 32768
    $region33: #{decoder_forward.1} parent=1 // pred_fallthru
      _
    %v42 = vld [vmem:[%s0] sm:$0x3]
    %v43 = vld [vmem:[%s1] sm:$0xff]
    %v44 = vld [vmem:[%s1 + $0x8] sm:$0xff]
    %v45 = vld [vmem:[%s1 + $0x10] sm:$0xff]
    %v46 = vld [vmem:[%s1 + $0x18] sm:$0xff]
    %v47 = vld [vmem:[%s1 + $0x20] sm:$0xff]
    %v48 = vld [vmem:[%s1 + $0x28] sm:$0xff]
    %v49 = vld [vmem:[%s1 + $0x30] sm:$0xff]
    %v50 = vld [vmem:[%s1 + $0x38] sm:$0xff]
    %v51 = vld [vmem:[%s3] sm:$0xff]
    %v53 = vperm.slane %v51, 0
    %v54 = vperm.slane %v51, 1
    %v55 = vperm.slane %v51, 2
    %v56 = vperm.slane %v51, 3
    %v57 = vperm.slane %v51, 4
    %v58 = vperm.slane %v51, 5
    %v59 = vperm.slane %v51, 6
    %v60 = vperm.slane %v51, 7
    %vm69 = vcmask 64512
    %v71 = vsel %vm69, %v42, 0
    %73 = vmatpush.msra.mxu0 0.0
    %74 = vmatpush.msra.mxu0 0.0
    %75 = vmatpush.msra.mxu0 0.0
    %76 = vmatpush.msra.mxu0 0.0
    %77 = vmatpush.msra.mxu0 0.0
    %78 = vmatpush.msra.mxu0 0.0
    %79 = vmatpush.msra.mxu0 0.0
    %80 = vmatpush.msra.mxu0 0.0
    %81 = vmatpush.msra.mxu0 0.0
    %82 = vmatpush.msra.mxu0 0.0
    %83 = vmatpush.msra.mxu0 0.0
    %84 = vmatpush.msra.mxu0 0.0
    %85 = vmatpush.msra.mxu0 0.0
    %86 = vmatpush.msra.mxu0 0.0
    %87 = vmatpush.msra.mxu0 0.0
    %88 = vmatpush.msra.mxu0 %v43
    %89 = vmatmul.f32.gmra.mxu0 %v71
    %v90 = vpop.f32.mrf.mxu0
    %v91 = vadd.f32 %v53, %v90
    %92 = vdwg.mxu0
    %93 = vmatpush.msra.mxu0 0.0
    %94 = vmatpush.msra.mxu0 0.0
    %95 = vmatpush.msra.mxu0 0.0
    %96 = vmatpush.msra.mxu0 0.0
    %97 = vmatpush.msra.mxu0 0.0
    %98 = vmatpush.msra.mxu0 0.0
    %99 = vmatpush.msra.mxu0 0.0
    %100 = vmatpush.msra.mxu0 0.0
    %101 = vmatpush.msra.mxu0 0.0
    %102 = vmatpush.msra.mxu0 0.0
    %103 = vmatpush.msra.mxu0 0.0
    %104 = vmatpush.msra.mxu0 0.0
    %105 = vmatpush.msra.mxu0 0.0
    %106 = vmatpush.msra.mxu0 0.0
    %107 = vmatpush.msra.mxu0 0.0
    %108 = vmatpush.msra.mxu0 %v44
    %109 = vmatmul.f32.gmra.mxu0 %v71
    %v110 = vpop.f32.mrf.mxu0
    %v111 = vadd.f32 %v54, %v110
    %112 = vdwg.mxu0
    %113 = vmatpush.msra.mxu0 0.0
    %114 = vmatpush.msra.mxu0 0.0
    %115 = vmatpush.msra.mxu0 0.0
    %116 = vmatpush.msra.mxu0 0.0
    %117 = vmatpush.msra.mxu0 0.0
    %118 = vmatpush.msra.mxu0 0.0
    %119 = vmatpush.msra.mxu0 0.0
    %120 = vmatpush.msra.mxu0 0.0
    %121 = vmatpush.msra.mxu0 0.0
    %122 = vmatpush.msra.mxu0 0.0
    %123 = vmatpush.msra.mxu0 0.0
    %124 = vmatpush.msra.mxu0 0.0
    %125 = vmatpush.msra.mxu0 0.0
    %126 = vmatpush.msra.mxu0 0.0
    %127 = vmatpush.msra.mxu0 0.0
    %128 = vmatpush.msra.mxu0 %v45
    %129 = vmatmul.f32.gmra.mxu0 %v71
    %v130 = vpop.f32.mrf.mxu0
    %v131 = vadd.f32 %v55, %v130
    %132 = vdwg.mxu0
    %133 = vmatpush.msra.mxu0 0.0
    %134 = vmatpush.msra.mxu0 0.0
    %135 = vmatpush.msra.mxu0 0.0
    %136 = vmatpush.msra.mxu0 0.0
    %137 = vmatpush.msra.mxu0 0.0
    %138 = vmatpush.msra.mxu0 0.0
    %139 = vmatpush.msra.mxu0 0.0
    %140 = vmatpush.msra.mxu0 0.0
    %141 = vmatpush.msra.mxu0 0.0
    %142 = vmatpush.msra.mxu0 0.0
    %143 = vmatpush.msra.mxu0 0.0
    %144 = vmatpush.msra.mxu0 0.0
    %145 = vmatpush.msra.mxu0 0.0
    %146 = vmatpush.msra.mxu0 0.0
    %147 = vmatpush.msra.mxu0 0.0
    %148 = vmatpush.msra.mxu0 %v46
    %149 = vmatmul.f32.gmra.mxu0 %v71
    %v150 = vpop.f32.mrf.mxu0
    %v151 = vadd.f32 %v56, %v150
    %152 = vdwg.mxu0
    %153 = vmatpush.msra.mxu0 0.0
    %154 = vmatpush.msra.mxu0 0.0
    %155 = vmatpush.msra.mxu0 0.0
    %156 = vmatpush.msra.mxu0 0.0
    %157 = vmatpush.msra.mxu0 0.0
    %158 = vmatpush.msra.mxu0 0.0
    %159 = vmatpush.msra.mxu0 0.0
    %160 = vmatpush.msra.mxu0 0.0
    %161 = vmatpush.msra.mxu0 0.0
    %162 = vmatpush.msra.mxu0 0.0
    %163 = vmatpush.msra.mxu0 0.0
    %164 = vmatpush.msra.mxu0 0.0
    %165 = vmatpush.msra.mxu0 0.0
    %166 = vmatpush.msra.mxu0 0.0
    %167 = vmatpush.msra.mxu0 0.0
    %168 = vmatpush.msra.mxu0 %v47
    %169 = vmatmul.f32.gmra.mxu0 %v71
    %v170 = vpop.f32.mrf.mxu0
    %v171 = vadd.f32 %v57, %v170
    %172 = vdwg.mxu0
    %173 = vmatpush.msra.mxu0 0.0
    %174 = vmatpush.msra.mxu0 0.0
    %175 = vmatpush.msra.mxu0 0.0
    %176 = vmatpush.msra.mxu0 0.0
    %177 = vmatpush.msra.mxu0 0.0
    %178 = vmatpush.msra.mxu0 0.0
    %179 = vmatpush.msra.mxu0 0.0
    %180 = vmatpush.msra.mxu0 0.0
    %181 = vmatpush.msra.mxu0 0.0
    %182 = vmatpush.msra.mxu0 0.0
    %183 = vmatpush.msra.mxu0 0.0
    %184 = vmatpush.msra.mxu0 0.0
    %185 = vmatpush.msra.mxu0 0.0
    %186 = vmatpush.msra.mxu0 0.0
    %187 = vmatpush.msra.mxu0 0.0
    %188 = vmatpush.msra.mxu0 %v48
    %189 = vmatmul.f32.gmra.mxu0 %v71
    %v190 = vpop.f32.mrf.mxu0
    %v191 = vadd.f32 %v58, %v190
    %192 = vdwg.mxu0
    %193 = vmatpush.msra.mxu0 0.0
    %194 = vmatpush.msra.mxu0 0.0
    %195 = vmatpush.msra.mxu0 0.0
    %196 = vmatpush.msra.mxu0 0.0
    %197 = vmatpush.msra.mxu0 0.0
    %198 = vmatpush.msra.mxu0 0.0
    %199 = vmatpush.msra.mxu0 0.0
    %200 = vmatpush.msra.mxu0 0.0
    %201 = vmatpush.msra.mxu0 0.0
    %202 = vmatpush.msra.mxu0 0.0
    %203 = vmatpush.msra.mxu0 0.0
    %204 = vmatpush.msra.mxu0 0.0
    %205 = vmatpush.msra.mxu0 0.0
    %206 = vmatpush.msra.mxu0 0.0
    %207 = vmatpush.msra.mxu0 0.0
    %208 = vmatpush.msra.mxu0 %v49
    %209 = vmatmul.f32.gmra.mxu0 %v71
    %v210 = vpop.f32.mrf.mxu0
    %v211 = vadd.f32 %v59, %v210
    %212 = vdwg.mxu0
    %213 = vmatpush.msra.mxu0 0.0
    %214 = vmatpush.msra.mxu0 0.0
    %215 = vmatpush.msra.mxu0 0.0
    %216 = vmatpush.msra.mxu0 0.0
    %217 = vmatpush.msra.mxu0 0.0
    %218 = vmatpush.msra.mxu0 0.0
    %219 = vmatpush.msra.mxu0 0.0
    %220 = vmatpush.msra.mxu0 0.0
    %221 = vmatpush.msra.mxu0 0.0
    %222 = vmatpush.msra.mxu0 0.0
    %223 = vmatpush.msra.mxu0 0.0
    %224 = vmatpush.msra.mxu0 0.0
    %225 = vmatpush.msra.mxu0 0.0
    %226 = vmatpush.msra.mxu0 0.0
    %227 = vmatpush.msra.mxu0 0.0
    %228 = vmatpush.msra.mxu0 %v50
    %229 = vmatmul.f32.gmra.mxu0 %v71
    %v230 = vpop.f32.mrf.mxu0
    %v231 = vadd.f32 %v60, %v230
    %232 = vdwg.mxu0
    %v233 = vld [vmem:[#allocation4] sm:$0xff]
    %v234 = vld [vmem:[#allocation4 + $0x8] sm:$0xff]
    %v235 = vld [vmem:[#allocation4 + $0x10] sm:$0xff]
    %v236 = vld [vmem:[#allocation4 + $0x18] sm:$0xff]
    %v237 = vld [vmem:[#allocation4 + $0x20] sm:$0xff]
    %v238 = vld [vmem:[#allocation4 + $0x28] sm:$0xff]
    %v239 = vld [vmem:[#allocation4 + $0x30] sm:$0xff]
    %v240 = vld [vmem:[#allocation4 + $0x38] sm:$0xff]
    %v241 = vld [vmem:[#allocation4 + $0x40] sm:$0xff]
    %v242 = vld [vmem:[#allocation4 + $0x48] sm:$0xff]
    %v243 = vld [vmem:[#allocation4 + $0x50] sm:$0xff]
    %v244 = vld [vmem:[#allocation4 + $0x58] sm:$0xff]
    %v245 = vld [vmem:[#allocation4 + $0x60] sm:$0xff]
    %v246 = vld [vmem:[#allocation4 + $0x68] sm:$0xff]
    %v247 = vld [vmem:[#allocation4 + $0x70] sm:$0xff]
    %v248 = vld [vmem:[#allocation4 + $0x78] sm:$0xff]
    %v249 = vld [vmem:[#allocation4 + $0x80] sm:$0xff]
    %v250 = vld [vmem:[#allocation4 + $0x88] sm:$0xff]
    %v251 = vld [vmem:[#allocation4 + $0x90] sm:$0xff]
    %v252 = vld [vmem:[#allocation4 + $0x98] sm:$0xff]
    %v253 = vld [vmem:[#allocation4 + $0xa0] sm:$0xff]
    %v254 = vld [vmem:[#allocation4 + $0xa8] sm:$0xff]
    %v255 = vld [vmem:[#allocation4 + $0xb0] sm:$0xff]
    %v256 = vld [vmem:[#allocation4 + $0xb8] sm:$0xff]
    %v257 = vld [vmem:[#allocation4 + $0xc0] sm:$0xff]
    %v258 = vld [vmem:[#allocation4 + $0xc8] sm:$0xff]
    %v259 = vld [vmem:[#allocation4 + $0xd0] sm:$0xff]
    %v260 = vld [vmem:[#allocation4 + $0xd8] sm:$0xff]
    %v261 = vld [vmem:[#allocation4 + $0xe0] sm:$0xff]
    %v262 = vld [vmem:[#allocation4 + $0xe8] sm:$0xff]
    %v263 = vld [vmem:[#allocation4 + $0xf0] sm:$0xff]
    %v264 = vld [vmem:[#allocation4 + $0xf8] sm:$0xff]
    %v265 = vld [vmem:[#allocation4 + $0x100] sm:$0xff]
    %v266 = vld [vmem:[#allocation4 + $0x108] sm:$0xff]
    %v267 = vld [vmem:[#allocation4 + $0x110] sm:$0xff]
    %v268 = vld [vmem:[#allocation4 + $0x118] sm:$0xff]
    %v269 = vld [vmem:[#allocation4 + $0x120] sm:$0xff]
    %v270 = vld [vmem:[#allocation4 + $0x128] sm:$0xff]
    %v271 = vld [vmem:[#allocation4 + $0x130] sm:$0xff]
    %v272 = vld [vmem:[#allocation4 + $0x138] sm:$0xff]
    %v273 = vld [vmem:[#allocation4 + $0x140] sm:$0xff]
    %v274 = vld [vmem:[#allocation4 + $0x148] sm:$0xff]
    %v275 = vld [vmem:[#allocation4 + $0x150] sm:$0xff]
    %v276 = vld [vmem:[#allocation4 + $0x158] sm:$0xff]
    %v277 = vld [vmem:[#allocation4 + $0x160] sm:$0xff]
    %v278 = vld [vmem:[#allocation4 + $0x168] sm:$0xff]
    %v279 = vld [vmem:[#allocation4 + $0x170] sm:$0xff]
    %v280 = vld [vmem:[#allocation4 + $0x178] sm:$0xff]
    %v281 = vld [vmem:[#allocation4 + $0x180] sm:$0xff]
    %v282 = vld [vmem:[#allocation4 + $0x188] sm:$0xff]
    %v283 = vld [vmem:[#allocation4 + $0x190] sm:$0xff]
    %v284 = vld [vmem:[#allocation4 + $0x198] sm:$0xff]
    %v285 = vld [vmem:[#allocation4 + $0x1a0] sm:$0xff]
    %v286 = vld [vmem:[#allocation4 + $0x1a8] sm:$0xff]
    %v287 = vld [vmem:[#allocation4 + $0x1b0] sm:$0xff]
    %v288 = vld [vmem:[#allocation4 + $0x1b8] sm:$0xff]
    %v289 = vld [vmem:[#allocation4 + $0x1c0] sm:$0xff]
    %v290 = vld [vmem:[#allocation4 + $0x1c8] sm:$0xff]
    %v291 = vld [vmem:[#allocation4 + $0x1d0] sm:$0xff]
    %v292 = vld [vmem:[#allocation4 + $0x1d8] sm:$0xff]
    %v293 = vld [vmem:[#allocation4 + $0x1e0] sm:$0xff]
    %v294 = vld [vmem:[#allocation4 + $0x1e8] sm:$0xff]
    %v295 = vld [vmem:[#allocation4 + $0x1f0] sm:$0xff]
    %v296 = vld [vmem:[#allocation4 + $0x1f8] sm:$0xff]
    %v297 = vld [vmem:[#allocation4 + $0x200] sm:$0xff]
    %v298 = vld [vmem:[#allocation4 + $0x208] sm:$0xff]
    %v299 = vld [vmem:[#allocation4 + $0x210] sm:$0xff]
    %v300 = vld [vmem:[#allocation4 + $0x218] sm:$0xff]
    %v301 = vld [vmem:[#allocation4 + $0x220] sm:$0xff]
    %v302 = vld [vmem:[#allocation4 + $0x228] sm:$0xff]
    %v303 = vld [vmem:[#allocation4 + $0x230] sm:$0xff]
    %v304 = vld [vmem:[#allocation4 + $0x238] sm:$0xff]
    %v305 = vld [vmem:[#allocation4 + $0x240] sm:$0xff]
    %v306 = vld [vmem:[#allocation4 + $0x248] sm:$0xff]
    %v307 = vld [vmem:[#allocation4 + $0x250] sm:$0xff]
    %v308 = vld [vmem:[#allocation4 + $0x258] sm:$0xff]
    %v309 = vld [vmem:[#allocation4 + $0x260] sm:$0xff]
    %v310 = vld [vmem:[#allocation4 + $0x268] sm:$0xff]
    %v311 = vld [vmem:[#allocation4 + $0x270] sm:$0xff]
    %v312 = vld [vmem:[#allocation4 + $0x278] sm:$0xff]
    %v313 = vld [vmem:[#allocation4 + $0x280] sm:$0xff]
    %v314 = vld [vmem:[#allocation4 + $0x288] sm:$0xff]
    %v315 = vld [vmem:[#allocation4 + $0x290] sm:$0xff]
    %v316 = vld [vmem:[#allocation4 + $0x298] sm:$0xff]
    %v317 = vld [vmem:[#allocation4 + $0x2a0] sm:$0xff]
    %v318 = vld [vmem:[#allocation4 + $0x2a8] sm:$0xff]
    %v319 = vld [vmem:[#allocation4 + $0x2b0] sm:$0xff]
    %v320 = vld [vmem:[#allocation4 + $0x2b8] sm:$0xff]
    %v321 = vld [vmem:[#allocation4 + $0x2c0] sm:$0xff]
    %v322 = vld [vmem:[#allocation4 + $0x2c8] sm:$0xff]
    %v323 = vld [vmem:[#allocation4 + $0x2d0] sm:$0xff]
    %v324 = vld [vmem:[#allocation4 + $0x2d8] sm:$0xff]
    %v325 = vld [vmem:[#allocation4 + $0x2e0] sm:$0xff]
    %v326 = vld [vmem:[#allocation4 + $0x2e8] sm:$0xff]
    %v327 = vld [vmem:[#allocation4 + $0x2f0] sm:$0xff]
    %v328 = vld [vmem:[#allocation4 + $0x2f8] sm:$0xff]
    %v329 = vld [vmem:[#allocation4 + $0x300] sm:$0xff]
    %v330 = vld [vmem:[#allocation4 + $0x308] sm:$0xff]
    %v331 = vld [vmem:[#allocation4 + $0x310] sm:$0xff]
    %v332 = vld [vmem:[#allocation4 + $0x318] sm:$0xff]
    %v333 = vld [vmem:[#allocation4 + $0x320] sm:$0xff]
    %v334 = vld [vmem:[#allocation4 + $0x328] sm:$0xff]
    %v335 = vld [vmem:[#allocation4 + $0x330] sm:$0xff]
    %v336 = vld [vmem:[#allocation4 + $0x338] sm:$0xff]
    %v337 = vld [vmem:[#allocation4 + $0x340] sm:$0xff]
    %v338 = vld [vmem:[#allocation4 + $0x348] sm:$0xff]
    %v339 = vld [vmem:[#allocation4 + $0x350] sm:$0xff]
    %v340 = vld [vmem:[#allocation4 + $0x358] sm:$0xff]
    %v341 = vld [vmem:[#allocation4 + $0x360] sm:$0xff]
    %v342 = vld [vmem:[#allocation4 + $0x368] sm:$0xff]
    %v343 = vld [vmem:[#allocation4 + $0x370] sm:$0xff]
    %v344 = vld [vmem:[#allocation4 + $0x378] sm:$0xff]
    %v345 = vld [vmem:[#allocation4 + $0x380] sm:$0xff]
    %v346 = vld [vmem:[#allocation4 + $0x388] sm:$0xff]
    %v347 = vld [vmem:[#allocation4 + $0x390] sm:$0xff]
    %v348 = vld [vmem:[#allocation4 + $0x398] sm:$0xff]
    %v349 = vld [vmem:[#allocation4 + $0x3a0] sm:$0xff]
    %v350 = vld [vmem:[#allocation4 + $0x3a8] sm:$0xff]
    %v351 = vld [vmem:[#allocation4 + $0x3b0] sm:$0xff]
    %v352 = vld [vmem:[#allocation4 + $0x3b8] sm:$0xff]
    %v353 = vld [vmem:[#allocation4 + $0x3c0] sm:$0xff]
    %v354 = vld [vmem:[#allocation4 + $0x3c8] sm:$0xff]
    %v355 = vld [vmem:[#allocation4 + $0x3d0] sm:$0xff]
    %v356 = vld [vmem:[#allocation4 + $0x3d8] sm:$0xff]
    %v357 = vld [vmem:[#allocation4 + $0x3e0] sm:$0xff]
    %v358 = vld [vmem:[#allocation4 + $0x3e8] sm:$0xff]
    %v359 = vld [vmem:[#allocation4 + $0x3f0] sm:$0xff]
    %v360 = vld [vmem:[#allocation4 + $0x3f8] sm:$0xff]
    %v361 = vld [vmem:[#allocation4 + $0x400] sm:$0xff]
    %v362 = vld [vmem:[#allocation4 + $0x408] sm:$0xff]
    %v363 = vld [vmem:[#allocation4 + $0x410] sm:$0xff]
    %v364 = vld [vmem:[#allocation4 + $0x418] sm:$0xff]
    %v365 = vld [vmem:[#allocation4 + $0x420] sm:$0xff]
    %v366 = vld [vmem:[#allocation4 + $0x428] sm:$0xff]
    %v367 = vld [vmem:[#allocation4 + $0x430] sm:$0xff]
    %v368 = vld [vmem:[#allocation4 + $0x438] sm:$0xff]
    %v369 = vld [vmem:[#allocation4 + $0x440] sm:$0xff]
    %v370 = vld [vmem:[#allocation4 + $0x448] sm:$0xff]
    %v371 = vld [vmem:[#allocation4 + $0x450] sm:$0xff]
    %v372 = vld [vmem:[#allocation4 + $0x458] sm:$0xff]
    %v373 = vld [vmem:[#allocation4 + $0x460] sm:$0xff]
    %v374 = vld [vmem:[#allocation4 + $0x468] sm:$0xff]
    %v375 = vld [vmem:[#allocation4 + $0x470] sm:$0xff]
    %v376 = vld [vmem:[#allocation4 + $0x478] sm:$0xff]
    %v377 = vld [vmem:[#allocation4 + $0x480] sm:$0xff]
    %v378 = vld [vmem:[#allocation4 + $0x488] sm:$0xff]
    %v379 = vld [vmem:[#allocation4 + $0x490] sm:$0xff]
    %v380 = vld [vmem:[#allocation4 + $0x498] sm:$0xff]
    %v381 = vld [vmem:[#allocation4 + $0x4a0] sm:$0xff]
    %v382 = vld [vmem:[#allocation4 + $0x4a8] sm:$0xff]
    %v383 = vld [vmem:[#allocation4 + $0x4b0] sm:$0xff]
    %v384 = vld [vmem:[#allocation4 + $0x4b8] sm:$0xff]
    %v385 = vld [vmem:[#allocation4 + $0x4c0] sm:$0xff]
    %v386 = vld [vmem:[#allocation4 + $0x4c8] sm:$0xff]
    %v387 = vld [vmem:[#allocation4 + $0x4d0] sm:$0xff]
    %v388 = vld [vmem:[#allocation4 + $0x4d8] sm:$0xff]
    %v389 = vld [vmem:[#allocation4 + $0x4e0] sm:$0xff]
    %v390 = vld [vmem:[#allocation4 + $0x4e8] sm:$0xff]
    %v391 = vld [vmem:[#allocation4 + $0x4f0] sm:$0xff]
    %v392 = vld [vmem:[#allocation4 + $0x4f8] sm:$0xff]
    %v393 = vld [vmem:[#allocation4 + $0x500] sm:$0xff]
    %v394 = vld [vmem:[#allocation4 + $0x508] sm:$0xff]
    %v395 = vld [vmem:[#allocation4 + $0x510] sm:$0xff]
    %v396 = vld [vmem:[#allocation4 + $0x518] sm:$0xff]
    %v397 = vld [vmem:[#allocation4 + $0x520] sm:$0xff]
    %v398 = vld [vmem:[#allocation4 + $0x528] sm:$0xff]
    %v399 = vld [vmem:[#allocation4 + $0x530] sm:$0xff]
    %v400 = vld [vmem:[#allocation4 + $0x538] sm:$0xff]
    %v401 = vld [vmem:[#allocation4 + $0x540] sm:$0xff]
    %v402 = vld [vmem:[#allocation4 + $0x548] sm:$0xff]
    %v403 = vld [vmem:[#allocation4 + $0x550] sm:$0xff]
    %v404 = vld [vmem:[#allocation4 + $0x558] sm:$0xff]
    %v405 = vld [vmem:[#allocation4 + $0x560] sm:$0xff]
    %v406 = vld [vmem:[#allocation4 + $0x568] sm:$0xff]
    %v407 = vld [vmem:[#allocation4 + $0x570] sm:$0xff]
    %v408 = vld [vmem:[#allocation4 + $0x578] sm:$0xff]
    %v409 = vld [vmem:[#allocation4 + $0x580] sm:$0xff]
    %v410 = vld [vmem:[#allocation4 + $0x588] sm:$0xff]
    %v411 = vld [vmem:[#allocation4 + $0x590] sm:$0xff]
    %v412 = vld [vmem:[#allocation4 + $0x598] sm:$0xff]
    %v413 = vld [vmem:[#allocation4 + $0x5a0] sm:$0xff]
    %v414 = vld [vmem:[#allocation4 + $0x5a8] sm:$0xff]
    %v415 = vld [vmem:[#allocation4 + $0x5b0] sm:$0xff]
    %v416 = vld [vmem:[#allocation4 + $0x5b8] sm:$0xff]
    %v417 = vld [vmem:[#allocation4 + $0x5c0] sm:$0xff]
    %v418 = vld [vmem:[#allocation4 + $0x5c8] sm:$0xff]
    %v419 = vld [vmem:[#allocation4 + $0x5d0] sm:$0xff]
    %v420 = vld [vmem:[#allocation4 + $0x5d8] sm:$0xff]
    %v421 = vld [vmem:[#allocation4 + $0x5e0] sm:$0xff]
    %v422 = vld [vmem:[#allocation4 + $0x5e8] sm:$0xff]
    %v423 = vld [vmem:[#allocation4 + $0x5f0] sm:$0xff]
    %v424 = vld [vmem:[#allocation4 + $0x5f8] sm:$0xff]
    %v425 = vld [vmem:[#allocation4 + $0x600] sm:$0xff]
    %v426 = vld [vmem:[#allocation4 + $0x608] sm:$0xff]
    %v427 = vld [vmem:[#allocation4 + $0x610] sm:$0xff]
    %v428 = vld [vmem:[#allocation4 + $0x618] sm:$0xff]
    %v429 = vld [vmem:[#allocation4 + $0x620] sm:$0xff]
    %v430 = vld [vmem:[#allocation4 + $0x628] sm:$0xff]
    %v431 = vld [vmem:[#allocation4 + $0x630] sm:$0xff]
    %v432 = vld [vmem:[#allocation4 + $0x638] sm:$0xff]
    %v433 = vld [vmem:[#allocation4 + $0x640] sm:$0xff]
    %v434 = vld [vmem:[#allocation4 + $0x648] sm:$0xff]
    %v435 = vld [vmem:[#allocation4 + $0x650] sm:$0xff]
    %v436 = vld [vmem:[#allocation4 + $0x658] sm:$0xff]
    %v437 = vld [vmem:[#allocation4 + $0x660] sm:$0xff]
    %v438 = vld [vmem:[#allocation4 + $0x668] sm:$0xff]
    %v439 = vld [vmem:[#allocation4 + $0x670] sm:$0xff]
    %v440 = vld [vmem:[#allocation4 + $0x678] sm:$0xff]
    %v441 = vld [vmem:[#allocation4 + $0x680] sm:$0xff]
    %v442 = vld [vmem:[#allocation4 + $0x688] sm:$0xff]
    %v443 = vld [vmem:[#allocation4 + $0x690] sm:$0xff]
    %v444 = vld [vmem:[#allocation4 + $0x698] sm:$0xff]
    %v445 = vld [vmem:[#allocation4 + $0x6a0] sm:$0xff]
    %v446 = vld [vmem:[#allocation4 + $0x6a8] sm:$0xff]
    %v447 = vld [vmem:[#allocation4 + $0x6b0] sm:$0xff]
    %v448 = vld [vmem:[#allocation4 + $0x6b8] sm:$0xff]
    %v449 = vld [vmem:[#allocation4 + $0x6c0] sm:$0xff]
    %v450 = vld [vmem:[#allocation4 + $0x6c8] sm:$0xff]
    %v451 = vld [vmem:[#allocation4 + $0x6d0] sm:$0xff]
    %v452 = vld [vmem:[#allocation4 + $0x6d8] sm:$0xff]
    %v453 = vld [vmem:[#allocation4 + $0x6e0] sm:$0xff]
    %v454 = vld [vmem:[#allocation4 + $0x6e8] sm:$0xff]
    %v455 = vld [vmem:[#allocation4 + $0x6f0] sm:$0xff]
    %v456 = vld [vmem:[#allocation4 + $0x6f8] sm:$0xff]
    %v457 = vld [vmem:[#allocation4 + $0x700] sm:$0xff]
    %v458 = vld [vmem:[#allocation4 + $0x708] sm:$0xff]
    %v459 = vld [vmem:[#allocation4 + $0x710] sm:$0xff]
    %v460 = vld [vmem:[#allocation4 + $0x718] sm:$0xff]
    %v461 = vld [vmem:[#allocation4 + $0x720] sm:$0xff]
    %v462 = vld [vmem:[#allocation4 + $0x728] sm:$0xff]
    %v463 = vld [vmem:[#allocation4 + $0x730] sm:$0xff]
    %v464 = vld [vmem:[#allocation4 + $0x738] sm:$0xff]
    %v465 = vld [vmem:[#allocation4 + $0x740] sm:$0xff]
    %v466 = vld [vmem:[#allocation4 + $0x748] sm:$0xff]
    %v467 = vld [vmem:[#allocation4 + $0x750] sm:$0xff]
    %v468 = vld [vmem:[#allocation4 + $0x758] sm:$0xff]
    %v469 = vld [vmem:[#allocation4 + $0x760] sm:$0xff]
    %v470 = vld [vmem:[#allocation4 + $0x768] sm:$0xff]
    %v471 = vld [vmem:[#allocation4 + $0x770] sm:$0xff]
    %v472 = vld [vmem:[#allocation4 + $0x778] sm:$0xff]
    %v473 = vld [vmem:[#allocation4 + $0x780] sm:$0xff]
    %v474 = vld [vmem:[#allocation4 + $0x788] sm:$0xff]
    %v475 = vld [vmem:[#allocation4 + $0x790] sm:$0xff]
    %v476 = vld [vmem:[#allocation4 + $0x798] sm:$0xff]
    %v477 = vld [vmem:[#allocation4 + $0x7a0] sm:$0xff]
    %v478 = vld [vmem:[#allocation4 + $0x7a8] sm:$0xff]
    %v479 = vld [vmem:[#allocation4 + $0x7b0] sm:$0xff]
    %v480 = vld [vmem:[#allocation4 + $0x7b8] sm:$0xff]
    %v481 = vld [vmem:[#allocation4 + $0x7c0] sm:$0xff]
    %v482 = vld [vmem:[#allocation4 + $0x7c8] sm:$0xff]
    %v483 = vld [vmem:[#allocation4 + $0x7d0] sm:$0xff]
    %v484 = vld [vmem:[#allocation4 + $0x7d8] sm:$0xff]
    %v485 = vld [vmem:[#allocation4 + $0x7e0] sm:$0xff]
    %v486 = vld [vmem:[#allocation4 + $0x7e8] sm:$0xff]
    %v487 = vld [vmem:[#allocation4 + $0x7f0] sm:$0xff]
    %v488 = vld [vmem:[#allocation4 + $0x7f8] sm:$0xff]
    %489 = vmatpush.msra.mxu0 %v353
    %490 = vmatpush.msra.mxu0 %v345
    %491 = vmatpush.msra.mxu0 %v337
    %492 = vmatpush.msra.mxu0 %v329
    %493 = vmatpush.msra.mxu0 %v321
    %494 = vmatpush.msra.mxu0 %v313
    %495 = vmatpush.msra.mxu0 %v305
    %496 = vmatpush.msra.mxu0 %v297
    %497 = vmatpush.msra.mxu0 %v289
    %498 = vmatpush.msra.mxu0 %v281
    %499 = vmatpush.msra.mxu0 %v273
    %500 = vmatpush.msra.mxu0 %v265
    %501 = vmatpush.msra.mxu0 %v257
    %502 = vmatpush.msra.mxu0 %v249
    %503 = vmatpush.msra.mxu0 %v241
    %504 = vmatpush.msra.mxu0 %v233
    %505 = vmatmul.f32.gmra.mxu0 0.0
    %v506 = vpop.f32.mrf.mxu0
    %v507 = vadd.f32 0.0, %v506
    %508 = vdwg.mxu0
    %509 = vmatpush.msra.mxu0 %v481
    %510 = vmatpush.msra.mxu0 %v473
    %511 = vmatpush.msra.mxu0 %v465
    %512 = vmatpush.msra.mxu0 %v457
    %513 = vmatpush.msra.mxu0 %v449
    %514 = vmatpush.msra.mxu0 %v441
    %515 = vmatpush.msra.mxu0 %v433
    %516 = vmatpush.msra.mxu0 %v425
    %517 = vmatpush.msra.mxu0 %v417
    %518 = vmatpush.msra.mxu0 %v409
    %519 = vmatpush.msra.mxu0 %v401
    %520 = vmatpush.msra.mxu0 %v393
    %521 = vmatpush.msra.mxu0 %v385
    %522 = vmatpush.msra.mxu0 %v377
    %523 = vmatpush.msra.mxu0 %v369
    %524 = vmatpush.msra.mxu0 %v361
    %525 = vmatmul.f32.gmra.mxu0 0.0
    %v526 = vpop.f32.mrf.mxu0
    %v527 = vadd.f32 %v507, %v526
    %528 = vdwg.mxu0
    %529 = vmatpush.msra.mxu0 %v354
    %530 = vmatpush.msra.mxu0 %v346
    %531 = vmatpush.msra.mxu0 %v338
    %532 = vmatpush.msra.mxu0 %v330
    %533 = vmatpush.msra.mxu0 %v322
    %534 = vmatpush.msra.mxu0 %v314
    %535 = vmatpush.msra.mxu0 %v306
    %536 = vmatpush.msra.mxu0 %v298
    %537 = vmatpush.msra.mxu0 %v290
    %538 = vmatpush.msra.mxu0 %v282
    %539 = vmatpush.msra.mxu0 %v274
    %540 = vmatpush.msra.mxu0 %v266
    %541 = vmatpush.msra.mxu0 %v258
    %542 = vmatpush.msra.mxu0 %v250
    %543 = vmatpush.msra.mxu0 %v242
    %544 = vmatpush.msra.mxu0 %v234
    %545 = vmatmul.f32.gmra.mxu0 0.0
    %v546 = vpop.f32.mrf.mxu0
    %v547 = vadd.f32 0.0, %v546
    %548 = vdwg.mxu0
    %549 = vmatpush.msra.mxu0 %v482
    %550 = vmatpush.msra.mxu0 %v474
    %551 = vmatpush.msra.mxu0 %v466
    %552 = vmatpush.msra.mxu0 %v458
    %553 = vmatpush.msra.mxu0 %v450
    %554 = vmatpush.msra.mxu0 %v442
    %555 = vmatpush.msra.mxu0 %v434
    %556 = vmatpush.msra.mxu0 %v426
    %557 = vmatpush.msra.mxu0 %v418
    %558 = vmatpush.msra.mxu0 %v410
    %559 = vmatpush.msra.mxu0 %v402
    %560 = vmatpush.msra.mxu0 %v394
    %561 = vmatpush.msra.mxu0 %v386
    %562 = vmatpush.msra.mxu0 %v378
    %563 = vmatpush.msra.mxu0 %v370
    %564 = vmatpush.msra.mxu0 %v362
    %565 = vmatmul.f32.gmra.mxu0 0.0
    %v566 = vpop.f32.mrf.mxu0
    %v567 = vadd.f32 %v547, %v566
    %568 = vdwg.mxu0
    %569 = vmatpush.msra.mxu0 %v355
    %570 = vmatpush.msra.mxu0 %v347
    %571 = vmatpush.msra.mxu0 %v339
    %572 = vmatpush.msra.mxu0 %v331
    %573 = vmatpush.msra.mxu0 %v323
    %574 = vmatpush.msra.mxu0 %v315
    %575 = vmatpush.msra.mxu0 %v307
    %576 = vmatpush.msra.mxu0 %v299
    %577 = vmatpush.msra.mxu0 %v291
    %578 = vmatpush.msra.mxu0 %v283
    %579 = vmatpush.msra.mxu0 %v275
    %580 = vmatpush.msra.mxu0 %v267
    %581 = vmatpush.msra.mxu0 %v259
    %582 = vmatpush.msra.mxu0 %v251
    %583 = vmatpush.msra.mxu0 %v243
    %584 = vmatpush.msra.mxu0 %v235
    %585 = vmatmul.f32.gmra.mxu0 0.0
    %v586 = vpop.f32.mrf.mxu0
    %v587 = vadd.f32 0.0, %v586
    %588 = vdwg.mxu0
    %589 = vmatpush.msra.mxu0 %v483
    %590 = vmatpush.msra.mxu0 %v475
    %591 = vmatpush.msra.mxu0 %v467
    %592 = vmatpush.msra.mxu0 %v459
    %593 = vmatpush.msra.mxu0 %v451
    %594 = vmatpush.msra.mxu0 %v443
    %595 = vmatpush.msra.mxu0 %v435
    %596 = vmatpush.msra.mxu0 %v427
    %597 = vmatpush.msra.mxu0 %v419
    %598 = vmatpush.msra.mxu0 %v411
    %599 = vmatpush.msra.mxu0 %v403
    %600 = vmatpush.msra.mxu0 %v395
    %601 = vmatpush.msra.mxu0 %v387
    %602 = vmatpush.msra.mxu0 %v379
    %603 = vmatpush.msra.mxu0 %v371
    %604 = vmatpush.msra.mxu0 %v363
    %605 = vmatmul.f32.gmra.mxu0 0.0
    %v606 = vpop.f32.mrf.mxu0
    %v607 = vadd.f32 %v587, %v606
    %608 = vdwg.mxu0
    %609 = vmatpush.msra.mxu0 %v356
    %610 = vmatpush.msra.mxu0 %v348
    %611 = vmatpush.msra.mxu0 %v340
    %612 = vmatpush.msra.mxu0 %v332
    %613 = vmatpush.msra.mxu0 %v324
    %614 = vmatpush.msra.mxu0 %v316
    %615 = vmatpush.msra.mxu0 %v308
    %616 = vmatpush.msra.mxu0 %v300
    %617 = vmatpush.msra.mxu0 %v292
    %618 = vmatpush.msra.mxu0 %v284
    %619 = vmatpush.msra.mxu0 %v276
    %620 = vmatpush.msra.mxu0 %v268
    %621 = vmatpush.msra.mxu0 %v260
    %622 = vmatpush.msra.mxu0 %v252
    %623 = vmatpush.msra.mxu0 %v244
    %624 = vmatpush.msra.mxu0 %v236
    %625 = vmatmul.f32.gmra.mxu0 0.0
    %v626 = vpop.f32.mrf.mxu0
    %v627 = vadd.f32 0.0, %v626
    %628 = vdwg.mxu0
    %629 = vmatpush.msra.mxu0 %v484
    %630 = vmatpush.msra.mxu0 %v476
    %631 = vmatpush.msra.mxu0 %v468
    %632 = vmatpush.msra.mxu0 %v460
    %633 = vmatpush.msra.mxu0 %v452
    %634 = vmatpush.msra.mxu0 %v444
    %635 = vmatpush.msra.mxu0 %v436
    %636 = vmatpush.msra.mxu0 %v428
    %637 = vmatpush.msra.mxu0 %v420
    %638 = vmatpush.msra.mxu0 %v412
    %639 = vmatpush.msra.mxu0 %v404
    %640 = vmatpush.msra.mxu0 %v396
    %641 = vmatpush.msra.mxu0 %v388
    %642 = vmatpush.msra.mxu0 %v380
    %643 = vmatpush.msra.mxu0 %v372
    %644 = vmatpush.msra.mxu0 %v364
    %645 = vmatmul.f32.gmra.mxu0 0.0
    %v646 = vpop.f32.mrf.mxu0
    %v647 = vadd.f32 %v627, %v646
    %648 = vdwg.mxu0
    %649 = vmatpush.msra.mxu0 %v357
    %650 = vmatpush.msra.mxu0 %v349
    %651 = vmatpush.msra.mxu0 %v341
    %652 = vmatpush.msra.mxu0 %v333
    %653 = vmatpush.msra.mxu0 %v325
    %654 = vmatpush.msra.mxu0 %v317
    %655 = vmatpush.msra.mxu0 %v309
    %656 = vmatpush.msra.mxu0 %v301
    %657 = vmatpush.msra.mxu0 %v293
    %658 = vmatpush.msra.mxu0 %v285
    %659 = vmatpush.msra.mxu0 %v277
    %660 = vmatpush.msra.mxu0 %v269
    %661 = vmatpush.msra.mxu0 %v261
    %662 = vmatpush.msra.mxu0 %v253
    %663 = vmatpush.msra.mxu0 %v245
    %664 = vmatpush.msra.mxu0 %v237
    %665 = vmatmul.f32.gmra.mxu0 0.0
    %v666 = vpop.f32.mrf.mxu0
    %v667 = vadd.f32 0.0, %v666
    %668 = vdwg.mxu0
    %669 = vmatpush.msra.mxu0 %v485
    %670 = vmatpush.msra.mxu0 %v477
    %671 = vmatpush.msra.mxu0 %v469
    %672 = vmatpush.msra.mxu0 %v461
    %673 = vmatpush.msra.mxu0 %v453
    %674 = vmatpush.msra.mxu0 %v445
    %675 = vmatpush.msra.mxu0 %v437
    %676 = vmatpush.msra.mxu0 %v429
    %677 = vmatpush.msra.mxu0 %v421
    %678 = vmatpush.msra.mxu0 %v413
    %679 = vmatpush.msra.mxu0 %v405
    %680 = vmatpush.msra.mxu0 %v397
    %681 = vmatpush.msra.mxu0 %v389
    %682 = vmatpush.msra.mxu0 %v381
    %683 = vmatpush.msra.mxu0 %v373
    %684 = vmatpush.msra.mxu0 %v365
    %685 = vmatmul.f32.gmra.mxu0 0.0
    %v686 = vpop.f32.mrf.mxu0
    %v687 = vadd.f32 %v667, %v686
    %688 = vdwg.mxu0
    %689 = vmatpush.msra.mxu0 %v358
    %690 = vmatpush.msra.mxu0 %v350
    %691 = vmatpush.msra.mxu0 %v342
    %692 = vmatpush.msra.mxu0 %v334
    %693 = vmatpush.msra.mxu0 %v326
    %694 = vmatpush.msra.mxu0 %v318
    %695 = vmatpush.msra.mxu0 %v310
    %696 = vmatpush.msra.mxu0 %v302
    %697 = vmatpush.msra.mxu0 %v294
    %698 = vmatpush.msra.mxu0 %v286
    %699 = vmatpush.msra.mxu0 %v278
    %700 = vmatpush.msra.mxu0 %v270
    %701 = vmatpush.msra.mxu0 %v262
    %702 = vmatpush.msra.mxu0 %v254
    %703 = vmatpush.msra.mxu0 %v246
    %704 = vmatpush.msra.mxu0 %v238
    %705 = vmatmul.f32.gmra.mxu0 0.0
    %v706 = vpop.f32.mrf.mxu0
    %v707 = vadd.f32 0.0, %v706
    %708 = vdwg.mxu0
    %709 = vmatpush.msra.mxu0 %v486
    %710 = vmatpush.msra.mxu0 %v478
    %711 = vmatpush.msra.mxu0 %v470
    %712 = vmatpush.msra.mxu0 %v462
    %713 = vmatpush.msra.mxu0 %v454
    %714 = vmatpush.msra.mxu0 %v446
    %715 = vmatpush.msra.mxu0 %v438
    %716 = vmatpush.msra.mxu0 %v430
    %717 = vmatpush.msra.mxu0 %v422
    %718 = vmatpush.msra.mxu0 %v414
    %719 = vmatpush.msra.mxu0 %v406
    %720 = vmatpush.msra.mxu0 %v398
    %721 = vmatpush.msra.mxu0 %v390
    %722 = vmatpush.msra.mxu0 %v382
    %723 = vmatpush.msra.mxu0 %v374
    %724 = vmatpush.msra.mxu0 %v366
    %725 = vmatmul.f32.gmra.mxu0 0.0
    %v726 = vpop.f32.mrf.mxu0
    %v727 = vadd.f32 %v707, %v726
    %728 = vdwg.mxu0
    %729 = vmatpush.msra.mxu0 %v359
    %730 = vmatpush.msra.mxu0 %v351
    %731 = vmatpush.msra.mxu0 %v343
    %732 = vmatpush.msra.mxu0 %v335
    %733 = vmatpush.msra.mxu0 %v327
    %734 = vmatpush.msra.mxu0 %v319
    %735 = vmatpush.msra.mxu0 %v311
    %736 = vmatpush.msra.mxu0 %v303
    %737 = vmatpush.msra.mxu0 %v295
    %738 = vmatpush.msra.mxu0 %v287
    %739 = vmatpush.msra.mxu0 %v279
    %740 = vmatpush.msra.mxu0 %v271
    %741 = vmatpush.msra.mxu0 %v263
    %742 = vmatpush.msra.mxu0 %v255
    %743 = vmatpush.msra.mxu0 %v247
    %744 = vmatpush.msra.mxu0 %v239
    %745 = vmatmul.f32.gmra.mxu0 0.0
    %v746 = vpop.f32.mrf.mxu0
    %v747 = vadd.f32 0.0, %v746
    %748 = vdwg.mxu0
    %749 = vmatpush.msra.mxu0 %v487
    %750 = vmatpush.msra.mxu0 %v479
    %751 = vmatpush.msra.mxu0 %v471
    %752 = vmatpush.msra.mxu0 %v463
    %753 = vmatpush.msra.mxu0 %v455
    %754 = vmatpush.msra.mxu0 %v447
    %755 = vmatpush.msra.mxu0 %v439
    %756 = vmatpush.msra.mxu0 %v431
    %757 = vmatpush.msra.mxu0 %v423
    %758 = vmatpush.msra.mxu0 %v415
    %759 = vmatpush.msra.mxu0 %v407
    %760 = vmatpush.msra.mxu0 %v399
    %761 = vmatpush.msra.mxu0 %v391
    %762 = vmatpush.msra.mxu0 %v383
    %763 = vmatpush.msra.mxu0 %v375
    %764 = vmatpush.msra.mxu0 %v367
    %765 = vmatmul.f32.gmra.mxu0 0.0
    %v766 = vpop.f32.mrf.mxu0
    %v767 = vadd.f32 %v747, %v766
    %768 = vdwg.mxu0
    %769 = vmatpush.msra.mxu0 %v360
    %770 = vmatpush.msra.mxu0 %v352
    %771 = vmatpush.msra.mxu0 %v344
    %772 = vmatpush.msra.mxu0 %v336
    %773 = vmatpush.msra.mxu0 %v328
    %774 = vmatpush.msra.mxu0 %v320
    %775 = vmatpush.msra.mxu0 %v312
    %776 = vmatpush.msra.mxu0 %v304
    %777 = vmatpush.msra.mxu0 %v296
    %778 = vmatpush.msra.mxu0 %v288
    %779 = vmatpush.msra.mxu0 %v280
    %780 = vmatpush.msra.mxu0 %v272
    %781 = vmatpush.msra.mxu0 %v264
    %782 = vmatpush.msra.mxu0 %v256
    %783 = vmatpush.msra.mxu0 %v248
    %784 = vmatpush.msra.mxu0 %v240
    %785 = vmatmul.f32.gmra.mxu0 0.0
    %v786 = vpop.f32.mrf.mxu0
    %v787 = vadd.f32 0.0, %v786
    %788 = vdwg.mxu0
    %789 = vmatpush.msra.mxu0 %v488
    %790 = vmatpush.msra.mxu0 %v480
    %791 = vmatpush.msra.mxu0 %v472
    %792 = vmatpush.msra.mxu0 %v464
    %793 = vmatpush.msra.mxu0 %v456
    %794 = vmatpush.msra.mxu0 %v448
    %795 = vmatpush.msra.mxu0 %v440
    %796 = vmatpush.msra.mxu0 %v432
    %797 = vmatpush.msra.mxu0 %v424
    %798 = vmatpush.msra.mxu0 %v416
    %799 = vmatpush.msra.mxu0 %v408
    %800 = vmatpush.msra.mxu0 %v400
    %801 = vmatpush.msra.mxu0 %v392
    %802 = vmatpush.msra.mxu0 %v384
    %803 = vmatpush.msra.mxu0 %v376
    %804 = vmatpush.msra.mxu0 %v368
    %805 = vmatmul.f32.gmra.mxu0 0.0
    %v806 = vpop.f32.mrf.mxu0
    %v807 = vadd.f32 %v787, %v806
    %808 = vdwg.mxu0
    %v809 = vadd.f32 %v91, %v527
    %v810 = vadd.f32 %v111, %v567
    %v811 = vadd.f32 %v131, %v607
    %v812 = vadd.f32 %v151, %v647
    %v813 = vadd.f32 %v171, %v687
    %v814 = vadd.f32 %v191, %v727
    %v815 = vadd.f32 %v211, %v767
    %v816 = vadd.f32 %v231, %v807
    %v817 = vxor.u32 %v809, 2147483648
    %v818 = vxor.u32 %v810, 2147483648
    %v819 = vxor.u32 %v811, 2147483648
    %v820 = vxor.u32 %v812, 2147483648
    %v821 = vxor.u32 %v813, 2147483648
    %v822 = vxor.u32 %v814, 2147483648
    %v823 = vmul.f32 %v817, 1.442695
    %v824 = vpow.pop %v823
    %v825 = vmul.f32 %v818, 1.442695
    %v826 = vpow.pop %v825
    %v827 = vmul.f32 %v819, 1.442695
    %v828 = vpow.pop %v827
    %v829 = vmul.f32 %v820, 1.442695
    %v830 = vpow.pop %v829
    %v831 = vmul.f32 %v821, 1.442695
    %v832 = vpow.pop %v831
    %v833 = vmul.f32 %v822, 1.442695
    %v834 = vpow.pop %v833
    %v835 = vadd.f32 %v824, 1.0
    %v836 = vadd.f32 %v826, 1.0
    %v837 = vadd.f32 %v828, 1.0
    %v838 = vadd.f32 %v830, 1.0
    %v839 = vadd.f32 %v832, 1.0
    %v840 = vadd.f32 %v834, 1.0
    %v841 = vrcp.pop %v835
    %v842 = vmul.f32 %v835, %v841
    %v843 = vsub.f32 1.0, %v842
    %v844 = vmul.f32 %v841, %v843
    %v845 = vadd.f32 %v841, %v844
    %vm846 = vweird.f32 %v835
    %vm847 = vweird.f32 %v841
    %vm848 = vmor %vm846, %vm847
    %v849 = vsel %vm848, %v841, %v845
    %v850 = vand.u32 2147483647, %v835
    %vm851 = vcmp.eq.f32.partialorder %v850, 8.507059e+37
    %v852 = vand.u32 %v835, 2147483648
    %v853 = vor.u32 1.1754944e-38, %v852
    %v854 = vsel %vm851, %v853, %v849
    %v855 = vmul.f32 1.0, %v854
    %v856 = vrcp.pop %v836
    %v857 = vmul.f32 %v836, %v856
    %v858 = vsub.f32 1.0, %v857
    %v859 = vmul.f32 %v856, %v858
    %v860 = vadd.f32 %v856, %v859
    %vm861 = vweird.f32 %v836
    %vm862 = vweird.f32 %v856
    %vm863 = vmor %vm861, %vm862
    %v864 = vsel %vm863, %v856, %v860
    %v865 = vand.u32 2147483647, %v836
    %vm866 = vcmp.eq.f32.partialorder %v865, 8.507059e+37
    %v867 = vand.u32 %v836, 2147483648
    %v868 = vor.u32 1.1754944e-38, %v867
    %v869 = vsel %vm866, %v868, %v864
    %v870 = vmul.f32 1.0, %v869
    %v871 = vrcp.pop %v837
    %v872 = vmul.f32 %v837, %v871
    %v873 = vsub.f32 1.0, %v872
    %v874 = vmul.f32 %v871, %v873
    %v875 = vadd.f32 %v871, %v874
    %vm876 = vweird.f32 %v837
    %vm877 = vweird.f32 %v871
    %vm878 = vmor %vm876, %vm877
    %v879 = vsel %vm878, %v871, %v875
    %v880 = vand.u32 2147483647, %v837
    %vm881 = vcmp.eq.f32.partialorder %v880, 8.507059e+37
    %v882 = vand.u32 %v837, 2147483648
    %v883 = vor.u32 1.1754944e-38, %v882
    %v884 = vsel %vm881, %v883, %v879
    %v885 = vmul.f32 1.0, %v884
    %v886 = vrcp.pop %v838
    %v887 = vmul.f32 %v838, %v886
    %v888 = vsub.f32 1.0, %v887
    %v889 = vmul.f32 %v886, %v888
    %v890 = vadd.f32 %v886, %v889
    %vm891 = vweird.f32 %v838
    %vm892 = vweird.f32 %v886
    %vm893 = vmor %vm891, %vm892
    %v894 = vsel %vm893, %v886, %v890
    %v895 = vand.u32 2147483647, %v838
    %vm896 = vcmp.eq.f32.partialorder %v895, 8.507059e+37
    %v897 = vand.u32 %v838, 2147483648
    %v898 = vor.u32 1.1754944e-38, %v897
    %v899 = vsel %vm896, %v898, %v894
    %v900 = vmul.f32 1.0, %v899
    %v901 = vrcp.pop %v839
    %v902 = vmul.f32 %v839, %v901
    %v903 = vsub.f32 1.0, %v902
    %v904 = vmul.f32 %v901, %v903
    %v905 = vadd.f32 %v901, %v904
    %vm906 = vweird.f32 %v839
    %vm907 = vweird.f32 %v901
    %vm908 = vmor %vm906, %vm907
    %v909 = vsel %vm908, %v901, %v905
    %v910 = vand.u32 2147483647, %v839
    %vm911 = vcmp.eq.f32.partialorder %v910, 8.507059e+37
    %v912 = vand.u32 %v839, 2147483648
    %v913 = vor.u32 1.1754944e-38, %v912
    %v914 = vsel %vm911, %v913, %v909
    %v915 = vmul.f32 1.0, %v914
    %v916 = vrcp.pop %v840
    %v917 = vmul.f32 %v840, %v916
    %v918 = vsub.f32 1.0, %v917
    %v919 = vmul.f32 %v916, %v918
    %v920 = vadd.f32 %v916, %v919
    %vm921 = vweird.f32 %v840
    %vm922 = vweird.f32 %v916
    %vm923 = vmor %vm921, %vm922
    %v924 = vsel %vm923, %v916, %v920
    %v925 = vand.u32 2147483647, %v840
    %vm926 = vcmp.eq.f32.partialorder %v925, 8.507059e+37
    %v927 = vand.u32 %v840, 2147483648
    %v928 = vor.u32 1.1754944e-38, %v927
    %v929 = vsel %vm926, %v928, %v924
    %v930 = vmul.f32 1.0, %v929
    %v931 = vtanh.pop %v815
    %v932 = vtanh.pop %v816
    %v933 = vmul.f32 %v885, 0.0
    %v934 = vmul.f32 %v900, 0.0
    %v935 = vmul.f32 %v855, %v931
    %v936 = vmul.f32 %v870, %v932
    %v937 = vadd.f32 %v933, %v935
    %v938 = vadd.f32 %v934, %v936
    %v939 = vtanh.pop %v937
    %v940 = vtanh.pop %v938
    %v941 = vmul.f32 %v915, %v939
    %v942 = vmul.f32 %v930, %v940
    %943 = vst [vmem:[#allocation2] sm:$0x3] %v941
    %s944 = scalar_lea.vmem [#allocation3], 14
    %945 = vst [vmem:[%s944] sm:$0x3] %v942
    %946 = vmatpush.msra.mxu0 %v353
    %947 = vmatpush.msra.mxu0 %v345
    %948 = vmatpush.msra.mxu0 %v337
    %949 = vmatpush.msra.mxu0 %v329
    %950 = vmatpush.msra.mxu0 %v321
    %951 = vmatpush.msra.mxu0 %v313
    %952 = vmatpush.msra.mxu0 %v305
    %953 = vmatpush.msra.mxu0 %v297
    %954 = vmatpush.msra.mxu0 %v289
    %955 = vmatpush.msra.mxu0 %v281
    %956 = vmatpush.msra.mxu0 %v273
    %957 = vmatpush.msra.mxu0 %v265
    %958 = vmatpush.msra.mxu0 %v257
    %959 = vmatpush.msra.mxu0 %v249
    %960 = vmatpush.msra.mxu0 %v241
    %961 = vmatpush.msra.mxu0 %v233
    %962 = vmatmul.f32.gmra.mxu0 %v941
    %v963 = vpop.f32.mrf.mxu0
    %v964 = vadd.f32 0.0, %v963
    %965 = vdwg.mxu0
    %966 = vmatpush.msra.mxu0 %v481
    %967 = vmatpush.msra.mxu0 %v473
    %968 = vmatpush.msra.mxu0 %v465
    %969 = vmatpush.msra.mxu0 %v457
    %970 = vmatpush.msra.mxu0 %v449
    %971 = vmatpush.msra.mxu0 %v441
    %972 = vmatpush.msra.mxu0 %v433
    %973 = vmatpush.msra.mxu0 %v425
    %974 = vmatpush.msra.mxu0 %v417
    %975 = vmatpush.msra.mxu0 %v409
    %976 = vmatpush.msra.mxu0 %v401
    %977 = vmatpush.msra.mxu0 %v393
    %978 = vmatpush.msra.mxu0 %v385
    %979 = vmatpush.msra.mxu0 %v377
    %980 = vmatpush.msra.mxu0 %v369
    %981 = vmatpush.msra.mxu0 %v361
    %982 = vmatmul.f32.gmra.mxu0 %v942
    %v983 = vpop.f32.mrf.mxu0
    %v984 = vadd.f32 %v964, %v983
    %985 = vdwg.mxu0
    %986 = vmatpush.msra.mxu0 %v354
    %987 = vmatpush.msra.mxu0 %v346
    %988 = vmatpush.msra.mxu0 %v338
    %989 = vmatpush.msra.mxu0 %v330
    %990 = vmatpush.msra.mxu0 %v322
    %991 = vmatpush.msra.mxu0 %v314
    %992 = vmatpush.msra.mxu0 %v306
    %993 = vmatpush.msra.mxu0 %v298
    %994 = vmatpush.msra.mxu0 %v290
    %995 = vmatpush.msra.mxu0 %v282
    %996 = vmatpush.msra.mxu0 %v274
    %997 = vmatpush.msra.mxu0 %v266
    %998 = vmatpush.msra.mxu0 %v258
    %999 = vmatpush.msra.mxu0 %v250
    %1000 = vmatpush.msra.mxu0 %v242
    %1001 = vmatpush.msra.mxu0 %v234
    %1002 = vmatmul.f32.gmra.mxu0 %v941
    %v1003 = vpop.f32.mrf.mxu0
    %v1004 = vadd.f32 0.0, %v1003
    %1005 = vdwg.mxu0
    %1006 = vmatpush.msra.mxu0 %v482
    %1007 = vmatpush.msra.mxu0 %v474
    %1008 = vmatpush.msra.mxu0 %v466
    %1009 = vmatpush.msra.mxu0 %v458
    %1010 = vmatpush.msra.mxu0 %v450
    %1011 = vmatpush.msra.mxu0 %v442
    %1012 = vmatpush.msra.mxu0 %v434
    %1013 = vmatpush.msra.mxu0 %v426
    %1014 = vmatpush.msra.mxu0 %v418
    %1015 = vmatpush.msra.mxu0 %v410
    %1016 = vmatpush.msra.mxu0 %v402
    %1017 = vmatpush.msra.mxu0 %v394
    %1018 = vmatpush.msra.mxu0 %v386
    %1019 = vmatpush.msra.mxu0 %v378
    %1020 = vmatpush.msra.mxu0 %v370
    %1021 = vmatpush.msra.mxu0 %v362
    %1022 = vmatmul.f32.gmra.mxu0 %v942
    %v1023 = vpop.f32.mrf.mxu0
    %v1024 = vadd.f32 %v1004, %v1023
    %1025 = vdwg.mxu0
    %1026 = vmatpush.msra.mxu0 %v355
    %1027 = vmatpush.msra.mxu0 %v347
    %1028 = vmatpush.msra.mxu0 %v339
    %1029 = vmatpush.msra.mxu0 %v331
    %1030 = vmatpush.msra.mxu0 %v323
    %1031 = vmatpush.msra.mxu0 %v315
    %1032 = vmatpush.msra.mxu0 %v307
    %1033 = vmatpush.msra.mxu0 %v299
    %1034 = vmatpush.msra.mxu0 %v291
    %1035 = vmatpush.msra.mxu0 %v283
    %1036 = vmatpush.msra.mxu0 %v275
    %1037 = vmatpush.msra.mxu0 %v267
    %1038 = vmatpush.msra.mxu0 %v259
    %1039 = vmatpush.msra.mxu0 %v251
    %1040 = vmatpush.msra.mxu0 %v243
    %1041 = vmatpush.msra.mxu0 %v235
    %1042 = vmatmul.f32.gmra.mxu0 %v941
    %v1043 = vpop.f32.mrf.mxu0
    %v1044 = vadd.f32 0.0, %v1043
    %1045 = vdwg.mxu0
    %1046 = vmatpush.msra.mxu0 %v483
    %1047 = vmatpush.msra.mxu0 %v475
    %1048 = vmatpush.msra.mxu0 %v467
    %1049 = vmatpush.msra.mxu0 %v459
    %1050 = vmatpush.msra.mxu0 %v451
    %1051 = vmatpush.msra.mxu0 %v443
    %1052 = vmatpush.msra.mxu0 %v435
    %1053 = vmatpush.msra.mxu0 %v427
    %1054 = vmatpush.msra.mxu0 %v419
    %1055 = vmatpush.msra.mxu0 %v411
    %1056 = vmatpush.msra.mxu0 %v403
    %1057 = vmatpush.msra.mxu0 %v395
    %1058 = vmatpush.msra.mxu0 %v387
    %1059 = vmatpush.msra.mxu0 %v379
    %1060 = vmatpush.msra.mxu0 %v371
    %1061 = vmatpush.msra.mxu0 %v363
    %1062 = vmatmul.f32.gmra.mxu0 %v942
    %v1063 = vpop.f32.mrf.mxu0
    %v1064 = vadd.f32 %v1044, %v1063
    %1065 = vdwg.mxu0
    %1066 = vmatpush.msra.mxu0 %v356
    %1067 = vmatpush.msra.mxu0 %v348
    %1068 = vmatpush.msra.mxu0 %v340
    %1069 = vmatpush.msra.mxu0 %v332
    %1070 = vmatpush.msra.mxu0 %v324
    %1071 = vmatpush.msra.mxu0 %v316
    %1072 = vmatpush.msra.mxu0 %v308
    %1073 = vmatpush.msra.mxu0 %v300
    %1074 = vmatpush.msra.mxu0 %v292
    %1075 = vmatpush.msra.mxu0 %v284
    %1076 = vmatpush.msra.mxu0 %v276
    %1077 = vmatpush.msra.mxu0 %v268
    %1078 = vmatpush.msra.mxu0 %v260
    %1079 = vmatpush.msra.mxu0 %v252
    %1080 = vmatpush.msra.mxu0 %v244
    %1081 = vmatpush.msra.mxu0 %v236
    %1082 = vmatmul.f32.gmra.mxu0 %v941
    %v1083 = vpop.f32.mrf.mxu0
    %v1084 = vadd.f32 0.0, %v1083
    %1085 = vdwg.mxu0
    %1086 = vmatpush.msra.mxu0 %v484
    %1087 = vmatpush.msra.mxu0 %v476
    %1088 = vmatpush.msra.mxu0 %v468
    %1089 = vmatpush.msra.mxu0 %v460
    %1090 = vmatpush.msra.mxu0 %v452
    %1091 = vmatpush.msra.mxu0 %v444
    %1092 = vmatpush.msra.mxu0 %v436
    %1093 = vmatpush.msra.mxu0 %v428
    %1094 = vmatpush.msra.mxu0 %v420
    %1095 = vmatpush.msra.mxu0 %v412
    %1096 = vmatpush.msra.mxu0 %v404
    %1097 = vmatpush.msra.mxu0 %v396
    %1098 = vmatpush.msra.mxu0 %v388
    %1099 = vmatpush.msra.mxu0 %v380
    %1100 = vmatpush.msra.mxu0 %v372
    %1101 = vmatpush.msra.mxu0 %v364
    %1102 = vmatmul.f32.gmra.mxu0 %v942
    %v1103 = vpop.f32.mrf.mxu0
    %v1104 = vadd.f32 %v1084, %v1103
    %1105 = vdwg.mxu0
    %1106 = vmatpush.msra.mxu0 %v357
    %1107 = vmatpush.msra.mxu0 %v349
    %1108 = vmatpush.msra.mxu0 %v341
    %1109 = vmatpush.msra.mxu0 %v333
    %1110 = vmatpush.msra.mxu0 %v325
    %1111 = vmatpush.msra.mxu0 %v317
    %1112 = vmatpush.msra.mxu0 %v309
    %1113 = vmatpush.msra.mxu0 %v301
    %1114 = vmatpush.msra.mxu0 %v293
    %1115 = vmatpush.msra.mxu0 %v285
    %1116 = vmatpush.msra.mxu0 %v277
    %1117 = vmatpush.msra.mxu0 %v269
    %1118 = vmatpush.msra.mxu0 %v261
    %1119 = vmatpush.msra.mxu0 %v253
    %1120 = vmatpush.msra.mxu0 %v245
    %1121 = vmatpush.msra.mxu0 %v237
    %1122 = vmatmul.f32.gmra.mxu0 %v941
    %v1123 = vpop.f32.mrf.mxu0
    %v1124 = vadd.f32 0.0, %v1123
    %1125 = vdwg.mxu0
    %1126 = vmatpush.msra.mxu0 %v485
    %1127 = vmatpush.msra.mxu0 %v477
    %1128 = vmatpush.msra.mxu0 %v469
    %1129 = vmatpush.msra.mxu0 %v461
    %1130 = vmatpush.msra.mxu0 %v453
    %1131 = vmatpush.msra.mxu0 %v445
    %1132 = vmatpush.msra.mxu0 %v437
    %1133 = vmatpush.msra.mxu0 %v429
    %1134 = vmatpush.msra.mxu0 %v421
    %1135 = vmatpush.msra.mxu0 %v413
    %1136 = vmatpush.msra.mxu0 %v405
    %1137 = vmatpush.msra.mxu0 %v397
    %1138 = vmatpush.msra.mxu0 %v389
    %1139 = vmatpush.msra.mxu0 %v381
    %1140 = vmatpush.msra.mxu0 %v373
    %1141 = vmatpush.msra.mxu0 %v365
    %1142 = vmatmul.f32.gmra.mxu0 %v942
    %v1143 = vpop.f32.mrf.mxu0
    %v1144 = vadd.f32 %v1124, %v1143
    %1145 = vdwg.mxu0
    %1146 = vmatpush.msra.mxu0 %v358
    %1147 = vmatpush.msra.mxu0 %v350
    %1148 = vmatpush.msra.mxu0 %v342
    %1149 = vmatpush.msra.mxu0 %v334
    %1150 = vmatpush.msra.mxu0 %v326
    %1151 = vmatpush.msra.mxu0 %v318
    %1152 = vmatpush.msra.mxu0 %v310
    %1153 = vmatpush.msra.mxu0 %v302
    %1154 = vmatpush.msra.mxu0 %v294
    %1155 = vmatpush.msra.mxu0 %v286
    %1156 = vmatpush.msra.mxu0 %v278
    %1157 = vmatpush.msra.mxu0 %v270
    %1158 = vmatpush.msra.mxu0 %v262
    %1159 = vmatpush.msra.mxu0 %v254
    %1160 = vmatpush.msra.mxu0 %v246
    %1161 = vmatpush.msra.mxu0 %v238
    %1162 = vmatmul.f32.gmra.mxu0 %v941
    %v1163 = vpop.f32.mrf.mxu0
    %v1164 = vadd.f32 0.0, %v1163
    %1165 = vdwg.mxu0
    %1166 = vmatpush.msra.mxu0 %v486
    %1167 = vmatpush.msra.mxu0 %v478
    %1168 = vmatpush.msra.mxu0 %v470
    %1169 = vmatpush.msra.mxu0 %v462
    %1170 = vmatpush.msra.mxu0 %v454
    %1171 = vmatpush.msra.mxu0 %v446
    %1172 = vmatpush.msra.mxu0 %v438
    %1173 = vmatpush.msra.mxu0 %v430
    %1174 = vmatpush.msra.mxu0 %v422
    %1175 = vmatpush.msra.mxu0 %v414
    %1176 = vmatpush.msra.mxu0 %v406
    %1177 = vmatpush.msra.mxu0 %v398
    %1178 = vmatpush.msra.mxu0 %v390
    %1179 = vmatpush.msra.mxu0 %v382
    %1180 = vmatpush.msra.mxu0 %v374
    %1181 = vmatpush.msra.mxu0 %v366
    %1182 = vmatmul.f32.gmra.mxu0 %v942
    %v1183 = vpop.f32.mrf.mxu0
    %v1184 = vadd.f32 %v1164, %v1183
    %1185 = vdwg.mxu0
    %1186 = vmatpush.msra.mxu0 %v359
    %1187 = vmatpush.msra.mxu0 %v351
    %1188 = vmatpush.msra.mxu0 %v343
    %1189 = vmatpush.msra.mxu0 %v335
    %1190 = vmatpush.msra.mxu0 %v327
    %1191 = vmatpush.msra.mxu0 %v319
    %1192 = vmatpush.msra.mxu0 %v311
    %1193 = vmatpush.msra.mxu0 %v303
    %1194 = vmatpush.msra.mxu0 %v295
    %1195 = vmatpush.msra.mxu0 %v287
    %1196 = vmatpush.msra.mxu0 %v279
    %1197 = vmatpush.msra.mxu0 %v271
    %1198 = vmatpush.msra.mxu0 %v263
    %1199 = vmatpush.msra.mxu0 %v255
    %1200 = vmatpush.msra.mxu0 %v247
    %1201 = vmatpush.msra.mxu0 %v239
    %1202 = vmatmul.f32.gmra.mxu0 %v941
    %v1203 = vpop.f32.mrf.mxu0
    %v1204 = vadd.f32 0.0, %v1203
    %1205 = vdwg.mxu0
    %1206 = vmatpush.msra.mxu0 %v487
    %1207 = vmatpush.msra.mxu0 %v479
    %1208 = vmatpush.msra.mxu0 %v471
    %1209 = vmatpush.msra.mxu0 %v463
    %1210 = vmatpush.msra.mxu0 %v455
    %1211 = vmatpush.msra.mxu0 %v447
    %1212 = vmatpush.msra.mxu0 %v439
    %1213 = vmatpush.msra.mxu0 %v431
    %1214 = vmatpush.msra.mxu0 %v423
    %1215 = vmatpush.msra.mxu0 %v415
    %1216 = vmatpush.msra.mxu0 %v407
    %1217 = vmatpush.msra.mxu0 %v399
    %1218 = vmatpush.msra.mxu0 %v391
    %1219 = vmatpush.msra.mxu0 %v383
    %1220 = vmatpush.msra.mxu0 %v375
    %1221 = vmatpush.msra.mxu0 %v367
    %1222 = vmatmul.f32.gmra.mxu0 %v942
    %v1223 = vpop.f32.mrf.mxu0
    %v1224 = vadd.f32 %v1204, %v1223
    %1225 = vdwg.mxu0
    %1226 = vmatpush.msra.mxu0 %v360
    %1227 = vmatpush.msra.mxu0 %v352
    %1228 = vmatpush.msra.mxu0 %v344
    %1229 = vmatpush.msra.mxu0 %v336
    %1230 = vmatpush.msra.mxu0 %v328
    %1231 = vmatpush.msra.mxu0 %v320
    %1232 = vmatpush.msra.mxu0 %v312
    %1233 = vmatpush.msra.mxu0 %v304
    %1234 = vmatpush.msra.mxu0 %v296
    %1235 = vmatpush.msra.mxu0 %v288
    %1236 = vmatpush.msra.mxu0 %v280
    %1237 = vmatpush.msra.mxu0 %v272
    %1238 = vmatpush.msra.mxu0 %v264
    %1239 = vmatpush.msra.mxu0 %v256
    %1240 = vmatpush.msra.mxu0 %v248
    %1241 = vmatpush.msra.mxu0 %v240
    %1242 = vmatmul.f32.gmra.mxu0 %v941
    %v1243 = vpop.f32.mrf.mxu0
    %v1244 = vadd.f32 0.0, %v1243
    %1245 = vdwg.mxu0
    %1246 = vmatpush.msra.mxu0 %v488
    %1247 = vmatpush.msra.mxu0 %v480
    %1248 = vmatpush.msra.mxu0 %v472
    %1249 = vmatpush.msra.mxu0 %v464
    %1250 = vmatpush.msra.mxu0 %v456
    %1251 = vmatpush.msra.mxu0 %v448
    %1252 = vmatpush.msra.mxu0 %v440
    %1253 = vmatpush.msra.mxu0 %v432
    %1254 = vmatpush.msra.mxu0 %v424
    %1255 = vmatpush.msra.mxu0 %v416
    %1256 = vmatpush.msra.mxu0 %v408
    %1257 = vmatpush.msra.mxu0 %v400
    %1258 = vmatpush.msra.mxu0 %v392
    %1259 = vmatpush.msra.mxu0 %v384
    %1260 = vmatpush.msra.mxu0 %v376
    %1261 = vmatpush.msra.mxu0 %v368
    %1262 = vmatmul.f32.gmra.mxu0 %v942
    %v1263 = vpop.f32.mrf.mxu0
    %v1264 = vadd.f32 %v1244, %v1263
    %1265 = vdwg.mxu0
    %v1266 = vadd.f32 %v91, %v984
    %v1267 = vadd.f32 %v111, %v1024
    %v1268 = vadd.f32 %v131, %v1064
    %v1269 = vadd.f32 %v151, %v1104
    %v1270 = vadd.f32 %v171, %v1144
    %v1271 = vadd.f32 %v191, %v1184
    %v1272 = vadd.f32 %v211, %v1224
    %v1273 = vadd.f32 %v231, %v1264
    %v1274 = vxor.u32 %v1266, 2147483648
    %v1275 = vxor.u32 %v1267, 2147483648
    %v1276 = vxor.u32 %v1268, 2147483648
    %v1277 = vxor.u32 %v1269, 2147483648
    %v1278 = vxor.u32 %v1270, 2147483648
    %v1279 = vxor.u32 %v1271, 2147483648
    %v1280 = vmul.f32 %v1274, 1.442695
    %v1281 = vpow.pop %v1280
    %v1282 = vmul.f32 %v1275, 1.442695
    %v1283 = vpow.pop %v1282
    %v1284 = vmul.f32 %v1276, 1.442695
    %v1285 = vpow.pop %v1284
    %v1286 = vmul.f32 %v1277, 1.442695
    %v1287 = vpow.pop %v1286
    %v1288 = vmul.f32 %v1278, 1.442695
    %v1289 = vpow.pop %v1288
    %v1290 = vmul.f32 %v1279, 1.442695
    %v1291 = vpow.pop %v1290
    %v1292 = vadd.f32 %v1281, 1.0
    %v1293 = vadd.f32 %v1283, 1.0
    %v1294 = vadd.f32 %v1285, 1.0
    %v1295 = vadd.f32 %v1287, 1.0
    %v1296 = vadd.f32 %v1289, 1.0
    %v1297 = vadd.f32 %v1291, 1.0
    %v1298 = vrcp.pop %v1292
    %v1299 = vmul.f32 %v1292, %v1298
    %v1300 = vsub.f32 1.0, %v1299
    %v1301 = vmul.f32 %v1298, %v1300
    %v1302 = vadd.f32 %v1298, %v1301
    %vm1303 = vweird.f32 %v1292
    %vm1304 = vweird.f32 %v1298
    %vm1305 = vmor %vm1303, %vm1304
    %v1306 = vsel %vm1305, %v1298, %v1302
    %v1307 = vand.u32 2147483647, %v1292
    %vm1308 = vcmp.eq.f32.partialorder %v1307, 8.507059e+37
    %v1309 = vand.u32 %v1292, 2147483648
    %v1310 = vor.u32 1.1754944e-38, %v1309
    %v1311 = vsel %vm1308, %v1310, %v1306
    %v1312 = vmul.f32 1.0, %v1311
    %v1313 = vrcp.pop %v1293
    %v1314 = vmul.f32 %v1293, %v1313
    %v1315 = vsub.f32 1.0, %v1314
    %v1316 = vmul.f32 %v1313, %v1315
    %v1317 = vadd.f32 %v1313, %v1316
    %vm1318 = vweird.f32 %v1293
    %vm1319 = vweird.f32 %v1313
    %vm1320 = vmor %vm1318, %vm1319
    %v1321 = vsel %vm1320, %v1313, %v1317
    %v1322 = vand.u32 2147483647, %v1293
    %vm1323 = vcmp.eq.f32.partialorder %v1322, 8.507059e+37
    %v1324 = vand.u32 %v1293, 2147483648
    %v1325 = vor.u32 1.1754944e-38, %v1324
    %v1326 = vsel %vm1323, %v1325, %v1321
    %v1327 = vmul.f32 1.0, %v1326
    %v1328 = vrcp.pop %v1294
    %v1329 = vmul.f32 %v1294, %v1328
    %v1330 = vsub.f32 1.0, %v1329
    %v1331 = vmul.f32 %v1328, %v1330
    %v1332 = vadd.f32 %v1328, %v1331
    %vm1333 = vweird.f32 %v1294
    %vm1334 = vweird.f32 %v1328
    %vm1335 = vmor %vm1333, %vm1334
    %v1336 = vsel %vm1335, %v1328, %v1332
    %v1337 = vand.u32 2147483647, %v1294
    %vm1338 = vcmp.eq.f32.partialorder %v1337, 8.507059e+37
    %v1339 = vand.u32 %v1294, 2147483648
    %v1340 = vor.u32 1.1754944e-38, %v1339
    %v1341 = vsel %vm1338, %v1340, %v1336
    %v1342 = vmul.f32 1.0, %v1341
    %v1343 = vrcp.pop %v1295
    %v1344 = vmul.f32 %v1295, %v1343
    %v1345 = vsub.f32 1.0, %v1344
    %v1346 = vmul.f32 %v1343, %v1345
    %v1347 = vadd.f32 %v1343, %v1346
    %vm1348 = vweird.f32 %v1295
    %vm1349 = vweird.f32 %v1343
    %vm1350 = vmor %vm1348, %vm1349
    %v1351 = vsel %vm1350, %v1343, %v1347
    %v1352 = vand.u32 2147483647, %v1295
    %vm1353 = vcmp.eq.f32.partialorder %v1352, 8.507059e+37
    %v1354 = vand.u32 %v1295, 2147483648
    %v1355 = vor.u32 1.1754944e-38, %v1354
    %v1356 = vsel %vm1353, %v1355, %v1351
    %v1357 = vmul.f32 1.0, %v1356
    %v1358 = vrcp.pop %v1296
    %v1359 = vmul.f32 %v1296, %v1358
    %v1360 = vsub.f32 1.0, %v1359
    %v1361 = vmul.f32 %v1358, %v1360
    %v1362 = vadd.f32 %v1358, %v1361
    %vm1363 = vweird.f32 %v1296
    %vm1364 = vweird.f32 %v1358
    %vm1365 = vmor %vm1363, %vm1364
    %v1366 = vsel %vm1365, %v1358, %v1362
    %v1367 = vand.u32 2147483647, %v1296
    %vm1368 = vcmp.eq.f32.partialorder %v1367, 8.507059e+37
    %v1369 = vand.u32 %v1296, 2147483648
    %v1370 = vor.u32 1.1754944e-38, %v1369
    %v1371 = vsel %vm1368, %v1370, %v1366
    %v1372 = vmul.f32 1.0, %v1371
    %v1373 = vrcp.pop %v1297
    %v1374 = vmul.f32 %v1297, %v1373
    %v1375 = vsub.f32 1.0, %v1374
    %v1376 = vmul.f32 %v1373, %v1375
    %v1377 = vadd.f32 %v1373, %v1376
    %vm1378 = vweird.f32 %v1297
    %vm1379 = vweird.f32 %v1373
    %vm1380 = vmor %vm1378, %vm1379
    %v1381 = vsel %vm1380, %v1373, %v1377
    %v1382 = vand.u32 2147483647, %v1297
    %vm1383 = vcmp.eq.f32.partialorder %v1382, 8.507059e+37
    %v1384 = vand.u32 %v1297, 2147483648
    %v1385 = vor.u32 1.1754944e-38, %v1384
    %v1386 = vsel %vm1383, %v1385, %v1381
    %v1387 = vmul.f32 1.0, %v1386
    %v1388 = vtanh.pop %v1272
    %v1389 = vtanh.pop %v1273
    %v1390 = vmul.f32 %v1342, %v937
    %v1391 = vmul.f32 %v1357, %v938
    %v1392 = vmul.f32 %v1312, %v1388
    %v1393 = vmul.f32 %v1327, %v1389
    %v1394 = vadd.f32 %v1390, %v1392
    %v1395 = vadd.f32 %v1391, %v1393
    %v1396 = vtanh.pop %v1394
    %v1397 = vtanh.pop %v1395
    %v1398 = vmul.f32 %v1372, %v1396
    %v1399 = vmul.f32 %v1387, %v1397
    %s1400 = scalar_lea.vmem [#allocation2], 2
    %1401 = vst [vmem:[%s1400] sm:$0x3] %v1398
    %s1402 = scalar_lea.vmem [#allocation3], 12
    %1403 = vst [vmem:[%s1402] sm:$0x3] %v1399
    %1404 = vmatpush.msra.mxu0 %v353
    %1405 = vmatpush.msra.mxu0 %v345
    %1406 = vmatpush.msra.mxu0 %v337
    %1407 = vmatpush.msra.mxu0 %v329
    %1408 = vmatpush.msra.mxu0 %v321
    %1409 = vmatpush.msra.mxu0 %v313
    %1410 = vmatpush.msra.mxu0 %v305
    %1411 = vmatpush.msra.mxu0 %v297
    %1412 = vmatpush.msra.mxu0 %v289
    %1413 = vmatpush.msra.mxu0 %v281
    %1414 = vmatpush.msra.mxu0 %v273
    %1415 = vmatpush.msra.mxu0 %v265
    %1416 = vmatpush.msra.mxu0 %v257
    %1417 = vmatpush.msra.mxu0 %v249
    %1418 = vmatpush.msra.mxu0 %v241
    %1419 = vmatpush.msra.mxu0 %v233
    %1420 = vmatmul.f32.gmra.mxu0 %v1398
    %v1421 = vpop.f32.mrf.mxu0
    %v1422 = vadd.f32 0.0, %v1421
    %1423 = vdwg.mxu0
    %1424 = vmatpush.msra.mxu0 %v481
    %1425 = vmatpush.msra.mxu0 %v473
    %1426 = vmatpush.msra.mxu0 %v465
    %1427 = vmatpush.msra.mxu0 %v457
    %1428 = vmatpush.msra.mxu0 %v449
    %1429 = vmatpush.msra.mxu0 %v441
    %1430 = vmatpush.msra.mxu0 %v433
    %1431 = vmatpush.msra.mxu0 %v425
    %1432 = vmatpush.msra.mxu0 %v417
    %1433 = vmatpush.msra.mxu0 %v409
    %1434 = vmatpush.msra.mxu0 %v401
    %1435 = vmatpush.msra.mxu0 %v393
    %1436 = vmatpush.msra.mxu0 %v385
    %1437 = vmatpush.msra.mxu0 %v377
    %1438 = vmatpush.msra.mxu0 %v369
    %1439 = vmatpush.msra.mxu0 %v361
    %1440 = vmatmul.f32.gmra.mxu0 %v1399
    %v1441 = vpop.f32.mrf.mxu0
    %v1442 = vadd.f32 %v1422, %v1441
    %1443 = vdwg.mxu0
    %1444 = vmatpush.msra.mxu0 %v354
    %1445 = vmatpush.msra.mxu0 %v346
    %1446 = vmatpush.msra.mxu0 %v338
    %1447 = vmatpush.msra.mxu0 %v330
    %1448 = vmatpush.msra.mxu0 %v322
    %1449 = vmatpush.msra.mxu0 %v314
    %1450 = vmatpush.msra.mxu0 %v306
    %1451 = vmatpush.msra.mxu0 %v298
    %1452 = vmatpush.msra.mxu0 %v290
    %1453 = vmatpush.msra.mxu0 %v282
    %1454 = vmatpush.msra.mxu0 %v274
    %1455 = vmatpush.msra.mxu0 %v266
    %1456 = vmatpush.msra.mxu0 %v258
    %1457 = vmatpush.msra.mxu0 %v250
    %1458 = vmatpush.msra.mxu0 %v242
    %1459 = vmatpush.msra.mxu0 %v234
    %1460 = vmatmul.f32.gmra.mxu0 %v1398
    %v1461 = vpop.f32.mrf.mxu0
    %v1462 = vadd.f32 0.0, %v1461
    %1463 = vdwg.mxu0
    %1464 = vmatpush.msra.mxu0 %v482
    %1465 = vmatpush.msra.mxu0 %v474
    %1466 = vmatpush.msra.mxu0 %v466
    %1467 = vmatpush.msra.mxu0 %v458
    %1468 = vmatpush.msra.mxu0 %v450
    %1469 = vmatpush.msra.mxu0 %v442
    %1470 = vmatpush.msra.mxu0 %v434
    %1471 = vmatpush.msra.mxu0 %v426
    %1472 = vmatpush.msra.mxu0 %v418
    %1473 = vmatpush.msra.mxu0 %v410
    %1474 = vmatpush.msra.mxu0 %v402
    %1475 = vmatpush.msra.mxu0 %v394
    %1476 = vmatpush.msra.mxu0 %v386
    %1477 = vmatpush.msra.mxu0 %v378
    %1478 = vmatpush.msra.mxu0 %v370
    %1479 = vmatpush.msra.mxu0 %v362
    %1480 = vmatmul.f32.gmra.mxu0 %v1399
    %v1481 = vpop.f32.mrf.mxu0
    %v1482 = vadd.f32 %v1462, %v1481
    %1483 = vdwg.mxu0
    %1484 = vmatpush.msra.mxu0 %v355
    %1485 = vmatpush.msra.mxu0 %v347
    %1486 = vmatpush.msra.mxu0 %v339
    %1487 = vmatpush.msra.mxu0 %v331
    %1488 = vmatpush.msra.mxu0 %v323
    %1489 = vmatpush.msra.mxu0 %v315
    %1490 = vmatpush.msra.mxu0 %v307
    %1491 = vmatpush.msra.mxu0 %v299
    %1492 = vmatpush.msra.mxu0 %v291
    %1493 = vmatpush.msra.mxu0 %v283
    %1494 = vmatpush.msra.mxu0 %v275
    %1495 = vmatpush.msra.mxu0 %v267
    %1496 = vmatpush.msra.mxu0 %v259
    %1497 = vmatpush.msra.mxu0 %v251
    %1498 = vmatpush.msra.mxu0 %v243
    %1499 = vmatpush.msra.mxu0 %v235
    %1500 = vmatmul.f32.gmra.mxu0 %v1398
    %v1501 = vpop.f32.mrf.mxu0
    %v1502 = vadd.f32 0.0, %v1501
    %1503 = vdwg.mxu0
    %1504 = vmatpush.msra.mxu0 %v483
    %1505 = vmatpush.msra.mxu0 %v475
    %1506 = vmatpush.msra.mxu0 %v467
    %1507 = vmatpush.msra.mxu0 %v459
    %1508 = vmatpush.msra.mxu0 %v451
    %1509 = vmatpush.msra.mxu0 %v443
    %1510 = vmatpush.msra.mxu0 %v435
    %1511 = vmatpush.msra.mxu0 %v427
    %1512 = vmatpush.msra.mxu0 %v419
    %1513 = vmatpush.msra.mxu0 %v411
    %1514 = vmatpush.msra.mxu0 %v403
    %1515 = vmatpush.msra.mxu0 %v395
    %1516 = vmatpush.msra.mxu0 %v387
    %1517 = vmatpush.msra.mxu0 %v379
    %1518 = vmatpush.msra.mxu0 %v371
    %1519 = vmatpush.msra.mxu0 %v363
    %1520 = vmatmul.f32.gmra.mxu0 %v1399
    %v1521 = vpop.f32.mrf.mxu0
    %v1522 = vadd.f32 %v1502, %v1521
    %1523 = vdwg.mxu0
    %1524 = vmatpush.msra.mxu0 %v356
    %1525 = vmatpush.msra.mxu0 %v348
    %1526 = vmatpush.msra.mxu0 %v340
    %1527 = vmatpush.msra.mxu0 %v332
    %1528 = vmatpush.msra.mxu0 %v324
    %1529 = vmatpush.msra.mxu0 %v316
    %1530 = vmatpush.msra.mxu0 %v308
    %1531 = vmatpush.msra.mxu0 %v300
    %1532 = vmatpush.msra.mxu0 %v292
    %1533 = vmatpush.msra.mxu0 %v284
    %1534 = vmatpush.msra.mxu0 %v276
    %1535 = vmatpush.msra.mxu0 %v268
    %1536 = vmatpush.msra.mxu0 %v260
    %1537 = vmatpush.msra.mxu0 %v252
    %1538 = vmatpush.msra.mxu0 %v244
    %1539 = vmatpush.msra.mxu0 %v236
    %1540 = vmatmul.f32.gmra.mxu0 %v1398
    %v1541 = vpop.f32.mrf.mxu0
    %v1542 = vadd.f32 0.0, %v1541
    %1543 = vdwg.mxu0
    %1544 = vmatpush.msra.mxu0 %v484
    %1545 = vmatpush.msra.mxu0 %v476
    %1546 = vmatpush.msra.mxu0 %v468
    %1547 = vmatpush.msra.mxu0 %v460
    %1548 = vmatpush.msra.mxu0 %v452
    %1549 = vmatpush.msra.mxu0 %v444
    %1550 = vmatpush.msra.mxu0 %v436
    %1551 = vmatpush.msra.mxu0 %v428
    %1552 = vmatpush.msra.mxu0 %v420
    %1553 = vmatpush.msra.mxu0 %v412
    %1554 = vmatpush.msra.mxu0 %v404
    %1555 = vmatpush.msra.mxu0 %v396
    %1556 = vmatpush.msra.mxu0 %v388
    %1557 = vmatpush.msra.mxu0 %v380
    %1558 = vmatpush.msra.mxu0 %v372
    %1559 = vmatpush.msra.mxu0 %v364
    %1560 = vmatmul.f32.gmra.mxu0 %v1399
    %v1561 = vpop.f32.mrf.mxu0
    %v1562 = vadd.f32 %v1542, %v1561
    %1563 = vdwg.mxu0
    %1564 = vmatpush.msra.mxu0 %v357
    %1565 = vmatpush.msra.mxu0 %v349
    %1566 = vmatpush.msra.mxu0 %v341
    %1567 = vmatpush.msra.mxu0 %v333
    %1568 = vmatpush.msra.mxu0 %v325
    %1569 = vmatpush.msra.mxu0 %v317
    %1570 = vmatpush.msra.mxu0 %v309
    %1571 = vmatpush.msra.mxu0 %v301
    %1572 = vmatpush.msra.mxu0 %v293
    %1573 = vmatpush.msra.mxu0 %v285
    %1574 = vmatpush.msra.mxu0 %v277
    %1575 = vmatpush.msra.mxu0 %v269
    %1576 = vmatpush.msra.mxu0 %v261
    %1577 = vmatpush.msra.mxu0 %v253
    %1578 = vmatpush.msra.mxu0 %v245
    %1579 = vmatpush.msra.mxu0 %v237
    %1580 = vmatmul.f32.gmra.mxu0 %v1398
    %v1581 = vpop.f32.mrf.mxu0
    %v1582 = vadd.f32 0.0, %v1581
    %1583 = vdwg.mxu0
    %1584 = vmatpush.msra.mxu0 %v485
    %1585 = vmatpush.msra.mxu0 %v477
    %1586 = vmatpush.msra.mxu0 %v469
    %1587 = vmatpush.msra.mxu0 %v461
    %1588 = vmatpush.msra.mxu0 %v453
    %1589 = vmatpush.msra.mxu0 %v445
    %1590 = vmatpush.msra.mxu0 %v437
    %1591 = vmatpush.msra.mxu0 %v429
    %1592 = vmatpush.msra.mxu0 %v421
    %1593 = vmatpush.msra.mxu0 %v413
    %1594 = vmatpush.msra.mxu0 %v405
    %1595 = vmatpush.msra.mxu0 %v397
    %1596 = vmatpush.msra.mxu0 %v389
    %1597 = vmatpush.msra.mxu0 %v381
    %1598 = vmatpush.msra.mxu0 %v373
    %1599 = vmatpush.msra.mxu0 %v365
    %1600 = vmatmul.f32.gmra.mxu0 %v1399
    %v1601 = vpop.f32.mrf.mxu0
    %v1602 = vadd.f32 %v1582, %v1601
    %1603 = vdwg.mxu0
    %1604 = vmatpush.msra.mxu0 %v358
    %1605 = vmatpush.msra.mxu0 %v350
    %1606 = vmatpush.msra.mxu0 %v342
    %1607 = vmatpush.msra.mxu0 %v334
    %1608 = vmatpush.msra.mxu0 %v326
    %1609 = vmatpush.msra.mxu0 %v318
    %1610 = vmatpush.msra.mxu0 %v310
    %1611 = vmatpush.msra.mxu0 %v302
    %1612 = vmatpush.msra.mxu0 %v294
    %1613 = vmatpush.msra.mxu0 %v286
    %1614 = vmatpush.msra.mxu0 %v278
    %1615 = vmatpush.msra.mxu0 %v270
    %1616 = vmatpush.msra.mxu0 %v262
    %1617 = vmatpush.msra.mxu0 %v254
    %1618 = vmatpush.msra.mxu0 %v246
    %1619 = vmatpush.msra.mxu0 %v238
    %1620 = vmatmul.f32.gmra.mxu0 %v1398
    %v1621 = vpop.f32.mrf.mxu0
    %v1622 = vadd.f32 0.0, %v1621
    %1623 = vdwg.mxu0
    %1624 = vmatpush.msra.mxu0 %v486
    %1625 = vmatpush.msra.mxu0 %v478
    %1626 = vmatpush.msra.mxu0 %v470
    %1627 = vmatpush.msra.mxu0 %v462
    %1628 = vmatpush.msra.mxu0 %v454
    %1629 = vmatpush.msra.mxu0 %v446
    %1630 = vmatpush.msra.mxu0 %v438
    %1631 = vmatpush.msra.mxu0 %v430
    %1632 = vmatpush.msra.mxu0 %v422
    %1633 = vmatpush.msra.mxu0 %v414
    %1634 = vmatpush.msra.mxu0 %v406
    %1635 = vmatpush.msra.mxu0 %v398
    %1636 = vmatpush.msra.mxu0 %v390
    %1637 = vmatpush.msra.mxu0 %v382
    %1638 = vmatpush.msra.mxu0 %v374
    %1639 = vmatpush.msra.mxu0 %v366
    %1640 = vmatmul.f32.gmra.mxu0 %v1399
    %v1641 = vpop.f32.mrf.mxu0
    %v1642 = vadd.f32 %v1622, %v1641
    %1643 = vdwg.mxu0
    %1644 = vmatpush.msra.mxu0 %v359
    %1645 = vmatpush.msra.mxu0 %v351
    %1646 = vmatpush.msra.mxu0 %v343
    %1647 = vmatpush.msra.mxu0 %v335
    %1648 = vmatpush.msra.mxu0 %v327
    %1649 = vmatpush.msra.mxu0 %v319
    %1650 = vmatpush.msra.mxu0 %v311
    %1651 = vmatpush.msra.mxu0 %v303
    %1652 = vmatpush.msra.mxu0 %v295
    %1653 = vmatpush.msra.mxu0 %v287
    %1654 = vmatpush.msra.mxu0 %v279
    %1655 = vmatpush.msra.mxu0 %v271
    %1656 = vmatpush.msra.mxu0 %v263
    %1657 = vmatpush.msra.mxu0 %v255
    %1658 = vmatpush.msra.mxu0 %v247
    %1659 = vmatpush.msra.mxu0 %v239
    %1660 = vmatmul.f32.gmra.mxu0 %v1398
    %v1661 = vpop.f32.mrf.mxu0
    %v1662 = vadd.f32 0.0, %v1661
    %1663 = vdwg.mxu0
    %1664 = vmatpush.msra.mxu0 %v487
    %1665 = vmatpush.msra.mxu0 %v479
    %1666 = vmatpush.msra.mxu0 %v471
    %1667 = vmatpush.msra.mxu0 %v463
    %1668 = vmatpush.msra.mxu0 %v455
    %1669 = vmatpush.msra.mxu0 %v447
    %1670 = vmatpush.msra.mxu0 %v439
    %1671 = vmatpush.msra.mxu0 %v431
    %1672 = vmatpush.msra.mxu0 %v423
    %1673 = vmatpush.msra.mxu0 %v415
    %1674 = vmatpush.msra.mxu0 %v407
    %1675 = vmatpush.msra.mxu0 %v399
    %1676 = vmatpush.msra.mxu0 %v391
    %1677 = vmatpush.msra.mxu0 %v383
    %1678 = vmatpush.msra.mxu0 %v375
    %1679 = vmatpush.msra.mxu0 %v367
    %1680 = vmatmul.f32.gmra.mxu0 %v1399
    %v1681 = vpop.f32.mrf.mxu0
    %v1682 = vadd.f32 %v1662, %v1681
    %1683 = vdwg.mxu0
    %1684 = vmatpush.msra.mxu0 %v360
    %1685 = vmatpush.msra.mxu0 %v352
    %1686 = vmatpush.msra.mxu0 %v344
    %1687 = vmatpush.msra.mxu0 %v336
    %1688 = vmatpush.msra.mxu0 %v328
    %1689 = vmatpush.msra.mxu0 %v320
    %1690 = vmatpush.msra.mxu0 %v312
    %1691 = vmatpush.msra.mxu0 %v304
    %1692 = vmatpush.msra.mxu0 %v296
    %1693 = vmatpush.msra.mxu0 %v288
    %1694 = vmatpush.msra.mxu0 %v280
    %1695 = vmatpush.msra.mxu0 %v272
    %1696 = vmatpush.msra.mxu0 %v264
    %1697 = vmatpush.msra.mxu0 %v256
    %1698 = vmatpush.msra.mxu0 %v248
    %1699 = vmatpush.msra.mxu0 %v240
    %1700 = vmatmul.f32.gmra.mxu0 %v1398
    %v1701 = vpop.f32.mrf.mxu0
    %v1702 = vadd.f32 0.0, %v1701
    %1703 = vdwg.mxu0
    %1704 = vmatpush.msra.mxu0 %v488
    %1705 = vmatpush.msra.mxu0 %v480
    %1706 = vmatpush.msra.mxu0 %v472
    %1707 = vmatpush.msra.mxu0 %v464
    %1708 = vmatpush.msra.mxu0 %v456
    %1709 = vmatpush.msra.mxu0 %v448
    %1710 = vmatpush.msra.mxu0 %v440
    %1711 = vmatpush.msra.mxu0 %v432
    %1712 = vmatpush.msra.mxu0 %v424
    %1713 = vmatpush.msra.mxu0 %v416
    %1714 = vmatpush.msra.mxu0 %v408
    %1715 = vmatpush.msra.mxu0 %v400
    %1716 = vmatpush.msra.mxu0 %v392
    %1717 = vmatpush.msra.mxu0 %v384
    %1718 = vmatpush.msra.mxu0 %v376
    %1719 = vmatpush.msra.mxu0 %v368
    %1720 = vmatmul.f32.gmra.mxu0 %v1399
    %v1721 = vpop.f32.mrf.mxu0
    %v1722 = vadd.f32 %v1702, %v1721
    %1723 = vdwg.mxu0
    %v1724 = vadd.f32 %v91, %v1442
    %v1725 = vadd.f32 %v111, %v1482
    %v1726 = vadd.f32 %v131, %v1522
    %v1727 = vadd.f32 %v151, %v1562
    %v1728 = vadd.f32 %v171, %v1602
    %v1729 = vadd.f32 %v191, %v1642
    %v1730 = vadd.f32 %v211, %v1682
    %v1731 = vadd.f32 %v231, %v1722
    %v1732 = vxor.u32 %v1724, 2147483648
    %v1733 = vxor.u32 %v1725, 2147483648
    %v1734 = vxor.u32 %v1726, 2147483648
    %v1735 = vxor.u32 %v1727, 2147483648
    %v1736 = vxor.u32 %v1728, 2147483648
    %v1737 = vxor.u32 %v1729, 2147483648
    %v1738 = vmul.f32 %v1732, 1.442695
    %v1739 = vpow.pop %v1738
    %v1740 = vmul.f32 %v1733, 1.442695
    %v1741 = vpow.pop %v1740
    %v1742 = vmul.f32 %v1734, 1.442695
    %v1743 = vpow.pop %v1742
    %v1744 = vmul.f32 %v1735, 1.442695
    %v1745 = vpow.pop %v1744
    %v1746 = vmul.f32 %v1736, 1.442695
    %v1747 = vpow.pop %v1746
    %v1748 = vmul.f32 %v1737, 1.442695
    %v1749 = vpow.pop %v1748
    %v1750 = vadd.f32 %v1739, 1.0
    %v1751 = vadd.f32 %v1741, 1.0
    %v1752 = vadd.f32 %v1743, 1.0
    %v1753 = vadd.f32 %v1745, 1.0
    %v1754 = vadd.f32 %v1747, 1.0
    %v1755 = vadd.f32 %v1749, 1.0
    %v1756 = vrcp.pop %v1750
    %v1757 = vmul.f32 %v1750, %v1756
    %v1758 = vsub.f32 1.0, %v1757
    %v1759 = vmul.f32 %v1756, %v1758
    %v1760 = vadd.f32 %v1756, %v1759
    %vm1761 = vweird.f32 %v1750
    %vm1762 = vweird.f32 %v1756
    %vm1763 = vmor %vm1761, %vm1762
    %v1764 = vsel %vm1763, %v1756, %v1760
    %v1765 = vand.u32 2147483647, %v1750
    %vm1766 = vcmp.eq.f32.partialorder %v1765, 8.507059e+37
    %v1767 = vand.u32 %v1750, 2147483648
    %v1768 = vor.u32 1.1754944e-38, %v1767
    %v1769 = vsel %vm1766, %v1768, %v1764
    %v1770 = vmul.f32 1.0, %v1769
    %v1771 = vrcp.pop %v1751
    %v1772 = vmul.f32 %v1751, %v1771
    %v1773 = vsub.f32 1.0, %v1772
    %v1774 = vmul.f32 %v1771, %v1773
    %v1775 = vadd.f32 %v1771, %v1774
    %vm1776 = vweird.f32 %v1751
    %vm1777 = vweird.f32 %v1771
    %vm1778 = vmor %vm1776, %vm1777
    %v1779 = vsel %vm1778, %v1771, %v1775
    %v1780 = vand.u32 2147483647, %v1751
    %vm1781 = vcmp.eq.f32.partialorder %v1780, 8.507059e+37
    %v1782 = vand.u32 %v1751, 2147483648
    %v1783 = vor.u32 1.1754944e-38, %v1782
    %v1784 = vsel %vm1781, %v1783, %v1779
    %v1785 = vmul.f32 1.0, %v1784
    %v1786 = vrcp.pop %v1752
    %v1787 = vmul.f32 %v1752, %v1786
    %v1788 = vsub.f32 1.0, %v1787
    %v1789 = vmul.f32 %v1786, %v1788
    %v1790 = vadd.f32 %v1786, %v1789
    %vm1791 = vweird.f32 %v1752
    %vm1792 = vweird.f32 %v1786
    %vm1793 = vmor %vm1791, %vm1792
    %v1794 = vsel %vm1793, %v1786, %v1790
    %v1795 = vand.u32 2147483647, %v1752
    %vm1796 = vcmp.eq.f32.partialorder %v1795, 8.507059e+37
    %v1797 = vand.u32 %v1752, 2147483648
    %v1798 = vor.u32 1.1754944e-38, %v1797
    %v1799 = vsel %vm1796, %v1798, %v1794
    %v1800 = vmul.f32 1.0, %v1799
    %v1801 = vrcp.pop %v1753
    %v1802 = vmul.f32 %v1753, %v1801
    %v1803 = vsub.f32 1.0, %v1802
    %v1804 = vmul.f32 %v1801, %v1803
    %v1805 = vadd.f32 %v1801, %v1804
    %vm1806 = vweird.f32 %v1753
    %vm1807 = vweird.f32 %v1801
    %vm1808 = vmor %vm1806, %vm1807
    %v1809 = vsel %vm1808, %v1801, %v1805
    %v1810 = vand.u32 2147483647, %v1753
    %vm1811 = vcmp.eq.f32.partialorder %v1810, 8.507059e+37
    %v1812 = vand.u32 %v1753, 2147483648
    %v1813 = vor.u32 1.1754944e-38, %v1812
    %v1814 = vsel %vm1811, %v1813, %v1809
    %v1815 = vmul.f32 1.0, %v1814
    %v1816 = vrcp.pop %v1754
    %v1817 = vmul.f32 %v1754, %v1816
    %v1818 = vsub.f32 1.0, %v1817
    %v1819 = vmul.f32 %v1816, %v1818
    %v1820 = vadd.f32 %v1816, %v1819
    %vm1821 = vweird.f32 %v1754
    %vm1822 = vweird.f32 %v1816
    %vm1823 = vmor %vm1821, %vm1822
    %v1824 = vsel %vm1823, %v1816, %v1820
    %v1825 = vand.u32 2147483647, %v1754
    %vm1826 = vcmp.eq.f32.partialorder %v1825, 8.507059e+37
    %v1827 = vand.u32 %v1754, 2147483648
    %v1828 = vor.u32 1.1754944e-38, %v1827
    %v1829 = vsel %vm1826, %v1828, %v1824
    %v1830 = vmul.f32 1.0, %v1829
    %v1831 = vrcp.pop %v1755
    %v1832 = vmul.f32 %v1755, %v1831
    %v1833 = vsub.f32 1.0, %v1832
    %v1834 = vmul.f32 %v1831, %v1833
    %v1835 = vadd.f32 %v1831, %v1834
    %vm1836 = vweird.f32 %v1755
    %vm1837 = vweird.f32 %v1831
    %vm1838 = vmor %vm1836, %vm1837
    %v1839 = vsel %vm1838, %v1831, %v1835
    %v1840 = vand.u32 2147483647, %v1755
    %vm1841 = vcmp.eq.f32.partialorder %v1840, 8.507059e+37
    %v1842 = vand.u32 %v1755, 2147483648
    %v1843 = vor.u32 1.1754944e-38, %v1842
    %v1844 = vsel %vm1841, %v1843, %v1839
    %v1845 = vmul.f32 1.0, %v1844
    %v1846 = vtanh.pop %v1730
    %v1847 = vtanh.pop %v1731
    %v1848 = vmul.f32 %v1800, %v1394
    %v1849 = vmul.f32 %v1815, %v1395
    %v1850 = vmul.f32 %v1770, %v1846
    %v1851 = vmul.f32 %v1785, %v1847
    %v1852 = vadd.f32 %v1848, %v1850
    %v1853 = vadd.f32 %v1849, %v1851
    %v1854 = vtanh.pop %v1852
    %v1855 = vtanh.pop %v1853
    %v1856 = vmul.f32 %v1830, %v1854
    %v1857 = vmul.f32 %v1845, %v1855
    %s1858 = scalar_lea.vmem [#allocation2], 4
    %1859 = vst [vmem:[%s1858] sm:$0x3] %v1856
    %s1860 = scalar_lea.vmem [#allocation3], 10
    %1861 = vst [vmem:[%s1860] sm:$0x3] %v1857
    %1862 = vmatpush.msra.mxu0 %v353
    %1863 = vmatpush.msra.mxu0 %v345
    %1864 = vmatpush.msra.mxu0 %v337
    %1865 = vmatpush.msra.mxu0 %v329
    %1866 = vmatpush.msra.mxu0 %v321
    %1867 = vmatpush.msra.mxu0 %v313
    %1868 = vmatpush.msra.mxu0 %v305
    %1869 = vmatpush.msra.mxu0 %v297
    %1870 = vmatpush.msra.mxu0 %v289
    %1871 = vmatpush.msra.mxu0 %v281
    %1872 = vmatpush.msra.mxu0 %v273
    %1873 = vmatpush.msra.mxu0 %v265
    %1874 = vmatpush.msra.mxu0 %v257
    %1875 = vmatpush.msra.mxu0 %v249
    %1876 = vmatpush.msra.mxu0 %v241
    %1877 = vmatpush.msra.mxu0 %v233
    %1878 = vmatmul.f32.gmra.mxu0 %v1856
    %v1879 = vpop.f32.mrf.mxu0
    %v1880 = vadd.f32 0.0, %v1879
    %1881 = vdwg.mxu0
    %1882 = vmatpush.msra.mxu0 %v481
    %1883 = vmatpush.msra.mxu0 %v473
    %1884 = vmatpush.msra.mxu0 %v465
    %1885 = vmatpush.msra.mxu0 %v457
    %1886 = vmatpush.msra.mxu0 %v449
    %1887 = vmatpush.msra.mxu0 %v441
    %1888 = vmatpush.msra.mxu0 %v433
    %1889 = vmatpush.msra.mxu0 %v425
    %1890 = vmatpush.msra.mxu0 %v417
    %1891 = vmatpush.msra.mxu0 %v409
    %1892 = vmatpush.msra.mxu0 %v401
    %1893 = vmatpush.msra.mxu0 %v393
    %1894 = vmatpush.msra.mxu0 %v385
    %1895 = vmatpush.msra.mxu0 %v377
    %1896 = vmatpush.msra.mxu0 %v369
    %1897 = vmatpush.msra.mxu0 %v361
    %1898 = vmatmul.f32.gmra.mxu0 %v1857
    %v1899 = vpop.f32.mrf.mxu0
    %v1900 = vadd.f32 %v1880, %v1899
    %1901 = vdwg.mxu0
    %1902 = vmatpush.msra.mxu0 %v354
    %1903 = vmatpush.msra.mxu0 %v346
    %1904 = vmatpush.msra.mxu0 %v338
    %1905 = vmatpush.msra.mxu0 %v330
    %1906 = vmatpush.msra.mxu0 %v322
    %1907 = vmatpush.msra.mxu0 %v314
    %1908 = vmatpush.msra.mxu0 %v306
    %1909 = vmatpush.msra.mxu0 %v298
    %1910 = vmatpush.msra.mxu0 %v290
    %1911 = vmatpush.msra.mxu0 %v282
    %1912 = vmatpush.msra.mxu0 %v274
    %1913 = vmatpush.msra.mxu0 %v266
    %1914 = vmatpush.msra.mxu0 %v258
    %1915 = vmatpush.msra.mxu0 %v250
    %1916 = vmatpush.msra.mxu0 %v242
    %1917 = vmatpush.msra.mxu0 %v234
    %1918 = vmatmul.f32.gmra.mxu0 %v1856
    %v1919 = vpop.f32.mrf.mxu0
    %v1920 = vadd.f32 0.0, %v1919
    %1921 = vdwg.mxu0
    %1922 = vmatpush.msra.mxu0 %v482
    %1923 = vmatpush.msra.mxu0 %v474
    %1924 = vmatpush.msra.mxu0 %v466
    %1925 = vmatpush.msra.mxu0 %v458
    %1926 = vmatpush.msra.mxu0 %v450
    %1927 = vmatpush.msra.mxu0 %v442
    %1928 = vmatpush.msra.mxu0 %v434
    %1929 = vmatpush.msra.mxu0 %v426
    %1930 = vmatpush.msra.mxu0 %v418
    %1931 = vmatpush.msra.mxu0 %v410
    %1932 = vmatpush.msra.mxu0 %v402
    %1933 = vmatpush.msra.mxu0 %v394
    %1934 = vmatpush.msra.mxu0 %v386
    %1935 = vmatpush.msra.mxu0 %v378
    %1936 = vmatpush.msra.mxu0 %v370
    %1937 = vmatpush.msra.mxu0 %v362
    %1938 = vmatmul.f32.gmra.mxu0 %v1857
    %v1939 = vpop.f32.mrf.mxu0
    %v1940 = vadd.f32 %v1920, %v1939
    %1941 = vdwg.mxu0
    %1942 = vmatpush.msra.mxu0 %v355
    %1943 = vmatpush.msra.mxu0 %v347
    %1944 = vmatpush.msra.mxu0 %v339
    %1945 = vmatpush.msra.mxu0 %v331
    %1946 = vmatpush.msra.mxu0 %v323
    %1947 = vmatpush.msra.mxu0 %v315
    %1948 = vmatpush.msra.mxu0 %v307
    %1949 = vmatpush.msra.mxu0 %v299
    %1950 = vmatpush.msra.mxu0 %v291
    %1951 = vmatpush.msra.mxu0 %v283
    %1952 = vmatpush.msra.mxu0 %v275
    %1953 = vmatpush.msra.mxu0 %v267
    %1954 = vmatpush.msra.mxu0 %v259
    %1955 = vmatpush.msra.mxu0 %v251
    %1956 = vmatpush.msra.mxu0 %v243
    %1957 = vmatpush.msra.mxu0 %v235
    %1958 = vmatmul.f32.gmra.mxu0 %v1856
    %v1959 = vpop.f32.mrf.mxu0
    %v1960 = vadd.f32 0.0, %v1959
    %1961 = vdwg.mxu0
    %1962 = vmatpush.msra.mxu0 %v483
    %1963 = vmatpush.msra.mxu0 %v475
    %1964 = vmatpush.msra.mxu0 %v467
    %1965 = vmatpush.msra.mxu0 %v459
    %1966 = vmatpush.msra.mxu0 %v451
    %1967 = vmatpush.msra.mxu0 %v443
    %1968 = vmatpush.msra.mxu0 %v435
    %1969 = vmatpush.msra.mxu0 %v427
    %1970 = vmatpush.msra.mxu0 %v419
    %1971 = vmatpush.msra.mxu0 %v411
    %1972 = vmatpush.msra.mxu0 %v403
    %1973 = vmatpush.msra.mxu0 %v395
    %1974 = vmatpush.msra.mxu0 %v387
    %1975 = vmatpush.msra.mxu0 %v379
    %1976 = vmatpush.msra.mxu0 %v371
    %1977 = vmatpush.msra.mxu0 %v363
    %1978 = vmatmul.f32.gmra.mxu0 %v1857
    %v1979 = vpop.f32.mrf.mxu0
    %v1980 = vadd.f32 %v1960, %v1979
    %1981 = vdwg.mxu0
    %1982 = vmatpush.msra.mxu0 %v356
    %1983 = vmatpush.msra.mxu0 %v348
    %1984 = vmatpush.msra.mxu0 %v340
    %1985 = vmatpush.msra.mxu0 %v332
    %1986 = vmatpush.msra.mxu0 %v324
    %1987 = vmatpush.msra.mxu0 %v316
    %1988 = vmatpush.msra.mxu0 %v308
    %1989 = vmatpush.msra.mxu0 %v300
    %1990 = vmatpush.msra.mxu0 %v292
    %1991 = vmatpush.msra.mxu0 %v284
    %1992 = vmatpush.msra.mxu0 %v276
    %1993 = vmatpush.msra.mxu0 %v268
    %1994 = vmatpush.msra.mxu0 %v260
    %1995 = vmatpush.msra.mxu0 %v252
    %1996 = vmatpush.msra.mxu0 %v244
    %1997 = vmatpush.msra.mxu0 %v236
    %1998 = vmatmul.f32.gmra.mxu0 %v1856
    %v1999 = vpop.f32.mrf.mxu0
    %v2000 = vadd.f32 0.0, %v1999
    %2001 = vdwg.mxu0
    %2002 = vmatpush.msra.mxu0 %v484
    %2003 = vmatpush.msra.mxu0 %v476
    %2004 = vmatpush.msra.mxu0 %v468
    %2005 = vmatpush.msra.mxu0 %v460
    %2006 = vmatpush.msra.mxu0 %v452
    %2007 = vmatpush.msra.mxu0 %v444
    %2008 = vmatpush.msra.mxu0 %v436
    %2009 = vmatpush.msra.mxu0 %v428
    %2010 = vmatpush.msra.mxu0 %v420
    %2011 = vmatpush.msra.mxu0 %v412
    %2012 = vmatpush.msra.mxu0 %v404
    %2013 = vmatpush.msra.mxu0 %v396
    %2014 = vmatpush.msra.mxu0 %v388
    %2015 = vmatpush.msra.mxu0 %v380
    %2016 = vmatpush.msra.mxu0 %v372
    %2017 = vmatpush.msra.mxu0 %v364
    %2018 = vmatmul.f32.gmra.mxu0 %v1857
    %v2019 = vpop.f32.mrf.mxu0
    %v2020 = vadd.f32 %v2000, %v2019
    %2021 = vdwg.mxu0
    %2022 = vmatpush.msra.mxu0 %v357
    %2023 = vmatpush.msra.mxu0 %v349
    %2024 = vmatpush.msra.mxu0 %v341
    %2025 = vmatpush.msra.mxu0 %v333
    %2026 = vmatpush.msra.mxu0 %v325
    %2027 = vmatpush.msra.mxu0 %v317
    %2028 = vmatpush.msra.mxu0 %v309
    %2029 = vmatpush.msra.mxu0 %v301
    %2030 = vmatpush.msra.mxu0 %v293
    %2031 = vmatpush.msra.mxu0 %v285
    %2032 = vmatpush.msra.mxu0 %v277
    %2033 = vmatpush.msra.mxu0 %v269
    %2034 = vmatpush.msra.mxu0 %v261
    %2035 = vmatpush.msra.mxu0 %v253
    %2036 = vmatpush.msra.mxu0 %v245
    %2037 = vmatpush.msra.mxu0 %v237
    %2038 = vmatmul.f32.gmra.mxu0 %v1856
    %v2039 = vpop.f32.mrf.mxu0
    %v2040 = vadd.f32 0.0, %v2039
    %2041 = vdwg.mxu0
    %2042 = vmatpush.msra.mxu0 %v485
    %2043 = vmatpush.msra.mxu0 %v477
    %2044 = vmatpush.msra.mxu0 %v469
    %2045 = vmatpush.msra.mxu0 %v461
    %2046 = vmatpush.msra.mxu0 %v453
    %2047 = vmatpush.msra.mxu0 %v445
    %2048 = vmatpush.msra.mxu0 %v437
    %2049 = vmatpush.msra.mxu0 %v429
    %2050 = vmatpush.msra.mxu0 %v421
    %2051 = vmatpush.msra.mxu0 %v413
    %2052 = vmatpush.msra.mxu0 %v405
    %2053 = vmatpush.msra.mxu0 %v397
    %2054 = vmatpush.msra.mxu0 %v389
    %2055 = vmatpush.msra.mxu0 %v381
    %2056 = vmatpush.msra.mxu0 %v373
    %2057 = vmatpush.msra.mxu0 %v365
    %2058 = vmatmul.f32.gmra.mxu0 %v1857
    %v2059 = vpop.f32.mrf.mxu0
    %v2060 = vadd.f32 %v2040, %v2059
    %2061 = vdwg.mxu0
    %2062 = vmatpush.msra.mxu0 %v358
    %2063 = vmatpush.msra.mxu0 %v350
    %2064 = vmatpush.msra.mxu0 %v342
    %2065 = vmatpush.msra.mxu0 %v334
    %2066 = vmatpush.msra.mxu0 %v326
    %2067 = vmatpush.msra.mxu0 %v318
    %2068 = vmatpush.msra.mxu0 %v310
    %2069 = vmatpush.msra.mxu0 %v302
    %2070 = vmatpush.msra.mxu0 %v294
    %2071 = vmatpush.msra.mxu0 %v286
    %2072 = vmatpush.msra.mxu0 %v278
    %2073 = vmatpush.msra.mxu0 %v270
    %2074 = vmatpush.msra.mxu0 %v262
    %2075 = vmatpush.msra.mxu0 %v254
    %2076 = vmatpush.msra.mxu0 %v246
    %2077 = vmatpush.msra.mxu0 %v238
    %2078 = vmatmul.f32.gmra.mxu0 %v1856
    %v2079 = vpop.f32.mrf.mxu0
    %v2080 = vadd.f32 0.0, %v2079
    %2081 = vdwg.mxu0
    %2082 = vmatpush.msra.mxu0 %v486
    %2083 = vmatpush.msra.mxu0 %v478
    %2084 = vmatpush.msra.mxu0 %v470
    %2085 = vmatpush.msra.mxu0 %v462
    %2086 = vmatpush.msra.mxu0 %v454
    %2087 = vmatpush.msra.mxu0 %v446
    %2088 = vmatpush.msra.mxu0 %v438
    %2089 = vmatpush.msra.mxu0 %v430
    %2090 = vmatpush.msra.mxu0 %v422
    %2091 = vmatpush.msra.mxu0 %v414
    %2092 = vmatpush.msra.mxu0 %v406
    %2093 = vmatpush.msra.mxu0 %v398
    %2094 = vmatpush.msra.mxu0 %v390
    %2095 = vmatpush.msra.mxu0 %v382
    %2096 = vmatpush.msra.mxu0 %v374
    %2097 = vmatpush.msra.mxu0 %v366
    %2098 = vmatmul.f32.gmra.mxu0 %v1857
    %v2099 = vpop.f32.mrf.mxu0
    %v2100 = vadd.f32 %v2080, %v2099
    %2101 = vdwg.mxu0
    %2102 = vmatpush.msra.mxu0 %v359
    %2103 = vmatpush.msra.mxu0 %v351
    %2104 = vmatpush.msra.mxu0 %v343
    %2105 = vmatpush.msra.mxu0 %v335
    %2106 = vmatpush.msra.mxu0 %v327
    %2107 = vmatpush.msra.mxu0 %v319
    %2108 = vmatpush.msra.mxu0 %v311
    %2109 = vmatpush.msra.mxu0 %v303
    %2110 = vmatpush.msra.mxu0 %v295
    %2111 = vmatpush.msra.mxu0 %v287
    %2112 = vmatpush.msra.mxu0 %v279
    %2113 = vmatpush.msra.mxu0 %v271
    %2114 = vmatpush.msra.mxu0 %v263
    %2115 = vmatpush.msra.mxu0 %v255
    %2116 = vmatpush.msra.mxu0 %v247
    %2117 = vmatpush.msra.mxu0 %v239
    %2118 = vmatmul.f32.gmra.mxu0 %v1856
    %v2119 = vpop.f32.mrf.mxu0
    %v2120 = vadd.f32 0.0, %v2119
    %2121 = vdwg.mxu0
    %2122 = vmatpush.msra.mxu0 %v487
    %2123 = vmatpush.msra.mxu0 %v479
    %2124 = vmatpush.msra.mxu0 %v471
    %2125 = vmatpush.msra.mxu0 %v463
    %2126 = vmatpush.msra.mxu0 %v455
    %2127 = vmatpush.msra.mxu0 %v447
    %2128 = vmatpush.msra.mxu0 %v439
    %2129 = vmatpush.msra.mxu0 %v431
    %2130 = vmatpush.msra.mxu0 %v423
    %2131 = vmatpush.msra.mxu0 %v415
    %2132 = vmatpush.msra.mxu0 %v407
    %2133 = vmatpush.msra.mxu0 %v399
    %2134 = vmatpush.msra.mxu0 %v391
    %2135 = vmatpush.msra.mxu0 %v383
    %2136 = vmatpush.msra.mxu0 %v375
    %2137 = vmatpush.msra.mxu0 %v367
    %2138 = vmatmul.f32.gmra.mxu0 %v1857
    %v2139 = vpop.f32.mrf.mxu0
    %v2140 = vadd.f32 %v2120, %v2139
    %2141 = vdwg.mxu0
    %2142 = vmatpush.msra.mxu0 %v360
    %2143 = vmatpush.msra.mxu0 %v352
    %2144 = vmatpush.msra.mxu0 %v344
    %2145 = vmatpush.msra.mxu0 %v336
    %2146 = vmatpush.msra.mxu0 %v328
    %2147 = vmatpush.msra.mxu0 %v320
    %2148 = vmatpush.msra.mxu0 %v312
    %2149 = vmatpush.msra.mxu0 %v304
    %2150 = vmatpush.msra.mxu0 %v296
    %2151 = vmatpush.msra.mxu0 %v288
    %2152 = vmatpush.msra.mxu0 %v280
    %2153 = vmatpush.msra.mxu0 %v272
    %2154 = vmatpush.msra.mxu0 %v264
    %2155 = vmatpush.msra.mxu0 %v256
    %2156 = vmatpush.msra.mxu0 %v248
    %2157 = vmatpush.msra.mxu0 %v240
    %2158 = vmatmul.f32.gmra.mxu0 %v1856
    %v2159 = vpop.f32.mrf.mxu0
    %v2160 = vadd.f32 0.0, %v2159
    %2161 = vdwg.mxu0
    %2162 = vmatpush.msra.mxu0 %v488
    %2163 = vmatpush.msra.mxu0 %v480
    %2164 = vmatpush.msra.mxu0 %v472
    %2165 = vmatpush.msra.mxu0 %v464
    %2166 = vmatpush.msra.mxu0 %v456
    %2167 = vmatpush.msra.mxu0 %v448
    %2168 = vmatpush.msra.mxu0 %v440
    %2169 = vmatpush.msra.mxu0 %v432
    %2170 = vmatpush.msra.mxu0 %v424
    %2171 = vmatpush.msra.mxu0 %v416
    %2172 = vmatpush.msra.mxu0 %v408
    %2173 = vmatpush.msra.mxu0 %v400
    %2174 = vmatpush.msra.mxu0 %v392
    %2175 = vmatpush.msra.mxu0 %v384
    %2176 = vmatpush.msra.mxu0 %v376
    %2177 = vmatpush.msra.mxu0 %v368
    %2178 = vmatmul.f32.gmra.mxu0 %v1857
    %v2179 = vpop.f32.mrf.mxu0
    %v2180 = vadd.f32 %v2160, %v2179
    %2181 = vdwg.mxu0
    %v2182 = vadd.f32 %v91, %v1900
    %v2183 = vadd.f32 %v111, %v1940
    %v2184 = vadd.f32 %v131, %v1980
    %v2185 = vadd.f32 %v151, %v2020
    %v2186 = vadd.f32 %v171, %v2060
    %v2187 = vadd.f32 %v191, %v2100
    %v2188 = vadd.f32 %v211, %v2140
    %v2189 = vadd.f32 %v231, %v2180
    %v2190 = vxor.u32 %v2182, 2147483648
    %v2191 = vxor.u32 %v2183, 2147483648
    %v2192 = vxor.u32 %v2184, 2147483648
    %v2193 = vxor.u32 %v2185, 2147483648
    %v2194 = vxor.u32 %v2186, 2147483648
    %v2195 = vxor.u32 %v2187, 2147483648
    %v2196 = vmul.f32 %v2190, 1.442695
    %v2197 = vpow.pop %v2196
    %v2198 = vmul.f32 %v2191, 1.442695
    %v2199 = vpow.pop %v2198
    %v2200 = vmul.f32 %v2192, 1.442695
    %v2201 = vpow.pop %v2200
    %v2202 = vmul.f32 %v2193, 1.442695
    %v2203 = vpow.pop %v2202
    %v2204 = vmul.f32 %v2194, 1.442695
    %v2205 = vpow.pop %v2204
    %v2206 = vmul.f32 %v2195, 1.442695
    %v2207 = vpow.pop %v2206
    %v2208 = vadd.f32 %v2197, 1.0
    %v2209 = vadd.f32 %v2199, 1.0
    %v2210 = vadd.f32 %v2201, 1.0
    %v2211 = vadd.f32 %v2203, 1.0
    %v2212 = vadd.f32 %v2205, 1.0
    %v2213 = vadd.f32 %v2207, 1.0
    %v2214 = vrcp.pop %v2208
    %v2215 = vmul.f32 %v2208, %v2214
    %v2216 = vsub.f32 1.0, %v2215
    %v2217 = vmul.f32 %v2214, %v2216
    %v2218 = vadd.f32 %v2214, %v2217
    %vm2219 = vweird.f32 %v2208
    %vm2220 = vweird.f32 %v2214
    %vm2221 = vmor %vm2219, %vm2220
    %v2222 = vsel %vm2221, %v2214, %v2218
    %v2223 = vand.u32 2147483647, %v2208
    %vm2224 = vcmp.eq.f32.partialorder %v2223, 8.507059e+37
    %v2225 = vand.u32 %v2208, 2147483648
    %v2226 = vor.u32 1.1754944e-38, %v2225
    %v2227 = vsel %vm2224, %v2226, %v2222
    %v2228 = vmul.f32 1.0, %v2227
    %v2229 = vrcp.pop %v2209
    %v2230 = vmul.f32 %v2209, %v2229
    %v2231 = vsub.f32 1.0, %v2230
    %v2232 = vmul.f32 %v2229, %v2231
    %v2233 = vadd.f32 %v2229, %v2232
    %vm2234 = vweird.f32 %v2209
    %vm2235 = vweird.f32 %v2229
    %vm2236 = vmor %vm2234, %vm2235
    %v2237 = vsel %vm2236, %v2229, %v2233
    %v2238 = vand.u32 2147483647, %v2209
    %vm2239 = vcmp.eq.f32.partialorder %v2238, 8.507059e+37
    %v2240 = vand.u32 %v2209, 2147483648
    %v2241 = vor.u32 1.1754944e-38, %v2240
    %v2242 = vsel %vm2239, %v2241, %v2237
    %v2243 = vmul.f32 1.0, %v2242
    %v2244 = vrcp.pop %v2210
    %v2245 = vmul.f32 %v2210, %v2244
    %v2246 = vsub.f32 1.0, %v2245
    %v2247 = vmul.f32 %v2244, %v2246
    %v2248 = vadd.f32 %v2244, %v2247
    %vm2249 = vweird.f32 %v2210
    %vm2250 = vweird.f32 %v2244
    %vm2251 = vmor %vm2249, %vm2250
    %v2252 = vsel %vm2251, %v2244, %v2248
    %v2253 = vand.u32 2147483647, %v2210
    %vm2254 = vcmp.eq.f32.partialorder %v2253, 8.507059e+37
    %v2255 = vand.u32 %v2210, 2147483648
    %v2256 = vor.u32 1.1754944e-38, %v2255
    %v2257 = vsel %vm2254, %v2256, %v2252
    %v2258 = vmul.f32 1.0, %v2257
    %v2259 = vrcp.pop %v2211
    %v2260 = vmul.f32 %v2211, %v2259
    %v2261 = vsub.f32 1.0, %v2260
    %v2262 = vmul.f32 %v2259, %v2261
    %v2263 = vadd.f32 %v2259, %v2262
    %vm2264 = vweird.f32 %v2211
    %vm2265 = vweird.f32 %v2259
    %vm2266 = vmor %vm2264, %vm2265
    %v2267 = vsel %vm2266, %v2259, %v2263
    %v2268 = vand.u32 2147483647, %v2211
    %vm2269 = vcmp.eq.f32.partialorder %v2268, 8.507059e+37
    %v2270 = vand.u32 %v2211, 2147483648
    %v2271 = vor.u32 1.1754944e-38, %v2270
    %v2272 = vsel %vm2269, %v2271, %v2267
    %v2273 = vmul.f32 1.0, %v2272
    %v2274 = vrcp.pop %v2212
    %v2275 = vmul.f32 %v2212, %v2274
    %v2276 = vsub.f32 1.0, %v2275
    %v2277 = vmul.f32 %v2274, %v2276
    %v2278 = vadd.f32 %v2274, %v2277
    %vm2279 = vweird.f32 %v2212
    %vm2280 = vweird.f32 %v2274
    %vm2281 = vmor %vm2279, %vm2280
    %v2282 = vsel %vm2281, %v2274, %v2278
    %v2283 = vand.u32 2147483647, %v2212
    %vm2284 = vcmp.eq.f32.partialorder %v2283, 8.507059e+37
    %v2285 = vand.u32 %v2212, 2147483648
    %v2286 = vor.u32 1.1754944e-38, %v2285
    %v2287 = vsel %vm2284, %v2286, %v2282
    %v2288 = vmul.f32 1.0, %v2287
    %v2289 = vrcp.pop %v2213
    %v2290 = vmul.f32 %v2213, %v2289
    %v2291 = vsub.f32 1.0, %v2290
    %v2292 = vmul.f32 %v2289, %v2291
    %v2293 = vadd.f32 %v2289, %v2292
    %vm2294 = vweird.f32 %v2213
    %vm2295 = vweird.f32 %v2289
    %vm2296 = vmor %vm2294, %vm2295
    %v2297 = vsel %vm2296, %v2289, %v2293
    %v2298 = vand.u32 2147483647, %v2213
    %vm2299 = vcmp.eq.f32.partialorder %v2298, 8.507059e+37
    %v2300 = vand.u32 %v2213, 2147483648
    %v2301 = vor.u32 1.1754944e-38, %v2300
    %v2302 = vsel %vm2299, %v2301, %v2297
    %v2303 = vmul.f32 1.0, %v2302
    %v2304 = vtanh.pop %v2188
    %v2305 = vtanh.pop %v2189
    %v2306 = vmul.f32 %v2258, %v1852
    %v2307 = vmul.f32 %v2273, %v1853
    %v2308 = vmul.f32 %v2228, %v2304
    %v2309 = vmul.f32 %v2243, %v2305
    %v2310 = vadd.f32 %v2306, %v2308
    %v2311 = vadd.f32 %v2307, %v2309
    %v2312 = vtanh.pop %v2310
    %v2313 = vtanh.pop %v2311
    %v2314 = vmul.f32 %v2288, %v2312
    %v2315 = vmul.f32 %v2303, %v2313
    %s2316 = scalar_lea.vmem [#allocation2], 6
    %2317 = vst [vmem:[%s2316] sm:$0x3] %v2314
    %s2318 = scalar_lea.vmem [#allocation3], 8
    %2319 = vst [vmem:[%s2318] sm:$0x3] %v2315
    %2320 = vmatpush.msra.mxu0 %v353
    %2321 = vmatpush.msra.mxu0 %v345
    %2322 = vmatpush.msra.mxu0 %v337
    %2323 = vmatpush.msra.mxu0 %v329
    %2324 = vmatpush.msra.mxu0 %v321
    %2325 = vmatpush.msra.mxu0 %v313
    %2326 = vmatpush.msra.mxu0 %v305
    %2327 = vmatpush.msra.mxu0 %v297
    %2328 = vmatpush.msra.mxu0 %v289
    %2329 = vmatpush.msra.mxu0 %v281
    %2330 = vmatpush.msra.mxu0 %v273
    %2331 = vmatpush.msra.mxu0 %v265
    %2332 = vmatpush.msra.mxu0 %v257
    %2333 = vmatpush.msra.mxu0 %v249
    %2334 = vmatpush.msra.mxu0 %v241
    %2335 = vmatpush.msra.mxu0 %v233
    %2336 = vmatmul.f32.gmra.mxu0 %v2314
    %v2337 = vpop.f32.mrf.mxu0
    %v2338 = vadd.f32 0.0, %v2337
    %2339 = vdwg.mxu0
    %2340 = vmatpush.msra.mxu0 %v481
    %2341 = vmatpush.msra.mxu0 %v473
    %2342 = vmatpush.msra.mxu0 %v465
    %2343 = vmatpush.msra.mxu0 %v457
    %2344 = vmatpush.msra.mxu0 %v449
    %2345 = vmatpush.msra.mxu0 %v441
    %2346 = vmatpush.msra.mxu0 %v433
    %2347 = vmatpush.msra.mxu0 %v425
    %2348 = vmatpush.msra.mxu0 %v417
    %2349 = vmatpush.msra.mxu0 %v409
    %2350 = vmatpush.msra.mxu0 %v401
    %2351 = vmatpush.msra.mxu0 %v393
    %2352 = vmatpush.msra.mxu0 %v385
    %2353 = vmatpush.msra.mxu0 %v377
    %2354 = vmatpush.msra.mxu0 %v369
    %2355 = vmatpush.msra.mxu0 %v361
    %2356 = vmatmul.f32.gmra.mxu0 %v2315
    %v2357 = vpop.f32.mrf.mxu0
    %v2358 = vadd.f32 %v2338, %v2357
    %2359 = vdwg.mxu0
    %2360 = vmatpush.msra.mxu0 %v354
    %2361 = vmatpush.msra.mxu0 %v346
    %2362 = vmatpush.msra.mxu0 %v338
    %2363 = vmatpush.msra.mxu0 %v330
    %2364 = vmatpush.msra.mxu0 %v322
    %2365 = vmatpush.msra.mxu0 %v314
    %2366 = vmatpush.msra.mxu0 %v306
    %2367 = vmatpush.msra.mxu0 %v298
    %2368 = vmatpush.msra.mxu0 %v290
    %2369 = vmatpush.msra.mxu0 %v282
    %2370 = vmatpush.msra.mxu0 %v274
    %2371 = vmatpush.msra.mxu0 %v266
    %2372 = vmatpush.msra.mxu0 %v258
    %2373 = vmatpush.msra.mxu0 %v250
    %2374 = vmatpush.msra.mxu0 %v242
    %2375 = vmatpush.msra.mxu0 %v234
    %2376 = vmatmul.f32.gmra.mxu0 %v2314
    %v2377 = vpop.f32.mrf.mxu0
    %v2378 = vadd.f32 0.0, %v2377
    %2379 = vdwg.mxu0
    %2380 = vmatpush.msra.mxu0 %v482
    %2381 = vmatpush.msra.mxu0 %v474
    %2382 = vmatpush.msra.mxu0 %v466
    %2383 = vmatpush.msra.mxu0 %v458
    %2384 = vmatpush.msra.mxu0 %v450
    %2385 = vmatpush.msra.mxu0 %v442
    %2386 = vmatpush.msra.mxu0 %v434
    %2387 = vmatpush.msra.mxu0 %v426
    %2388 = vmatpush.msra.mxu0 %v418
    %2389 = vmatpush.msra.mxu0 %v410
    %2390 = vmatpush.msra.mxu0 %v402
    %2391 = vmatpush.msra.mxu0 %v394
    %2392 = vmatpush.msra.mxu0 %v386
    %2393 = vmatpush.msra.mxu0 %v378
    %2394 = vmatpush.msra.mxu0 %v370
    %2395 = vmatpush.msra.mxu0 %v362
    %2396 = vmatmul.f32.gmra.mxu0 %v2315
    %v2397 = vpop.f32.mrf.mxu0
    %v2398 = vadd.f32 %v2378, %v2397
    %2399 = vdwg.mxu0
    %2400 = vmatpush.msra.mxu0 %v355
    %2401 = vmatpush.msra.mxu0 %v347
    %2402 = vmatpush.msra.mxu0 %v339
    %2403 = vmatpush.msra.mxu0 %v331
    %2404 = vmatpush.msra.mxu0 %v323
    %2405 = vmatpush.msra.mxu0 %v315
    %2406 = vmatpush.msra.mxu0 %v307
    %2407 = vmatpush.msra.mxu0 %v299
    %2408 = vmatpush.msra.mxu0 %v291
    %2409 = vmatpush.msra.mxu0 %v283
    %2410 = vmatpush.msra.mxu0 %v275
    %2411 = vmatpush.msra.mxu0 %v267
    %2412 = vmatpush.msra.mxu0 %v259
    %2413 = vmatpush.msra.mxu0 %v251
    %2414 = vmatpush.msra.mxu0 %v243
    %2415 = vmatpush.msra.mxu0 %v235
    %2416 = vmatmul.f32.gmra.mxu0 %v2314
    %v2417 = vpop.f32.mrf.mxu0
    %v2418 = vadd.f32 0.0, %v2417
    %2419 = vdwg.mxu0
    %2420 = vmatpush.msra.mxu0 %v483
    %2421 = vmatpush.msra.mxu0 %v475
    %2422 = vmatpush.msra.mxu0 %v467
    %2423 = vmatpush.msra.mxu0 %v459
    %2424 = vmatpush.msra.mxu0 %v451
    %2425 = vmatpush.msra.mxu0 %v443
    %2426 = vmatpush.msra.mxu0 %v435
    %2427 = vmatpush.msra.mxu0 %v427
    %2428 = vmatpush.msra.mxu0 %v419
    %2429 = vmatpush.msra.mxu0 %v411
    %2430 = vmatpush.msra.mxu0 %v403
    %2431 = vmatpush.msra.mxu0 %v395
    %2432 = vmatpush.msra.mxu0 %v387
    %2433 = vmatpush.msra.mxu0 %v379
    %2434 = vmatpush.msra.mxu0 %v371
    %2435 = vmatpush.msra.mxu0 %v363
    %2436 = vmatmul.f32.gmra.mxu0 %v2315
    %v2437 = vpop.f32.mrf.mxu0
    %v2438 = vadd.f32 %v2418, %v2437
    %2439 = vdwg.mxu0
    %2440 = vmatpush.msra.mxu0 %v356
    %2441 = vmatpush.msra.mxu0 %v348
    %2442 = vmatpush.msra.mxu0 %v340
    %2443 = vmatpush.msra.mxu0 %v332
    %2444 = vmatpush.msra.mxu0 %v324
    %2445 = vmatpush.msra.mxu0 %v316
    %2446 = vmatpush.msra.mxu0 %v308
    %2447 = vmatpush.msra.mxu0 %v300
    %2448 = vmatpush.msra.mxu0 %v292
    %2449 = vmatpush.msra.mxu0 %v284
    %2450 = vmatpush.msra.mxu0 %v276
    %2451 = vmatpush.msra.mxu0 %v268
    %2452 = vmatpush.msra.mxu0 %v260
    %2453 = vmatpush.msra.mxu0 %v252
    %2454 = vmatpush.msra.mxu0 %v244
    %2455 = vmatpush.msra.mxu0 %v236
    %2456 = vmatmul.f32.gmra.mxu0 %v2314
    %v2457 = vpop.f32.mrf.mxu0
    %v2458 = vadd.f32 0.0, %v2457
    %2459 = vdwg.mxu0
    %2460 = vmatpush.msra.mxu0 %v484
    %2461 = vmatpush.msra.mxu0 %v476
    %2462 = vmatpush.msra.mxu0 %v468
    %2463 = vmatpush.msra.mxu0 %v460
    %2464 = vmatpush.msra.mxu0 %v452
    %2465 = vmatpush.msra.mxu0 %v444
    %2466 = vmatpush.msra.mxu0 %v436
    %2467 = vmatpush.msra.mxu0 %v428
    %2468 = vmatpush.msra.mxu0 %v420
    %2469 = vmatpush.msra.mxu0 %v412
    %2470 = vmatpush.msra.mxu0 %v404
    %2471 = vmatpush.msra.mxu0 %v396
    %2472 = vmatpush.msra.mxu0 %v388
    %2473 = vmatpush.msra.mxu0 %v380
    %2474 = vmatpush.msra.mxu0 %v372
    %2475 = vmatpush.msra.mxu0 %v364
    %2476 = vmatmul.f32.gmra.mxu0 %v2315
    %v2477 = vpop.f32.mrf.mxu0
    %v2478 = vadd.f32 %v2458, %v2477
    %2479 = vdwg.mxu0
    %2480 = vmatpush.msra.mxu0 %v357
    %2481 = vmatpush.msra.mxu0 %v349
    %2482 = vmatpush.msra.mxu0 %v341
    %2483 = vmatpush.msra.mxu0 %v333
    %2484 = vmatpush.msra.mxu0 %v325
    %2485 = vmatpush.msra.mxu0 %v317
    %2486 = vmatpush.msra.mxu0 %v309
    %2487 = vmatpush.msra.mxu0 %v301
    %2488 = vmatpush.msra.mxu0 %v293
    %2489 = vmatpush.msra.mxu0 %v285
    %2490 = vmatpush.msra.mxu0 %v277
    %2491 = vmatpush.msra.mxu0 %v269
    %2492 = vmatpush.msra.mxu0 %v261
    %2493 = vmatpush.msra.mxu0 %v253
    %2494 = vmatpush.msra.mxu0 %v245
    %2495 = vmatpush.msra.mxu0 %v237
    %2496 = vmatmul.f32.gmra.mxu0 %v2314
    %v2497 = vpop.f32.mrf.mxu0
    %v2498 = vadd.f32 0.0, %v2497
    %2499 = vdwg.mxu0
    %2500 = vmatpush.msra.mxu0 %v485
    %2501 = vmatpush.msra.mxu0 %v477
    %2502 = vmatpush.msra.mxu0 %v469
    %2503 = vmatpush.msra.mxu0 %v461
    %2504 = vmatpush.msra.mxu0 %v453
    %2505 = vmatpush.msra.mxu0 %v445
    %2506 = vmatpush.msra.mxu0 %v437
    %2507 = vmatpush.msra.mxu0 %v429
    %2508 = vmatpush.msra.mxu0 %v421
    %2509 = vmatpush.msra.mxu0 %v413
    %2510 = vmatpush.msra.mxu0 %v405
    %2511 = vmatpush.msra.mxu0 %v397
    %2512 = vmatpush.msra.mxu0 %v389
    %2513 = vmatpush.msra.mxu0 %v381
    %2514 = vmatpush.msra.mxu0 %v373
    %2515 = vmatpush.msra.mxu0 %v365
    %2516 = vmatmul.f32.gmra.mxu0 %v2315
    %v2517 = vpop.f32.mrf.mxu0
    %v2518 = vadd.f32 %v2498, %v2517
    %2519 = vdwg.mxu0
    %2520 = vmatpush.msra.mxu0 %v358
    %2521 = vmatpush.msra.mxu0 %v350
    %2522 = vmatpush.msra.mxu0 %v342
    %2523 = vmatpush.msra.mxu0 %v334
    %2524 = vmatpush.msra.mxu0 %v326
    %2525 = vmatpush.msra.mxu0 %v318
    %2526 = vmatpush.msra.mxu0 %v310
    %2527 = vmatpush.msra.mxu0 %v302
    %2528 = vmatpush.msra.mxu0 %v294
    %2529 = vmatpush.msra.mxu0 %v286
    %2530 = vmatpush.msra.mxu0 %v278
    %2531 = vmatpush.msra.mxu0 %v270
    %2532 = vmatpush.msra.mxu0 %v262
    %2533 = vmatpush.msra.mxu0 %v254
    %2534 = vmatpush.msra.mxu0 %v246
    %2535 = vmatpush.msra.mxu0 %v238
    %2536 = vmatmul.f32.gmra.mxu0 %v2314
    %v2537 = vpop.f32.mrf.mxu0
    %v2538 = vadd.f32 0.0, %v2537
    %2539 = vdwg.mxu0
    %2540 = vmatpush.msra.mxu0 %v486
    %2541 = vmatpush.msra.mxu0 %v478
    %2542 = vmatpush.msra.mxu0 %v470
    %2543 = vmatpush.msra.mxu0 %v462
    %2544 = vmatpush.msra.mxu0 %v454
    %2545 = vmatpush.msra.mxu0 %v446
    %2546 = vmatpush.msra.mxu0 %v438
    %2547 = vmatpush.msra.mxu0 %v430
    %2548 = vmatpush.msra.mxu0 %v422
    %2549 = vmatpush.msra.mxu0 %v414
    %2550 = vmatpush.msra.mxu0 %v406
    %2551 = vmatpush.msra.mxu0 %v398
    %2552 = vmatpush.msra.mxu0 %v390
    %2553 = vmatpush.msra.mxu0 %v382
    %2554 = vmatpush.msra.mxu0 %v374
    %2555 = vmatpush.msra.mxu0 %v366
    %2556 = vmatmul.f32.gmra.mxu0 %v2315
    %v2557 = vpop.f32.mrf.mxu0
    %v2558 = vadd.f32 %v2538, %v2557
    %2559 = vdwg.mxu0
    %2560 = vmatpush.msra.mxu0 %v359
    %2561 = vmatpush.msra.mxu0 %v351
    %2562 = vmatpush.msra.mxu0 %v343
    %2563 = vmatpush.msra.mxu0 %v335
    %2564 = vmatpush.msra.mxu0 %v327
    %2565 = vmatpush.msra.mxu0 %v319
    %2566 = vmatpush.msra.mxu0 %v311
    %2567 = vmatpush.msra.mxu0 %v303
    %2568 = vmatpush.msra.mxu0 %v295
    %2569 = vmatpush.msra.mxu0 %v287
    %2570 = vmatpush.msra.mxu0 %v279
    %2571 = vmatpush.msra.mxu0 %v271
    %2572 = vmatpush.msra.mxu0 %v263
    %2573 = vmatpush.msra.mxu0 %v255
    %2574 = vmatpush.msra.mxu0 %v247
    %2575 = vmatpush.msra.mxu0 %v239
    %2576 = vmatmul.f32.gmra.mxu0 %v2314
    %v2577 = vpop.f32.mrf.mxu0
    %v2578 = vadd.f32 0.0, %v2577
    %2579 = vdwg.mxu0
    %2580 = vmatpush.msra.mxu0 %v487
    %2581 = vmatpush.msra.mxu0 %v479
    %2582 = vmatpush.msra.mxu0 %v471
    %2583 = vmatpush.msra.mxu0 %v463
    %2584 = vmatpush.msra.mxu0 %v455
    %2585 = vmatpush.msra.mxu0 %v447
    %2586 = vmatpush.msra.mxu0 %v439
    %2587 = vmatpush.msra.mxu0 %v431
    %2588 = vmatpush.msra.mxu0 %v423
    %2589 = vmatpush.msra.mxu0 %v415
    %2590 = vmatpush.msra.mxu0 %v407
    %2591 = vmatpush.msra.mxu0 %v399
    %2592 = vmatpush.msra.mxu0 %v391
    %2593 = vmatpush.msra.mxu0 %v383
    %2594 = vmatpush.msra.mxu0 %v375
    %2595 = vmatpush.msra.mxu0 %v367
    %2596 = vmatmul.f32.gmra.mxu0 %v2315
    %v2597 = vpop.f32.mrf.mxu0
    %v2598 = vadd.f32 %v2578, %v2597
    %2599 = vdwg.mxu0
    %2600 = vmatpush.msra.mxu0 %v360
    %2601 = vmatpush.msra.mxu0 %v352
    %2602 = vmatpush.msra.mxu0 %v344
    %2603 = vmatpush.msra.mxu0 %v336
    %2604 = vmatpush.msra.mxu0 %v328
    %2605 = vmatpush.msra.mxu0 %v320
    %2606 = vmatpush.msra.mxu0 %v312
    %2607 = vmatpush.msra.mxu0 %v304
    %2608 = vmatpush.msra.mxu0 %v296
    %2609 = vmatpush.msra.mxu0 %v288
    %2610 = vmatpush.msra.mxu0 %v280
    %2611 = vmatpush.msra.mxu0 %v272
    %2612 = vmatpush.msra.mxu0 %v264
    %2613 = vmatpush.msra.mxu0 %v256
    %2614 = vmatpush.msra.mxu0 %v248
    %2615 = vmatpush.msra.mxu0 %v240
    %2616 = vmatmul.f32.gmra.mxu0 %v2314
    %v2617 = vpop.f32.mrf.mxu0
    %v2618 = vadd.f32 0.0, %v2617
    %2619 = vdwg.mxu0
    %2620 = vmatpush.msra.mxu0 %v488
    %2621 = vmatpush.msra.mxu0 %v480
    %2622 = vmatpush.msra.mxu0 %v472
    %2623 = vmatpush.msra.mxu0 %v464
    %2624 = vmatpush.msra.mxu0 %v456
    %2625 = vmatpush.msra.mxu0 %v448
    %2626 = vmatpush.msra.mxu0 %v440
    %2627 = vmatpush.msra.mxu0 %v432
    %2628 = vmatpush.msra.mxu0 %v424
    %2629 = vmatpush.msra.mxu0 %v416
    %2630 = vmatpush.msra.mxu0 %v408
    %2631 = vmatpush.msra.mxu0 %v400
    %2632 = vmatpush.msra.mxu0 %v392
    %2633 = vmatpush.msra.mxu0 %v384
    %2634 = vmatpush.msra.mxu0 %v376
    %2635 = vmatpush.msra.mxu0 %v368
    %2636 = vmatmul.f32.gmra.mxu0 %v2315
    %v2637 = vpop.f32.mrf.mxu0
    %v2638 = vadd.f32 %v2618, %v2637
    %2639 = vdwg.mxu0
    %v2640 = vadd.f32 %v91, %v2358
    %v2641 = vadd.f32 %v111, %v2398
    %v2642 = vadd.f32 %v131, %v2438
    %v2643 = vadd.f32 %v151, %v2478
    %v2644 = vadd.f32 %v171, %v2518
    %v2645 = vadd.f32 %v191, %v2558
    %v2646 = vadd.f32 %v211, %v2598
    %v2647 = vadd.f32 %v231, %v2638
    %v2648 = vxor.u32 %v2640, 2147483648
    %v2649 = vxor.u32 %v2641, 2147483648
    %v2650 = vxor.u32 %v2642, 2147483648
    %v2651 = vxor.u32 %v2643, 2147483648
    %v2652 = vxor.u32 %v2644, 2147483648
    %v2653 = vxor.u32 %v2645, 2147483648
    %v2654 = vmul.f32 %v2648, 1.442695
    %v2655 = vpow.pop %v2654
    %v2656 = vmul.f32 %v2649, 1.442695
    %v2657 = vpow.pop %v2656
    %v2658 = vmul.f32 %v2650, 1.442695
    %v2659 = vpow.pop %v2658
    %v2660 = vmul.f32 %v2651, 1.442695
    %v2661 = vpow.pop %v2660
    %v2662 = vmul.f32 %v2652, 1.442695
    %v2663 = vpow.pop %v2662
    %v2664 = vmul.f32 %v2653, 1.442695
    %v2665 = vpow.pop %v2664
    %v2666 = vadd.f32 %v2655, 1.0
    %v2667 = vadd.f32 %v2657, 1.0
    %v2668 = vadd.f32 %v2659, 1.0
    %v2669 = vadd.f32 %v2661, 1.0
    %v2670 = vadd.f32 %v2663, 1.0
    %v2671 = vadd.f32 %v2665, 1.0
    %v2672 = vrcp.pop %v2666
    %v2673 = vmul.f32 %v2666, %v2672
    %v2674 = vsub.f32 1.0, %v2673
    %v2675 = vmul.f32 %v2672, %v2674
    %v2676 = vadd.f32 %v2672, %v2675
    %vm2677 = vweird.f32 %v2666
    %vm2678 = vweird.f32 %v2672
    %vm2679 = vmor %vm2677, %vm2678
    %v2680 = vsel %vm2679, %v2672, %v2676
    %v2681 = vand.u32 2147483647, %v2666
    %vm2682 = vcmp.eq.f32.partialorder %v2681, 8.507059e+37
    %v2683 = vand.u32 %v2666, 2147483648
    %v2684 = vor.u32 1.1754944e-38, %v2683
    %v2685 = vsel %vm2682, %v2684, %v2680
    %v2686 = vmul.f32 1.0, %v2685
    %v2687 = vrcp.pop %v2667
    %v2688 = vmul.f32 %v2667, %v2687
    %v2689 = vsub.f32 1.0, %v2688
    %v2690 = vmul.f32 %v2687, %v2689
    %v2691 = vadd.f32 %v2687, %v2690
    %vm2692 = vweird.f32 %v2667
    %vm2693 = vweird.f32 %v2687
    %vm2694 = vmor %vm2692, %vm2693
    %v2695 = vsel %vm2694, %v2687, %v2691
    %v2696 = vand.u32 2147483647, %v2667
    %vm2697 = vcmp.eq.f32.partialorder %v2696, 8.507059e+37
    %v2698 = vand.u32 %v2667, 2147483648
    %v2699 = vor.u32 1.1754944e-38, %v2698
    %v2700 = vsel %vm2697, %v2699, %v2695
    %v2701 = vmul.f32 1.0, %v2700
    %v2702 = vrcp.pop %v2668
    %v2703 = vmul.f32 %v2668, %v2702
    %v2704 = vsub.f32 1.0, %v2703
    %v2705 = vmul.f32 %v2702, %v2704
    %v2706 = vadd.f32 %v2702, %v2705
    %vm2707 = vweird.f32 %v2668
    %vm2708 = vweird.f32 %v2702
    %vm2709 = vmor %vm2707, %vm2708
    %v2710 = vsel %vm2709, %v2702, %v2706
    %v2711 = vand.u32 2147483647, %v2668
    %vm2712 = vcmp.eq.f32.partialorder %v2711, 8.507059e+37
    %v2713 = vand.u32 %v2668, 2147483648
    %v2714 = vor.u32 1.1754944e-38, %v2713
    %v2715 = vsel %vm2712, %v2714, %v2710
    %v2716 = vmul.f32 1.0, %v2715
    %v2717 = vrcp.pop %v2669
    %v2718 = vmul.f32 %v2669, %v2717
    %v2719 = vsub.f32 1.0, %v2718
    %v2720 = vmul.f32 %v2717, %v2719
    %v2721 = vadd.f32 %v2717, %v2720
    %vm2722 = vweird.f32 %v2669
    %vm2723 = vweird.f32 %v2717
    %vm2724 = vmor %vm2722, %vm2723
    %v2725 = vsel %vm2724, %v2717, %v2721
    %v2726 = vand.u32 2147483647, %v2669
    %vm2727 = vcmp.eq.f32.partialorder %v2726, 8.507059e+37
    %v2728 = vand.u32 %v2669, 2147483648
    %v2729 = vor.u32 1.1754944e-38, %v2728
    %v2730 = vsel %vm2727, %v2729, %v2725
    %v2731 = vmul.f32 1.0, %v2730
    %v2732 = vrcp.pop %v2670
    %v2733 = vmul.f32 %v2670, %v2732
    %v2734 = vsub.f32 1.0, %v2733
    %v2735 = vmul.f32 %v2732, %v2734
    %v2736 = vadd.f32 %v2732, %v2735
    %vm2737 = vweird.f32 %v2670
    %vm2738 = vweird.f32 %v2732
    %vm2739 = vmor %vm2737, %vm2738
    %v2740 = vsel %vm2739, %v2732, %v2736
    %v2741 = vand.u32 2147483647, %v2670
    %vm2742 = vcmp.eq.f32.partialorder %v2741, 8.507059e+37
    %v2743 = vand.u32 %v2670, 2147483648
    %v2744 = vor.u32 1.1754944e-38, %v2743
    %v2745 = vsel %vm2742, %v2744, %v2740
    %v2746 = vmul.f32 1.0, %v2745
    %v2747 = vrcp.pop %v2671
    %v2748 = vmul.f32 %v2671, %v2747
    %v2749 = vsub.f32 1.0, %v2748
    %v2750 = vmul.f32 %v2747, %v2749
    %v2751 = vadd.f32 %v2747, %v2750
    %vm2752 = vweird.f32 %v2671
    %vm2753 = vweird.f32 %v2747
    %vm2754 = vmor %vm2752, %vm2753
    %v2755 = vsel %vm2754, %v2747, %v2751
    %v2756 = vand.u32 2147483647, %v2671
    %vm2757 = vcmp.eq.f32.partialorder %v2756, 8.507059e+37
    %v2758 = vand.u32 %v2671, 2147483648
    %v2759 = vor.u32 1.1754944e-38, %v2758
    %v2760 = vsel %vm2757, %v2759, %v2755
    %v2761 = vmul.f32 1.0, %v2760
    %v2762 = vtanh.pop %v2646
    %v2763 = vtanh.pop %v2647
    %v2764 = vmul.f32 %v2716, %v2310
    %v2765 = vmul.f32 %v2731, %v2311
    %v2766 = vmul.f32 %v2686, %v2762
    %v2767 = vmul.f32 %v2701, %v2763
    %v2768 = vadd.f32 %v2764, %v2766
    %v2769 = vadd.f32 %v2765, %v2767
    %v2770 = vtanh.pop %v2768
    %v2771 = vtanh.pop %v2769
    %v2772 = vmul.f32 %v2746, %v2770
    %v2773 = vmul.f32 %v2761, %v2771
    %s2774 = scalar_lea.vmem [#allocation2], 8
    %2775 = vst [vmem:[%s2774] sm:$0x3] %v2772
    %s2776 = scalar_lea.vmem [#allocation3], 6
    %2777 = vst [vmem:[%s2776] sm:$0x3] %v2773
    %2778 = vmatpush.msra.mxu0 %v353
    %2779 = vmatpush.msra.mxu0 %v345
    %2780 = vmatpush.msra.mxu0 %v337
    %2781 = vmatpush.msra.mxu0 %v329
    %2782 = vmatpush.msra.mxu0 %v321
    %2783 = vmatpush.msra.mxu0 %v313
    %2784 = vmatpush.msra.mxu0 %v305
    %2785 = vmatpush.msra.mxu0 %v297
    %2786 = vmatpush.msra.mxu0 %v289
    %2787 = vmatpush.msra.mxu0 %v281
    %2788 = vmatpush.msra.mxu0 %v273
    %2789 = vmatpush.msra.mxu0 %v265
    %2790 = vmatpush.msra.mxu0 %v257
    %2791 = vmatpush.msra.mxu0 %v249
    %2792 = vmatpush.msra.mxu0 %v241
    %2793 = vmatpush.msra.mxu0 %v233
    %2794 = vmatmul.f32.gmra.mxu0 %v2772
    %v2795 = vpop.f32.mrf.mxu0
    %v2796 = vadd.f32 0.0, %v2795
    %2797 = vdwg.mxu0
    %2798 = vmatpush.msra.mxu0 %v481
    %2799 = vmatpush.msra.mxu0 %v473
    %2800 = vmatpush.msra.mxu0 %v465
    %2801 = vmatpush.msra.mxu0 %v457
    %2802 = vmatpush.msra.mxu0 %v449
    %2803 = vmatpush.msra.mxu0 %v441
    %2804 = vmatpush.msra.mxu0 %v433
    %2805 = vmatpush.msra.mxu0 %v425
    %2806 = vmatpush.msra.mxu0 %v417
    %2807 = vmatpush.msra.mxu0 %v409
    %2808 = vmatpush.msra.mxu0 %v401
    %2809 = vmatpush.msra.mxu0 %v393
    %2810 = vmatpush.msra.mxu0 %v385
    %2811 = vmatpush.msra.mxu0 %v377
    %2812 = vmatpush.msra.mxu0 %v369
    %2813 = vmatpush.msra.mxu0 %v361
    %2814 = vmatmul.f32.gmra.mxu0 %v2773
    %v2815 = vpop.f32.mrf.mxu0
    %v2816 = vadd.f32 %v2796, %v2815
    %2817 = vdwg.mxu0
    %2818 = vmatpush.msra.mxu0 %v354
    %2819 = vmatpush.msra.mxu0 %v346
    %2820 = vmatpush.msra.mxu0 %v338
    %2821 = vmatpush.msra.mxu0 %v330
    %2822 = vmatpush.msra.mxu0 %v322
    %2823 = vmatpush.msra.mxu0 %v314
    %2824 = vmatpush.msra.mxu0 %v306
    %2825 = vmatpush.msra.mxu0 %v298
    %2826 = vmatpush.msra.mxu0 %v290
    %2827 = vmatpush.msra.mxu0 %v282
    %2828 = vmatpush.msra.mxu0 %v274
    %2829 = vmatpush.msra.mxu0 %v266
    %2830 = vmatpush.msra.mxu0 %v258
    %2831 = vmatpush.msra.mxu0 %v250
    %2832 = vmatpush.msra.mxu0 %v242
    %2833 = vmatpush.msra.mxu0 %v234
    %2834 = vmatmul.f32.gmra.mxu0 %v2772
    %v2835 = vpop.f32.mrf.mxu0
    %v2836 = vadd.f32 0.0, %v2835
    %2837 = vdwg.mxu0
    %2838 = vmatpush.msra.mxu0 %v482
    %2839 = vmatpush.msra.mxu0 %v474
    %2840 = vmatpush.msra.mxu0 %v466
    %2841 = vmatpush.msra.mxu0 %v458
    %2842 = vmatpush.msra.mxu0 %v450
    %2843 = vmatpush.msra.mxu0 %v442
    %2844 = vmatpush.msra.mxu0 %v434
    %2845 = vmatpush.msra.mxu0 %v426
    %2846 = vmatpush.msra.mxu0 %v418
    %2847 = vmatpush.msra.mxu0 %v410
    %2848 = vmatpush.msra.mxu0 %v402
    %2849 = vmatpush.msra.mxu0 %v394
    %2850 = vmatpush.msra.mxu0 %v386
    %2851 = vmatpush.msra.mxu0 %v378
    %2852 = vmatpush.msra.mxu0 %v370
    %2853 = vmatpush.msra.mxu0 %v362
    %2854 = vmatmul.f32.gmra.mxu0 %v2773
    %v2855 = vpop.f32.mrf.mxu0
    %v2856 = vadd.f32 %v2836, %v2855
    %2857 = vdwg.mxu0
    %2858 = vmatpush.msra.mxu0 %v355
    %2859 = vmatpush.msra.mxu0 %v347
    %2860 = vmatpush.msra.mxu0 %v339
    %2861 = vmatpush.msra.mxu0 %v331
    %2862 = vmatpush.msra.mxu0 %v323
    %2863 = vmatpush.msra.mxu0 %v315
    %2864 = vmatpush.msra.mxu0 %v307
    %2865 = vmatpush.msra.mxu0 %v299
    %2866 = vmatpush.msra.mxu0 %v291
    %2867 = vmatpush.msra.mxu0 %v283
    %2868 = vmatpush.msra.mxu0 %v275
    %2869 = vmatpush.msra.mxu0 %v267
    %2870 = vmatpush.msra.mxu0 %v259
    %2871 = vmatpush.msra.mxu0 %v251
    %2872 = vmatpush.msra.mxu0 %v243
    %2873 = vmatpush.msra.mxu0 %v235
    %2874 = vmatmul.f32.gmra.mxu0 %v2772
    %v2875 = vpop.f32.mrf.mxu0
    %v2876 = vadd.f32 0.0, %v2875
    %2877 = vdwg.mxu0
    %2878 = vmatpush.msra.mxu0 %v483
    %2879 = vmatpush.msra.mxu0 %v475
    %2880 = vmatpush.msra.mxu0 %v467
    %2881 = vmatpush.msra.mxu0 %v459
    %2882 = vmatpush.msra.mxu0 %v451
    %2883 = vmatpush.msra.mxu0 %v443
    %2884 = vmatpush.msra.mxu0 %v435
    %2885 = vmatpush.msra.mxu0 %v427
    %2886 = vmatpush.msra.mxu0 %v419
    %2887 = vmatpush.msra.mxu0 %v411
    %2888 = vmatpush.msra.mxu0 %v403
    %2889 = vmatpush.msra.mxu0 %v395
    %2890 = vmatpush.msra.mxu0 %v387
    %2891 = vmatpush.msra.mxu0 %v379
    %2892 = vmatpush.msra.mxu0 %v371
    %2893 = vmatpush.msra.mxu0 %v363
    %2894 = vmatmul.f32.gmra.mxu0 %v2773
    %v2895 = vpop.f32.mrf.mxu0
    %v2896 = vadd.f32 %v2876, %v2895
    %2897 = vdwg.mxu0
    %2898 = vmatpush.msra.mxu0 %v356
    %2899 = vmatpush.msra.mxu0 %v348
    %2900 = vmatpush.msra.mxu0 %v340
    %2901 = vmatpush.msra.mxu0 %v332
    %2902 = vmatpush.msra.mxu0 %v324
    %2903 = vmatpush.msra.mxu0 %v316
    %2904 = vmatpush.msra.mxu0 %v308
    %2905 = vmatpush.msra.mxu0 %v300
    %2906 = vmatpush.msra.mxu0 %v292
    %2907 = vmatpush.msra.mxu0 %v284
    %2908 = vmatpush.msra.mxu0 %v276
    %2909 = vmatpush.msra.mxu0 %v268
    %2910 = vmatpush.msra.mxu0 %v260
    %2911 = vmatpush.msra.mxu0 %v252
    %2912 = vmatpush.msra.mxu0 %v244
    %2913 = vmatpush.msra.mxu0 %v236
    %2914 = vmatmul.f32.gmra.mxu0 %v2772
    %v2915 = vpop.f32.mrf.mxu0
    %v2916 = vadd.f32 0.0, %v2915
    %2917 = vdwg.mxu0
    %2918 = vmatpush.msra.mxu0 %v484
    %2919 = vmatpush.msra.mxu0 %v476
    %2920 = vmatpush.msra.mxu0 %v468
    %2921 = vmatpush.msra.mxu0 %v460
    %2922 = vmatpush.msra.mxu0 %v452
    %2923 = vmatpush.msra.mxu0 %v444
    %2924 = vmatpush.msra.mxu0 %v436
    %2925 = vmatpush.msra.mxu0 %v428
    %2926 = vmatpush.msra.mxu0 %v420
    %2927 = vmatpush.msra.mxu0 %v412
    %2928 = vmatpush.msra.mxu0 %v404
    %2929 = vmatpush.msra.mxu0 %v396
    %2930 = vmatpush.msra.mxu0 %v388
    %2931 = vmatpush.msra.mxu0 %v380
    %2932 = vmatpush.msra.mxu0 %v372
    %2933 = vmatpush.msra.mxu0 %v364
    %2934 = vmatmul.f32.gmra.mxu0 %v2773
    %v2935 = vpop.f32.mrf.mxu0
    %v2936 = vadd.f32 %v2916, %v2935
    %2937 = vdwg.mxu0
    %2938 = vmatpush.msra.mxu0 %v357
    %2939 = vmatpush.msra.mxu0 %v349
    %2940 = vmatpush.msra.mxu0 %v341
    %2941 = vmatpush.msra.mxu0 %v333
    %2942 = vmatpush.msra.mxu0 %v325
    %2943 = vmatpush.msra.mxu0 %v317
    %2944 = vmatpush.msra.mxu0 %v309
    %2945 = vmatpush.msra.mxu0 %v301
    %2946 = vmatpush.msra.mxu0 %v293
    %2947 = vmatpush.msra.mxu0 %v285
    %2948 = vmatpush.msra.mxu0 %v277
    %2949 = vmatpush.msra.mxu0 %v269
    %2950 = vmatpush.msra.mxu0 %v261
    %2951 = vmatpush.msra.mxu0 %v253
    %2952 = vmatpush.msra.mxu0 %v245
    %2953 = vmatpush.msra.mxu0 %v237
    %2954 = vmatmul.f32.gmra.mxu0 %v2772
    %v2955 = vpop.f32.mrf.mxu0
    %v2956 = vadd.f32 0.0, %v2955
    %2957 = vdwg.mxu0
    %2958 = vmatpush.msra.mxu0 %v485
    %2959 = vmatpush.msra.mxu0 %v477
    %2960 = vmatpush.msra.mxu0 %v469
    %2961 = vmatpush.msra.mxu0 %v461
    %2962 = vmatpush.msra.mxu0 %v453
    %2963 = vmatpush.msra.mxu0 %v445
    %2964 = vmatpush.msra.mxu0 %v437
    %2965 = vmatpush.msra.mxu0 %v429
    %2966 = vmatpush.msra.mxu0 %v421
    %2967 = vmatpush.msra.mxu0 %v413
    %2968 = vmatpush.msra.mxu0 %v405
    %2969 = vmatpush.msra.mxu0 %v397
    %2970 = vmatpush.msra.mxu0 %v389
    %2971 = vmatpush.msra.mxu0 %v381
    %2972 = vmatpush.msra.mxu0 %v373
    %2973 = vmatpush.msra.mxu0 %v365
    %2974 = vmatmul.f32.gmra.mxu0 %v2773
    %v2975 = vpop.f32.mrf.mxu0
    %v2976 = vadd.f32 %v2956, %v2975
    %2977 = vdwg.mxu0
    %2978 = vmatpush.msra.mxu0 %v358
    %2979 = vmatpush.msra.mxu0 %v350
    %2980 = vmatpush.msra.mxu0 %v342
    %2981 = vmatpush.msra.mxu0 %v334
    %2982 = vmatpush.msra.mxu0 %v326
    %2983 = vmatpush.msra.mxu0 %v318
    %2984 = vmatpush.msra.mxu0 %v310
    %2985 = vmatpush.msra.mxu0 %v302
    %2986 = vmatpush.msra.mxu0 %v294
    %2987 = vmatpush.msra.mxu0 %v286
    %2988 = vmatpush.msra.mxu0 %v278
    %2989 = vmatpush.msra.mxu0 %v270
    %2990 = vmatpush.msra.mxu0 %v262
    %2991 = vmatpush.msra.mxu0 %v254
    %2992 = vmatpush.msra.mxu0 %v246
    %2993 = vmatpush.msra.mxu0 %v238
    %2994 = vmatmul.f32.gmra.mxu0 %v2772
    %v2995 = vpop.f32.mrf.mxu0
    %v2996 = vadd.f32 0.0, %v2995
    %2997 = vdwg.mxu0
    %2998 = vmatpush.msra.mxu0 %v486
    %2999 = vmatpush.msra.mxu0 %v478
    %3000 = vmatpush.msra.mxu0 %v470
    %3001 = vmatpush.msra.mxu0 %v462
    %3002 = vmatpush.msra.mxu0 %v454
    %3003 = vmatpush.msra.mxu0 %v446
    %3004 = vmatpush.msra.mxu0 %v438
    %3005 = vmatpush.msra.mxu0 %v430
    %3006 = vmatpush.msra.mxu0 %v422
    %3007 = vmatpush.msra.mxu0 %v414
    %3008 = vmatpush.msra.mxu0 %v406
    %3009 = vmatpush.msra.mxu0 %v398
    %3010 = vmatpush.msra.mxu0 %v390
    %3011 = vmatpush.msra.mxu0 %v382
    %3012 = vmatpush.msra.mxu0 %v374
    %3013 = vmatpush.msra.mxu0 %v366
    %3014 = vmatmul.f32.gmra.mxu0 %v2773
    %v3015 = vpop.f32.mrf.mxu0
    %v3016 = vadd.f32 %v2996, %v3015
    %3017 = vdwg.mxu0
    %3018 = vmatpush.msra.mxu0 %v359
    %3019 = vmatpush.msra.mxu0 %v351
    %3020 = vmatpush.msra.mxu0 %v343
    %3021 = vmatpush.msra.mxu0 %v335
    %3022 = vmatpush.msra.mxu0 %v327
    %3023 = vmatpush.msra.mxu0 %v319
    %3024 = vmatpush.msra.mxu0 %v311
    %3025 = vmatpush.msra.mxu0 %v303
    %3026 = vmatpush.msra.mxu0 %v295
    %3027 = vmatpush.msra.mxu0 %v287
    %3028 = vmatpush.msra.mxu0 %v279
    %3029 = vmatpush.msra.mxu0 %v271
    %3030 = vmatpush.msra.mxu0 %v263
    %3031 = vmatpush.msra.mxu0 %v255
    %3032 = vmatpush.msra.mxu0 %v247
    %3033 = vmatpush.msra.mxu0 %v239
    %3034 = vmatmul.f32.gmra.mxu0 %v2772
    %v3035 = vpop.f32.mrf.mxu0
    %v3036 = vadd.f32 0.0, %v3035
    %3037 = vdwg.mxu0
    %3038 = vmatpush.msra.mxu0 %v487
    %3039 = vmatpush.msra.mxu0 %v479
    %3040 = vmatpush.msra.mxu0 %v471
    %3041 = vmatpush.msra.mxu0 %v463
    %3042 = vmatpush.msra.mxu0 %v455
    %3043 = vmatpush.msra.mxu0 %v447
    %3044 = vmatpush.msra.mxu0 %v439
    %3045 = vmatpush.msra.mxu0 %v431
    %3046 = vmatpush.msra.mxu0 %v423
    %3047 = vmatpush.msra.mxu0 %v415
    %3048 = vmatpush.msra.mxu0 %v407
    %3049 = vmatpush.msra.mxu0 %v399
    %3050 = vmatpush.msra.mxu0 %v391
    %3051 = vmatpush.msra.mxu0 %v383
    %3052 = vmatpush.msra.mxu0 %v375
    %3053 = vmatpush.msra.mxu0 %v367
    %3054 = vmatmul.f32.gmra.mxu0 %v2773
    %v3055 = vpop.f32.mrf.mxu0
    %v3056 = vadd.f32 %v3036, %v3055
    %3057 = vdwg.mxu0
    %3058 = vmatpush.msra.mxu0 %v360
    %3059 = vmatpush.msra.mxu0 %v352
    %3060 = vmatpush.msra.mxu0 %v344
    %3061 = vmatpush.msra.mxu0 %v336
    %3062 = vmatpush.msra.mxu0 %v328
    %3063 = vmatpush.msra.mxu0 %v320
    %3064 = vmatpush.msra.mxu0 %v312
    %3065 = vmatpush.msra.mxu0 %v304
    %3066 = vmatpush.msra.mxu0 %v296
    %3067 = vmatpush.msra.mxu0 %v288
    %3068 = vmatpush.msra.mxu0 %v280
    %3069 = vmatpush.msra.mxu0 %v272
    %3070 = vmatpush.msra.mxu0 %v264
    %3071 = vmatpush.msra.mxu0 %v256
    %3072 = vmatpush.msra.mxu0 %v248
    %3073 = vmatpush.msra.mxu0 %v240
    %3074 = vmatmul.f32.gmra.mxu0 %v2772
    %v3075 = vpop.f32.mrf.mxu0
    %v3076 = vadd.f32 0.0, %v3075
    %3077 = vdwg.mxu0
    %3078 = vmatpush.msra.mxu0 %v488
    %3079 = vmatpush.msra.mxu0 %v480
    %3080 = vmatpush.msra.mxu0 %v472
    %3081 = vmatpush.msra.mxu0 %v464
    %3082 = vmatpush.msra.mxu0 %v456
    %3083 = vmatpush.msra.mxu0 %v448
    %3084 = vmatpush.msra.mxu0 %v440
    %3085 = vmatpush.msra.mxu0 %v432
    %3086 = vmatpush.msra.mxu0 %v424
    %3087 = vmatpush.msra.mxu0 %v416
    %3088 = vmatpush.msra.mxu0 %v408
    %3089 = vmatpush.msra.mxu0 %v400
    %3090 = vmatpush.msra.mxu0 %v392
    %3091 = vmatpush.msra.mxu0 %v384
    %3092 = vmatpush.msra.mxu0 %v376
    %3093 = vmatpush.msra.mxu0 %v368
    %3094 = vmatmul.f32.gmra.mxu0 %v2773
    %v3095 = vpop.f32.mrf.mxu0
    %v3096 = vadd.f32 %v3076, %v3095
    %3097 = vdwg.mxu0
    %v3098 = vadd.f32 %v91, %v2816
    %v3099 = vadd.f32 %v111, %v2856
    %v3100 = vadd.f32 %v131, %v2896
    %v3101 = vadd.f32 %v151, %v2936
    %v3102 = vadd.f32 %v171, %v2976
    %v3103 = vadd.f32 %v191, %v3016
    %v3104 = vadd.f32 %v211, %v3056
    %v3105 = vadd.f32 %v231, %v3096
    %v3106 = vxor.u32 %v3098, 2147483648
    %v3107 = vxor.u32 %v3099, 2147483648
    %v3108 = vxor.u32 %v3100, 2147483648
    %v3109 = vxor.u32 %v3101, 2147483648
    %v3110 = vxor.u32 %v3102, 2147483648
    %v3111 = vxor.u32 %v3103, 2147483648
    %v3112 = vmul.f32 %v3106, 1.442695
    %v3113 = vpow.pop %v3112
    %v3114 = vmul.f32 %v3107, 1.442695
    %v3115 = vpow.pop %v3114
    %v3116 = vmul.f32 %v3108, 1.442695
    %v3117 = vpow.pop %v3116
    %v3118 = vmul.f32 %v3109, 1.442695
    %v3119 = vpow.pop %v3118
    %v3120 = vmul.f32 %v3110, 1.442695
    %v3121 = vpow.pop %v3120
    %v3122 = vmul.f32 %v3111, 1.442695
    %v3123 = vpow.pop %v3122
    %v3124 = vadd.f32 %v3113, 1.0
    %v3125 = vadd.f32 %v3115, 1.0
    %v3126 = vadd.f32 %v3117, 1.0
    %v3127 = vadd.f32 %v3119, 1.0
    %v3128 = vadd.f32 %v3121, 1.0
    %v3129 = vadd.f32 %v3123, 1.0
    %v3130 = vrcp.pop %v3124
    %v3131 = vmul.f32 %v3124, %v3130
    %v3132 = vsub.f32 1.0, %v3131
    %v3133 = vmul.f32 %v3130, %v3132
    %v3134 = vadd.f32 %v3130, %v3133
    %vm3135 = vweird.f32 %v3124
    %vm3136 = vweird.f32 %v3130
    %vm3137 = vmor %vm3135, %vm3136
    %v3138 = vsel %vm3137, %v3130, %v3134
    %v3139 = vand.u32 2147483647, %v3124
    %vm3140 = vcmp.eq.f32.partialorder %v3139, 8.507059e+37
    %v3141 = vand.u32 %v3124, 2147483648
    %v3142 = vor.u32 1.1754944e-38, %v3141
    %v3143 = vsel %vm3140, %v3142, %v3138
    %v3144 = vmul.f32 1.0, %v3143
    %v3145 = vrcp.pop %v3125
    %v3146 = vmul.f32 %v3125, %v3145
    %v3147 = vsub.f32 1.0, %v3146
    %v3148 = vmul.f32 %v3145, %v3147
    %v3149 = vadd.f32 %v3145, %v3148
    %vm3150 = vweird.f32 %v3125
    %vm3151 = vweird.f32 %v3145
    %vm3152 = vmor %vm3150, %vm3151
    %v3153 = vsel %vm3152, %v3145, %v3149
    %v3154 = vand.u32 2147483647, %v3125
    %vm3155 = vcmp.eq.f32.partialorder %v3154, 8.507059e+37
    %v3156 = vand.u32 %v3125, 2147483648
    %v3157 = vor.u32 1.1754944e-38, %v3156
    %v3158 = vsel %vm3155, %v3157, %v3153
    %v3159 = vmul.f32 1.0, %v3158
    %v3160 = vrcp.pop %v3126
    %v3161 = vmul.f32 %v3126, %v3160
    %v3162 = vsub.f32 1.0, %v3161
    %v3163 = vmul.f32 %v3160, %v3162
    %v3164 = vadd.f32 %v3160, %v3163
    %vm3165 = vweird.f32 %v3126
    %vm3166 = vweird.f32 %v3160
    %vm3167 = vmor %vm3165, %vm3166
    %v3168 = vsel %vm3167, %v3160, %v3164
    %v3169 = vand.u32 2147483647, %v3126
    %vm3170 = vcmp.eq.f32.partialorder %v3169, 8.507059e+37
    %v3171 = vand.u32 %v3126, 2147483648
    %v3172 = vor.u32 1.1754944e-38, %v3171
    %v3173 = vsel %vm3170, %v3172, %v3168
    %v3174 = vmul.f32 1.0, %v3173
    %v3175 = vrcp.pop %v3127
    %v3176 = vmul.f32 %v3127, %v3175
    %v3177 = vsub.f32 1.0, %v3176
    %v3178 = vmul.f32 %v3175, %v3177
    %v3179 = vadd.f32 %v3175, %v3178
    %vm3180 = vweird.f32 %v3127
    %vm3181 = vweird.f32 %v3175
    %vm3182 = vmor %vm3180, %vm3181
    %v3183 = vsel %vm3182, %v3175, %v3179
    %v3184 = vand.u32 2147483647, %v3127
    %vm3185 = vcmp.eq.f32.partialorder %v3184, 8.507059e+37
    %v3186 = vand.u32 %v3127, 2147483648
    %v3187 = vor.u32 1.1754944e-38, %v3186
    %v3188 = vsel %vm3185, %v3187, %v3183
    %v3189 = vmul.f32 1.0, %v3188
    %v3190 = vrcp.pop %v3128
    %v3191 = vmul.f32 %v3128, %v3190
    %v3192 = vsub.f32 1.0, %v3191
    %v3193 = vmul.f32 %v3190, %v3192
    %v3194 = vadd.f32 %v3190, %v3193
    %vm3195 = vweird.f32 %v3128
    %vm3196 = vweird.f32 %v3190
    %vm3197 = vmor %vm3195, %vm3196
    %v3198 = vsel %vm3197, %v3190, %v3194
    %v3199 = vand.u32 2147483647, %v3128
    %vm3200 = vcmp.eq.f32.partialorder %v3199, 8.507059e+37
    %v3201 = vand.u32 %v3128, 2147483648
    %v3202 = vor.u32 1.1754944e-38, %v3201
    %v3203 = vsel %vm3200, %v3202, %v3198
    %v3204 = vmul.f32 1.0, %v3203
    %v3205 = vrcp.pop %v3129
    %v3206 = vmul.f32 %v3129, %v3205
    %v3207 = vsub.f32 1.0, %v3206
    %v3208 = vmul.f32 %v3205, %v3207
    %v3209 = vadd.f32 %v3205, %v3208
    %vm3210 = vweird.f32 %v3129
    %vm3211 = vweird.f32 %v3205
    %vm3212 = vmor %vm3210, %vm3211
    %v3213 = vsel %vm3212, %v3205, %v3209
    %v3214 = vand.u32 2147483647, %v3129
    %vm3215 = vcmp.eq.f32.partialorder %v3214, 8.507059e+37
    %v3216 = vand.u32 %v3129, 2147483648
    %v3217 = vor.u32 1.1754944e-38, %v3216
    %v3218 = vsel %vm3215, %v3217, %v3213
    %v3219 = vmul.f32 1.0, %v3218
    %v3220 = vtanh.pop %v3104
    %v3221 = vtanh.pop %v3105
    %v3222 = vmul.f32 %v3174, %v2768
    %v3223 = vmul.f32 %v3189, %v2769
    %v3224 = vmul.f32 %v3144, %v3220
    %v3225 = vmul.f32 %v3159, %v3221
    %v3226 = vadd.f32 %v3222, %v3224
    %v3227 = vadd.f32 %v3223, %v3225
    %v3228 = vtanh.pop %v3226
    %v3229 = vtanh.pop %v3227
    %v3230 = vmul.f32 %v3204, %v3228
    %v3231 = vmul.f32 %v3219, %v3229
    %s3232 = scalar_lea.vmem [#allocation2], 10
    %3233 = vst [vmem:[%s3232] sm:$0x3] %v3230
    %s3234 = scalar_lea.vmem [#allocation3], 4
    %3235 = vst [vmem:[%s3234] sm:$0x3] %v3231
    %3236 = vmatpush.msra.mxu0 %v353
    %3237 = vmatpush.msra.mxu0 %v345
    %3238 = vmatpush.msra.mxu0 %v337
    %3239 = vmatpush.msra.mxu0 %v329
    %3240 = vmatpush.msra.mxu0 %v321
    %3241 = vmatpush.msra.mxu0 %v313
    %3242 = vmatpush.msra.mxu0 %v305
    %3243 = vmatpush.msra.mxu0 %v297
    %3244 = vmatpush.msra.mxu0 %v289
    %3245 = vmatpush.msra.mxu0 %v281
    %3246 = vmatpush.msra.mxu0 %v273
    %3247 = vmatpush.msra.mxu0 %v265
    %3248 = vmatpush.msra.mxu0 %v257
    %3249 = vmatpush.msra.mxu0 %v249
    %3250 = vmatpush.msra.mxu0 %v241
    %3251 = vmatpush.msra.mxu0 %v233
    %3252 = vmatmul.f32.gmra.mxu0 %v3230
    %v3253 = vpop.f32.mrf.mxu0
    %v3254 = vadd.f32 0.0, %v3253
    %3255 = vdwg.mxu0
    %3256 = vmatpush.msra.mxu0 %v481
    %3257 = vmatpush.msra.mxu0 %v473
    %3258 = vmatpush.msra.mxu0 %v465
    %3259 = vmatpush.msra.mxu0 %v457
    %3260 = vmatpush.msra.mxu0 %v449
    %3261 = vmatpush.msra.mxu0 %v441
    %3262 = vmatpush.msra.mxu0 %v433
    %3263 = vmatpush.msra.mxu0 %v425
    %3264 = vmatpush.msra.mxu0 %v417
    %3265 = vmatpush.msra.mxu0 %v409
    %3266 = vmatpush.msra.mxu0 %v401
    %3267 = vmatpush.msra.mxu0 %v393
    %3268 = vmatpush.msra.mxu0 %v385
    %3269 = vmatpush.msra.mxu0 %v377
    %3270 = vmatpush.msra.mxu0 %v369
    %3271 = vmatpush.msra.mxu0 %v361
    %3272 = vmatmul.f32.gmra.mxu0 %v3231
    %v3273 = vpop.f32.mrf.mxu0
    %v3274 = vadd.f32 %v3254, %v3273
    %3275 = vdwg.mxu0
    %3276 = vmatpush.msra.mxu0 %v354
    %3277 = vmatpush.msra.mxu0 %v346
    %3278 = vmatpush.msra.mxu0 %v338
    %3279 = vmatpush.msra.mxu0 %v330
    %3280 = vmatpush.msra.mxu0 %v322
    %3281 = vmatpush.msra.mxu0 %v314
    %3282 = vmatpush.msra.mxu0 %v306
    %3283 = vmatpush.msra.mxu0 %v298
    %3284 = vmatpush.msra.mxu0 %v290
    %3285 = vmatpush.msra.mxu0 %v282
    %3286 = vmatpush.msra.mxu0 %v274
    %3287 = vmatpush.msra.mxu0 %v266
    %3288 = vmatpush.msra.mxu0 %v258
    %3289 = vmatpush.msra.mxu0 %v250
    %3290 = vmatpush.msra.mxu0 %v242
    %3291 = vmatpush.msra.mxu0 %v234
    %3292 = vmatmul.f32.gmra.mxu0 %v3230
    %v3293 = vpop.f32.mrf.mxu0
    %v3294 = vadd.f32 0.0, %v3293
    %3295 = vdwg.mxu0
    %3296 = vmatpush.msra.mxu0 %v482
    %3297 = vmatpush.msra.mxu0 %v474
    %3298 = vmatpush.msra.mxu0 %v466
    %3299 = vmatpush.msra.mxu0 %v458
    %3300 = vmatpush.msra.mxu0 %v450
    %3301 = vmatpush.msra.mxu0 %v442
    %3302 = vmatpush.msra.mxu0 %v434
    %3303 = vmatpush.msra.mxu0 %v426
    %3304 = vmatpush.msra.mxu0 %v418
    %3305 = vmatpush.msra.mxu0 %v410
    %3306 = vmatpush.msra.mxu0 %v402
    %3307 = vmatpush.msra.mxu0 %v394
    %3308 = vmatpush.msra.mxu0 %v386
    %3309 = vmatpush.msra.mxu0 %v378
    %3310 = vmatpush.msra.mxu0 %v370
    %3311 = vmatpush.msra.mxu0 %v362
    %3312 = vmatmul.f32.gmra.mxu0 %v3231
    %v3313 = vpop.f32.mrf.mxu0
    %v3314 = vadd.f32 %v3294, %v3313
    %3315 = vdwg.mxu0
    %3316 = vmatpush.msra.mxu0 %v355
    %3317 = vmatpush.msra.mxu0 %v347
    %3318 = vmatpush.msra.mxu0 %v339
    %3319 = vmatpush.msra.mxu0 %v331
    %3320 = vmatpush.msra.mxu0 %v323
    %3321 = vmatpush.msra.mxu0 %v315
    %3322 = vmatpush.msra.mxu0 %v307
    %3323 = vmatpush.msra.mxu0 %v299
    %3324 = vmatpush.msra.mxu0 %v291
    %3325 = vmatpush.msra.mxu0 %v283
    %3326 = vmatpush.msra.mxu0 %v275
    %3327 = vmatpush.msra.mxu0 %v267
    %3328 = vmatpush.msra.mxu0 %v259
    %3329 = vmatpush.msra.mxu0 %v251
    %3330 = vmatpush.msra.mxu0 %v243
    %3331 = vmatpush.msra.mxu0 %v235
    %3332 = vmatmul.f32.gmra.mxu0 %v3230
    %v3333 = vpop.f32.mrf.mxu0
    %v3334 = vadd.f32 0.0, %v3333
    %3335 = vdwg.mxu0
    %3336 = vmatpush.msra.mxu0 %v483
    %3337 = vmatpush.msra.mxu0 %v475
    %3338 = vmatpush.msra.mxu0 %v467
    %3339 = vmatpush.msra.mxu0 %v459
    %3340 = vmatpush.msra.mxu0 %v451
    %3341 = vmatpush.msra.mxu0 %v443
    %3342 = vmatpush.msra.mxu0 %v435
    %3343 = vmatpush.msra.mxu0 %v427
    %3344 = vmatpush.msra.mxu0 %v419
    %3345 = vmatpush.msra.mxu0 %v411
    %3346 = vmatpush.msra.mxu0 %v403
    %3347 = vmatpush.msra.mxu0 %v395
    %3348 = vmatpush.msra.mxu0 %v387
    %3349 = vmatpush.msra.mxu0 %v379
    %3350 = vmatpush.msra.mxu0 %v371
    %3351 = vmatpush.msra.mxu0 %v363
    %3352 = vmatmul.f32.gmra.mxu0 %v3231
    %v3353 = vpop.f32.mrf.mxu0
    %v3354 = vadd.f32 %v3334, %v3353
    %3355 = vdwg.mxu0
    %3356 = vmatpush.msra.mxu0 %v356
    %3357 = vmatpush.msra.mxu0 %v348
    %3358 = vmatpush.msra.mxu0 %v340
    %3359 = vmatpush.msra.mxu0 %v332
    %3360 = vmatpush.msra.mxu0 %v324
    %3361 = vmatpush.msra.mxu0 %v316
    %3362 = vmatpush.msra.mxu0 %v308
    %3363 = vmatpush.msra.mxu0 %v300
    %3364 = vmatpush.msra.mxu0 %v292
    %3365 = vmatpush.msra.mxu0 %v284
    %3366 = vmatpush.msra.mxu0 %v276
    %3367 = vmatpush.msra.mxu0 %v268
    %3368 = vmatpush.msra.mxu0 %v260
    %3369 = vmatpush.msra.mxu0 %v252
    %3370 = vmatpush.msra.mxu0 %v244
    %3371 = vmatpush.msra.mxu0 %v236
    %3372 = vmatmul.f32.gmra.mxu0 %v3230
    %v3373 = vpop.f32.mrf.mxu0
    %v3374 = vadd.f32 0.0, %v3373
    %3375 = vdwg.mxu0
    %3376 = vmatpush.msra.mxu0 %v484
    %3377 = vmatpush.msra.mxu0 %v476
    %3378 = vmatpush.msra.mxu0 %v468
    %3379 = vmatpush.msra.mxu0 %v460
    %3380 = vmatpush.msra.mxu0 %v452
    %3381 = vmatpush.msra.mxu0 %v444
    %3382 = vmatpush.msra.mxu0 %v436
    %3383 = vmatpush.msra.mxu0 %v428
    %3384 = vmatpush.msra.mxu0 %v420
    %3385 = vmatpush.msra.mxu0 %v412
    %3386 = vmatpush.msra.mxu0 %v404
    %3387 = vmatpush.msra.mxu0 %v396
    %3388 = vmatpush.msra.mxu0 %v388
    %3389 = vmatpush.msra.mxu0 %v380
    %3390 = vmatpush.msra.mxu0 %v372
    %3391 = vmatpush.msra.mxu0 %v364
    %3392 = vmatmul.f32.gmra.mxu0 %v3231
    %v3393 = vpop.f32.mrf.mxu0
    %v3394 = vadd.f32 %v3374, %v3393
    %3395 = vdwg.mxu0
    %3396 = vmatpush.msra.mxu0 %v357
    %3397 = vmatpush.msra.mxu0 %v349
    %3398 = vmatpush.msra.mxu0 %v341
    %3399 = vmatpush.msra.mxu0 %v333
    %3400 = vmatpush.msra.mxu0 %v325
    %3401 = vmatpush.msra.mxu0 %v317
    %3402 = vmatpush.msra.mxu0 %v309
    %3403 = vmatpush.msra.mxu0 %v301
    %3404 = vmatpush.msra.mxu0 %v293
    %3405 = vmatpush.msra.mxu0 %v285
    %3406 = vmatpush.msra.mxu0 %v277
    %3407 = vmatpush.msra.mxu0 %v269
    %3408 = vmatpush.msra.mxu0 %v261
    %3409 = vmatpush.msra.mxu0 %v253
    %3410 = vmatpush.msra.mxu0 %v245
    %3411 = vmatpush.msra.mxu0 %v237
    %3412 = vmatmul.f32.gmra.mxu0 %v3230
    %v3413 = vpop.f32.mrf.mxu0
    %v3414 = vadd.f32 0.0, %v3413
    %3415 = vdwg.mxu0
    %3416 = vmatpush.msra.mxu0 %v485
    %3417 = vmatpush.msra.mxu0 %v477
    %3418 = vmatpush.msra.mxu0 %v469
    %3419 = vmatpush.msra.mxu0 %v461
    %3420 = vmatpush.msra.mxu0 %v453
    %3421 = vmatpush.msra.mxu0 %v445
    %3422 = vmatpush.msra.mxu0 %v437
    %3423 = vmatpush.msra.mxu0 %v429
    %3424 = vmatpush.msra.mxu0 %v421
    %3425 = vmatpush.msra.mxu0 %v413
    %3426 = vmatpush.msra.mxu0 %v405
    %3427 = vmatpush.msra.mxu0 %v397
    %3428 = vmatpush.msra.mxu0 %v389
    %3429 = vmatpush.msra.mxu0 %v381
    %3430 = vmatpush.msra.mxu0 %v373
    %3431 = vmatpush.msra.mxu0 %v365
    %3432 = vmatmul.f32.gmra.mxu0 %v3231
    %v3433 = vpop.f32.mrf.mxu0
    %v3434 = vadd.f32 %v3414, %v3433
    %3435 = vdwg.mxu0
    %3436 = vmatpush.msra.mxu0 %v358
    %3437 = vmatpush.msra.mxu0 %v350
    %3438 = vmatpush.msra.mxu0 %v342
    %3439 = vmatpush.msra.mxu0 %v334
    %3440 = vmatpush.msra.mxu0 %v326
    %3441 = vmatpush.msra.mxu0 %v318
    %3442 = vmatpush.msra.mxu0 %v310
    %3443 = vmatpush.msra.mxu0 %v302
    %3444 = vmatpush.msra.mxu0 %v294
    %3445 = vmatpush.msra.mxu0 %v286
    %3446 = vmatpush.msra.mxu0 %v278
    %3447 = vmatpush.msra.mxu0 %v270
    %3448 = vmatpush.msra.mxu0 %v262
    %3449 = vmatpush.msra.mxu0 %v254
    %3450 = vmatpush.msra.mxu0 %v246
    %3451 = vmatpush.msra.mxu0 %v238
    %3452 = vmatmul.f32.gmra.mxu0 %v3230
    %v3453 = vpop.f32.mrf.mxu0
    %v3454 = vadd.f32 0.0, %v3453
    %3455 = vdwg.mxu0
    %3456 = vmatpush.msra.mxu0 %v486
    %3457 = vmatpush.msra.mxu0 %v478
    %3458 = vmatpush.msra.mxu0 %v470
    %3459 = vmatpush.msra.mxu0 %v462
    %3460 = vmatpush.msra.mxu0 %v454
    %3461 = vmatpush.msra.mxu0 %v446
    %3462 = vmatpush.msra.mxu0 %v438
    %3463 = vmatpush.msra.mxu0 %v430
    %3464 = vmatpush.msra.mxu0 %v422
    %3465 = vmatpush.msra.mxu0 %v414
    %3466 = vmatpush.msra.mxu0 %v406
    %3467 = vmatpush.msra.mxu0 %v398
    %3468 = vmatpush.msra.mxu0 %v390
    %3469 = vmatpush.msra.mxu0 %v382
    %3470 = vmatpush.msra.mxu0 %v374
    %3471 = vmatpush.msra.mxu0 %v366
    %3472 = vmatmul.f32.gmra.mxu0 %v3231
    %v3473 = vpop.f32.mrf.mxu0
    %v3474 = vadd.f32 %v3454, %v3473
    %3475 = vdwg.mxu0
    %3476 = vmatpush.msra.mxu0 %v359
    %3477 = vmatpush.msra.mxu0 %v351
    %3478 = vmatpush.msra.mxu0 %v343
    %3479 = vmatpush.msra.mxu0 %v335
    %3480 = vmatpush.msra.mxu0 %v327
    %3481 = vmatpush.msra.mxu0 %v319
    %3482 = vmatpush.msra.mxu0 %v311
    %3483 = vmatpush.msra.mxu0 %v303
    %3484 = vmatpush.msra.mxu0 %v295
    %3485 = vmatpush.msra.mxu0 %v287
    %3486 = vmatpush.msra.mxu0 %v279
    %3487 = vmatpush.msra.mxu0 %v271
    %3488 = vmatpush.msra.mxu0 %v263
    %3489 = vmatpush.msra.mxu0 %v255
    %3490 = vmatpush.msra.mxu0 %v247
    %3491 = vmatpush.msra.mxu0 %v239
    %3492 = vmatmul.f32.gmra.mxu0 %v3230
    %v3493 = vpop.f32.mrf.mxu0
    %v3494 = vadd.f32 0.0, %v3493
    %3495 = vdwg.mxu0
    %3496 = vmatpush.msra.mxu0 %v487
    %3497 = vmatpush.msra.mxu0 %v479
    %3498 = vmatpush.msra.mxu0 %v471
    %3499 = vmatpush.msra.mxu0 %v463
    %3500 = vmatpush.msra.mxu0 %v455
    %3501 = vmatpush.msra.mxu0 %v447
    %3502 = vmatpush.msra.mxu0 %v439
    %3503 = vmatpush.msra.mxu0 %v431
    %3504 = vmatpush.msra.mxu0 %v423
    %3505 = vmatpush.msra.mxu0 %v415
    %3506 = vmatpush.msra.mxu0 %v407
    %3507 = vmatpush.msra.mxu0 %v399
    %3508 = vmatpush.msra.mxu0 %v391
    %3509 = vmatpush.msra.mxu0 %v383
    %3510 = vmatpush.msra.mxu0 %v375
    %3511 = vmatpush.msra.mxu0 %v367
    %3512 = vmatmul.f32.gmra.mxu0 %v3231
    %v3513 = vpop.f32.mrf.mxu0
    %v3514 = vadd.f32 %v3494, %v3513
    %3515 = vdwg.mxu0
    %3516 = vmatpush.msra.mxu0 %v360
    %3517 = vmatpush.msra.mxu0 %v352
    %3518 = vmatpush.msra.mxu0 %v344
    %3519 = vmatpush.msra.mxu0 %v336
    %3520 = vmatpush.msra.mxu0 %v328
    %3521 = vmatpush.msra.mxu0 %v320
    %3522 = vmatpush.msra.mxu0 %v312
    %3523 = vmatpush.msra.mxu0 %v304
    %3524 = vmatpush.msra.mxu0 %v296
    %3525 = vmatpush.msra.mxu0 %v288
    %3526 = vmatpush.msra.mxu0 %v280
    %3527 = vmatpush.msra.mxu0 %v272
    %3528 = vmatpush.msra.mxu0 %v264
    %3529 = vmatpush.msra.mxu0 %v256
    %3530 = vmatpush.msra.mxu0 %v248
    %3531 = vmatpush.msra.mxu0 %v240
    %3532 = vmatmul.f32.gmra.mxu0 %v3230
    %v3533 = vpop.f32.mrf.mxu0
    %v3534 = vadd.f32 0.0, %v3533
    %3535 = vdwg.mxu0
    %3536 = vmatpush.msra.mxu0 %v488
    %3537 = vmatpush.msra.mxu0 %v480
    %3538 = vmatpush.msra.mxu0 %v472
    %3539 = vmatpush.msra.mxu0 %v464
    %3540 = vmatpush.msra.mxu0 %v456
    %3541 = vmatpush.msra.mxu0 %v448
    %3542 = vmatpush.msra.mxu0 %v440
    %3543 = vmatpush.msra.mxu0 %v432
    %3544 = vmatpush.msra.mxu0 %v424
    %3545 = vmatpush.msra.mxu0 %v416
    %3546 = vmatpush.msra.mxu0 %v408
    %3547 = vmatpush.msra.mxu0 %v400
    %3548 = vmatpush.msra.mxu0 %v392
    %3549 = vmatpush.msra.mxu0 %v384
    %3550 = vmatpush.msra.mxu0 %v376
    %3551 = vmatpush.msra.mxu0 %v368
    %3552 = vmatmul.f32.gmra.mxu0 %v3231
    %v3553 = vpop.f32.mrf.mxu0
    %v3554 = vadd.f32 %v3534, %v3553
    %3555 = vdwg.mxu0
    %v3556 = vadd.f32 %v91, %v3274
    %v3557 = vadd.f32 %v111, %v3314
    %v3558 = vadd.f32 %v131, %v3354
    %v3559 = vadd.f32 %v151, %v3394
    %v3560 = vadd.f32 %v171, %v3434
    %v3561 = vadd.f32 %v191, %v3474
    %v3562 = vadd.f32 %v211, %v3514
    %v3563 = vadd.f32 %v231, %v3554
    %v3564 = vxor.u32 %v3556, 2147483648
    %v3565 = vxor.u32 %v3557, 2147483648
    %v3566 = vxor.u32 %v3558, 2147483648
    %v3567 = vxor.u32 %v3559, 2147483648
    %v3568 = vxor.u32 %v3560, 2147483648
    %v3569 = vxor.u32 %v3561, 2147483648
    %v3570 = vmul.f32 %v3564, 1.442695
    %v3571 = vpow.pop %v3570
    %v3572 = vmul.f32 %v3565, 1.442695
    %v3573 = vpow.pop %v3572
    %v3574 = vmul.f32 %v3566, 1.442695
    %v3575 = vpow.pop %v3574
    %v3576 = vmul.f32 %v3567, 1.442695
    %v3577 = vpow.pop %v3576
    %v3578 = vmul.f32 %v3568, 1.442695
    %v3579 = vpow.pop %v3578
    %v3580 = vmul.f32 %v3569, 1.442695
    %v3581 = vpow.pop %v3580
    %v3582 = vadd.f32 %v3571, 1.0
    %v3583 = vadd.f32 %v3573, 1.0
    %v3584 = vadd.f32 %v3575, 1.0
    %v3585 = vadd.f32 %v3577, 1.0
    %v3586 = vadd.f32 %v3579, 1.0
    %v3587 = vadd.f32 %v3581, 1.0
    %v3588 = vrcp.pop %v3582
    %v3589 = vmul.f32 %v3582, %v3588
    %v3590 = vsub.f32 1.0, %v3589
    %v3591 = vmul.f32 %v3588, %v3590
    %v3592 = vadd.f32 %v3588, %v3591
    %vm3593 = vweird.f32 %v3582
    %vm3594 = vweird.f32 %v3588
    %vm3595 = vmor %vm3593, %vm3594
    %v3596 = vsel %vm3595, %v3588, %v3592
    %v3597 = vand.u32 2147483647, %v3582
    %vm3598 = vcmp.eq.f32.partialorder %v3597, 8.507059e+37
    %v3599 = vand.u32 %v3582, 2147483648
    %v3600 = vor.u32 1.1754944e-38, %v3599
    %v3601 = vsel %vm3598, %v3600, %v3596
    %v3602 = vmul.f32 1.0, %v3601
    %v3603 = vrcp.pop %v3583
    %v3604 = vmul.f32 %v3583, %v3603
    %v3605 = vsub.f32 1.0, %v3604
    %v3606 = vmul.f32 %v3603, %v3605
    %v3607 = vadd.f32 %v3603, %v3606
    %vm3608 = vweird.f32 %v3583
    %vm3609 = vweird.f32 %v3603
    %vm3610 = vmor %vm3608, %vm3609
    %v3611 = vsel %vm3610, %v3603, %v3607
    %v3612 = vand.u32 2147483647, %v3583
    %vm3613 = vcmp.eq.f32.partialorder %v3612, 8.507059e+37
    %v3614 = vand.u32 %v3583, 2147483648
    %v3615 = vor.u32 1.1754944e-38, %v3614
    %v3616 = vsel %vm3613, %v3615, %v3611
    %v3617 = vmul.f32 1.0, %v3616
    %v3618 = vrcp.pop %v3584
    %v3619 = vmul.f32 %v3584, %v3618
    %v3620 = vsub.f32 1.0, %v3619
    %v3621 = vmul.f32 %v3618, %v3620
    %v3622 = vadd.f32 %v3618, %v3621
    %vm3623 = vweird.f32 %v3584
    %vm3624 = vweird.f32 %v3618
    %vm3625 = vmor %vm3623, %vm3624
    %v3626 = vsel %vm3625, %v3618, %v3622
    %v3627 = vand.u32 2147483647, %v3584
    %vm3628 = vcmp.eq.f32.partialorder %v3627, 8.507059e+37
    %v3629 = vand.u32 %v3584, 2147483648
    %v3630 = vor.u32 1.1754944e-38, %v3629
    %v3631 = vsel %vm3628, %v3630, %v3626
    %v3632 = vmul.f32 1.0, %v3631
    %v3633 = vrcp.pop %v3585
    %v3634 = vmul.f32 %v3585, %v3633
    %v3635 = vsub.f32 1.0, %v3634
    %v3636 = vmul.f32 %v3633, %v3635
    %v3637 = vadd.f32 %v3633, %v3636
    %vm3638 = vweird.f32 %v3585
    %vm3639 = vweird.f32 %v3633
    %vm3640 = vmor %vm3638, %vm3639
    %v3641 = vsel %vm3640, %v3633, %v3637
    %v3642 = vand.u32 2147483647, %v3585
    %vm3643 = vcmp.eq.f32.partialorder %v3642, 8.507059e+37
    %v3644 = vand.u32 %v3585, 2147483648
    %v3645 = vor.u32 1.1754944e-38, %v3644
    %v3646 = vsel %vm3643, %v3645, %v3641
    %v3647 = vmul.f32 1.0, %v3646
    %v3648 = vrcp.pop %v3586
    %v3649 = vmul.f32 %v3586, %v3648
    %v3650 = vsub.f32 1.0, %v3649
    %v3651 = vmul.f32 %v3648, %v3650
    %v3652 = vadd.f32 %v3648, %v3651
    %vm3653 = vweird.f32 %v3586
    %vm3654 = vweird.f32 %v3648
    %vm3655 = vmor %vm3653, %vm3654
    %v3656 = vsel %vm3655, %v3648, %v3652
    %v3657 = vand.u32 2147483647, %v3586
    %vm3658 = vcmp.eq.f32.partialorder %v3657, 8.507059e+37
    %v3659 = vand.u32 %v3586, 2147483648
    %v3660 = vor.u32 1.1754944e-38, %v3659
    %v3661 = vsel %vm3658, %v3660, %v3656
    %v3662 = vmul.f32 1.0, %v3661
    %v3663 = vrcp.pop %v3587
    %v3664 = vmul.f32 %v3587, %v3663
    %v3665 = vsub.f32 1.0, %v3664
    %v3666 = vmul.f32 %v3663, %v3665
    %v3667 = vadd.f32 %v3663, %v3666
    %vm3668 = vweird.f32 %v3587
    %vm3669 = vweird.f32 %v3663
    %vm3670 = vmor %vm3668, %vm3669
    %v3671 = vsel %vm3670, %v3663, %v3667
    %v3672 = vand.u32 2147483647, %v3587
    %vm3673 = vcmp.eq.f32.partialorder %v3672, 8.507059e+37
    %v3674 = vand.u32 %v3587, 2147483648
    %v3675 = vor.u32 1.1754944e-38, %v3674
    %v3676 = vsel %vm3673, %v3675, %v3671
    %v3677 = vmul.f32 1.0, %v3676
    %v3678 = vtanh.pop %v3562
    %v3679 = vtanh.pop %v3563
    %v3680 = vmul.f32 %v3632, %v3226
    %v3681 = vmul.f32 %v3647, %v3227
    %v3682 = vmul.f32 %v3602, %v3678
    %v3683 = vmul.f32 %v3617, %v3679
    %v3684 = vadd.f32 %v3680, %v3682
    %v3685 = vadd.f32 %v3681, %v3683
    %v3686 = vtanh.pop %v3684
    %v3687 = vtanh.pop %v3685
    %v3688 = vmul.f32 %v3662, %v3686
    %v3689 = vmul.f32 %v3677, %v3687
    %s3690 = scalar_lea.vmem [#allocation2], 12
    %3691 = vst [vmem:[%s3690] sm:$0x3] %v3688
    %s3692 = scalar_lea.vmem [#allocation3], 2
    %3693 = vst [vmem:[%s3692] sm:$0x3] %v3689
    %3694 = vmatpush.msra.mxu0 %v353
    %3695 = vmatpush.msra.mxu0 %v345
    %3696 = vmatpush.msra.mxu0 %v337
    %3697 = vmatpush.msra.mxu0 %v329
    %3698 = vmatpush.msra.mxu0 %v321
    %3699 = vmatpush.msra.mxu0 %v313
    %3700 = vmatpush.msra.mxu0 %v305
    %3701 = vmatpush.msra.mxu0 %v297
    %3702 = vmatpush.msra.mxu0 %v289
    %3703 = vmatpush.msra.mxu0 %v281
    %3704 = vmatpush.msra.mxu0 %v273
    %3705 = vmatpush.msra.mxu0 %v265
    %3706 = vmatpush.msra.mxu0 %v257
    %3707 = vmatpush.msra.mxu0 %v249
    %3708 = vmatpush.msra.mxu0 %v241
    %3709 = vmatpush.msra.mxu0 %v233
    %3710 = vmatmul.f32.gmra.mxu0 %v3688
    %v3711 = vpop.f32.mrf.mxu0
    %v3712 = vadd.f32 0.0, %v3711
    %3713 = vdwg.mxu0
    %3714 = vmatpush.msra.mxu0 %v481
    %3715 = vmatpush.msra.mxu0 %v473
    %3716 = vmatpush.msra.mxu0 %v465
    %3717 = vmatpush.msra.mxu0 %v457
    %3718 = vmatpush.msra.mxu0 %v449
    %3719 = vmatpush.msra.mxu0 %v441
    %3720 = vmatpush.msra.mxu0 %v433
    %3721 = vmatpush.msra.mxu0 %v425
    %3722 = vmatpush.msra.mxu0 %v417
    %3723 = vmatpush.msra.mxu0 %v409
    %3724 = vmatpush.msra.mxu0 %v401
    %3725 = vmatpush.msra.mxu0 %v393
    %3726 = vmatpush.msra.mxu0 %v385
    %3727 = vmatpush.msra.mxu0 %v377
    %3728 = vmatpush.msra.mxu0 %v369
    %3729 = vmatpush.msra.mxu0 %v361
    %3730 = vmatmul.f32.gmra.mxu0 %v3689
    %v3731 = vpop.f32.mrf.mxu0
    %v3732 = vadd.f32 %v3712, %v3731
    %3733 = vdwg.mxu0
    %3734 = vmatpush.msra.mxu0 %v354
    %3735 = vmatpush.msra.mxu0 %v346
    %3736 = vmatpush.msra.mxu0 %v338
    %3737 = vmatpush.msra.mxu0 %v330
    %3738 = vmatpush.msra.mxu0 %v322
    %3739 = vmatpush.msra.mxu0 %v314
    %3740 = vmatpush.msra.mxu0 %v306
    %3741 = vmatpush.msra.mxu0 %v298
    %3742 = vmatpush.msra.mxu0 %v290
    %3743 = vmatpush.msra.mxu0 %v282
    %3744 = vmatpush.msra.mxu0 %v274
    %3745 = vmatpush.msra.mxu0 %v266
    %3746 = vmatpush.msra.mxu0 %v258
    %3747 = vmatpush.msra.mxu0 %v250
    %3748 = vmatpush.msra.mxu0 %v242
    %3749 = vmatpush.msra.mxu0 %v234
    %3750 = vmatmul.f32.gmra.mxu0 %v3688
    %v3751 = vpop.f32.mrf.mxu0
    %v3752 = vadd.f32 0.0, %v3751
    %3753 = vdwg.mxu0
    %3754 = vmatpush.msra.mxu0 %v482
    %3755 = vmatpush.msra.mxu0 %v474
    %3756 = vmatpush.msra.mxu0 %v466
    %3757 = vmatpush.msra.mxu0 %v458
    %3758 = vmatpush.msra.mxu0 %v450
    %3759 = vmatpush.msra.mxu0 %v442
    %3760 = vmatpush.msra.mxu0 %v434
    %3761 = vmatpush.msra.mxu0 %v426
    %3762 = vmatpush.msra.mxu0 %v418
    %3763 = vmatpush.msra.mxu0 %v410
    %3764 = vmatpush.msra.mxu0 %v402
    %3765 = vmatpush.msra.mxu0 %v394
    %3766 = vmatpush.msra.mxu0 %v386
    %3767 = vmatpush.msra.mxu0 %v378
    %3768 = vmatpush.msra.mxu0 %v370
    %3769 = vmatpush.msra.mxu0 %v362
    %3770 = vmatmul.f32.gmra.mxu0 %v3689
    %v3771 = vpop.f32.mrf.mxu0
    %v3772 = vadd.f32 %v3752, %v3771
    %3773 = vdwg.mxu0
    %3774 = vmatpush.msra.mxu0 %v355
    %3775 = vmatpush.msra.mxu0 %v347
    %3776 = vmatpush.msra.mxu0 %v339
    %3777 = vmatpush.msra.mxu0 %v331
    %3778 = vmatpush.msra.mxu0 %v323
    %3779 = vmatpush.msra.mxu0 %v315
    %3780 = vmatpush.msra.mxu0 %v307
    %3781 = vmatpush.msra.mxu0 %v299
    %3782 = vmatpush.msra.mxu0 %v291
    %3783 = vmatpush.msra.mxu0 %v283
    %3784 = vmatpush.msra.mxu0 %v275
    %3785 = vmatpush.msra.mxu0 %v267
    %3786 = vmatpush.msra.mxu0 %v259
    %3787 = vmatpush.msra.mxu0 %v251
    %3788 = vmatpush.msra.mxu0 %v243
    %3789 = vmatpush.msra.mxu0 %v235
    %3790 = vmatmul.f32.gmra.mxu0 %v3688
    %v3791 = vpop.f32.mrf.mxu0
    %v3792 = vadd.f32 0.0, %v3791
    %3793 = vdwg.mxu0
    %3794 = vmatpush.msra.mxu0 %v483
    %3795 = vmatpush.msra.mxu0 %v475
    %3796 = vmatpush.msra.mxu0 %v467
    %3797 = vmatpush.msra.mxu0 %v459
    %3798 = vmatpush.msra.mxu0 %v451
    %3799 = vmatpush.msra.mxu0 %v443
    %3800 = vmatpush.msra.mxu0 %v435
    %3801 = vmatpush.msra.mxu0 %v427
    %3802 = vmatpush.msra.mxu0 %v419
    %3803 = vmatpush.msra.mxu0 %v411
    %3804 = vmatpush.msra.mxu0 %v403
    %3805 = vmatpush.msra.mxu0 %v395
    %3806 = vmatpush.msra.mxu0 %v387
    %3807 = vmatpush.msra.mxu0 %v379
    %3808 = vmatpush.msra.mxu0 %v371
    %3809 = vmatpush.msra.mxu0 %v363
    %3810 = vmatmul.f32.gmra.mxu0 %v3689
    %v3811 = vpop.f32.mrf.mxu0
    %v3812 = vadd.f32 %v3792, %v3811
    %3813 = vdwg.mxu0
    %3814 = vmatpush.msra.mxu0 %v356
    %3815 = vmatpush.msra.mxu0 %v348
    %3816 = vmatpush.msra.mxu0 %v340
    %3817 = vmatpush.msra.mxu0 %v332
    %3818 = vmatpush.msra.mxu0 %v324
    %3819 = vmatpush.msra.mxu0 %v316
    %3820 = vmatpush.msra.mxu0 %v308
    %3821 = vmatpush.msra.mxu0 %v300
    %3822 = vmatpush.msra.mxu0 %v292
    %3823 = vmatpush.msra.mxu0 %v284
    %3824 = vmatpush.msra.mxu0 %v276
    %3825 = vmatpush.msra.mxu0 %v268
    %3826 = vmatpush.msra.mxu0 %v260
    %3827 = vmatpush.msra.mxu0 %v252
    %3828 = vmatpush.msra.mxu0 %v244
    %3829 = vmatpush.msra.mxu0 %v236
    %3830 = vmatmul.f32.gmra.mxu0 %v3688
    %v3831 = vpop.f32.mrf.mxu0
    %v3832 = vadd.f32 0.0, %v3831
    %3833 = vdwg.mxu0
    %3834 = vmatpush.msra.mxu0 %v484
    %3835 = vmatpush.msra.mxu0 %v476
    %3836 = vmatpush.msra.mxu0 %v468
    %3837 = vmatpush.msra.mxu0 %v460
    %3838 = vmatpush.msra.mxu0 %v452
    %3839 = vmatpush.msra.mxu0 %v444
    %3840 = vmatpush.msra.mxu0 %v436
    %3841 = vmatpush.msra.mxu0 %v428
    %3842 = vmatpush.msra.mxu0 %v420
    %3843 = vmatpush.msra.mxu0 %v412
    %3844 = vmatpush.msra.mxu0 %v404
    %3845 = vmatpush.msra.mxu0 %v396
    %3846 = vmatpush.msra.mxu0 %v388
    %3847 = vmatpush.msra.mxu0 %v380
    %3848 = vmatpush.msra.mxu0 %v372
    %3849 = vmatpush.msra.mxu0 %v364
    %3850 = vmatmul.f32.gmra.mxu0 %v3689
    %v3851 = vpop.f32.mrf.mxu0
    %v3852 = vadd.f32 %v3832, %v3851
    %3853 = vdwg.mxu0
    %3854 = vmatpush.msra.mxu0 %v357
    %3855 = vmatpush.msra.mxu0 %v349
    %3856 = vmatpush.msra.mxu0 %v341
    %3857 = vmatpush.msra.mxu0 %v333
    %3858 = vmatpush.msra.mxu0 %v325
    %3859 = vmatpush.msra.mxu0 %v317
    %3860 = vmatpush.msra.mxu0 %v309
    %3861 = vmatpush.msra.mxu0 %v301
    %3862 = vmatpush.msra.mxu0 %v293
    %3863 = vmatpush.msra.mxu0 %v285
    %3864 = vmatpush.msra.mxu0 %v277
    %3865 = vmatpush.msra.mxu0 %v269
    %3866 = vmatpush.msra.mxu0 %v261
    %3867 = vmatpush.msra.mxu0 %v253
    %3868 = vmatpush.msra.mxu0 %v245
    %3869 = vmatpush.msra.mxu0 %v237
    %3870 = vmatmul.f32.gmra.mxu0 %v3688
    %v3871 = vpop.f32.mrf.mxu0
    %v3872 = vadd.f32 0.0, %v3871
    %3873 = vdwg.mxu0
    %3874 = vmatpush.msra.mxu0 %v485
    %3875 = vmatpush.msra.mxu0 %v477
    %3876 = vmatpush.msra.mxu0 %v469
    %3877 = vmatpush.msra.mxu0 %v461
    %3878 = vmatpush.msra.mxu0 %v453
    %3879 = vmatpush.msra.mxu0 %v445
    %3880 = vmatpush.msra.mxu0 %v437
    %3881 = vmatpush.msra.mxu0 %v429
    %3882 = vmatpush.msra.mxu0 %v421
    %3883 = vmatpush.msra.mxu0 %v413
    %3884 = vmatpush.msra.mxu0 %v405
    %3885 = vmatpush.msra.mxu0 %v397
    %3886 = vmatpush.msra.mxu0 %v389
    %3887 = vmatpush.msra.mxu0 %v381
    %3888 = vmatpush.msra.mxu0 %v373
    %3889 = vmatpush.msra.mxu0 %v365
    %3890 = vmatmul.f32.gmra.mxu0 %v3689
    %v3891 = vpop.f32.mrf.mxu0
    %v3892 = vadd.f32 %v3872, %v3891
    %3893 = vdwg.mxu0
    %3894 = vmatpush.msra.mxu0 %v358
    %3895 = vmatpush.msra.mxu0 %v350
    %3896 = vmatpush.msra.mxu0 %v342
    %3897 = vmatpush.msra.mxu0 %v334
    %3898 = vmatpush.msra.mxu0 %v326
    %3899 = vmatpush.msra.mxu0 %v318
    %3900 = vmatpush.msra.mxu0 %v310
    %3901 = vmatpush.msra.mxu0 %v302
    %3902 = vmatpush.msra.mxu0 %v294
    %3903 = vmatpush.msra.mxu0 %v286
    %3904 = vmatpush.msra.mxu0 %v278
    %3905 = vmatpush.msra.mxu0 %v270
    %3906 = vmatpush.msra.mxu0 %v262
    %3907 = vmatpush.msra.mxu0 %v254
    %3908 = vmatpush.msra.mxu0 %v246
    %3909 = vmatpush.msra.mxu0 %v238
    %3910 = vmatmul.f32.gmra.mxu0 %v3688
    %v3911 = vpop.f32.mrf.mxu0
    %v3912 = vadd.f32 0.0, %v3911
    %3913 = vdwg.mxu0
    %3914 = vmatpush.msra.mxu0 %v486
    %3915 = vmatpush.msra.mxu0 %v478
    %3916 = vmatpush.msra.mxu0 %v470
    %3917 = vmatpush.msra.mxu0 %v462
    %3918 = vmatpush.msra.mxu0 %v454
    %3919 = vmatpush.msra.mxu0 %v446
    %3920 = vmatpush.msra.mxu0 %v438
    %3921 = vmatpush.msra.mxu0 %v430
    %3922 = vmatpush.msra.mxu0 %v422
    %3923 = vmatpush.msra.mxu0 %v414
    %3924 = vmatpush.msra.mxu0 %v406
    %3925 = vmatpush.msra.mxu0 %v398
    %3926 = vmatpush.msra.mxu0 %v390
    %3927 = vmatpush.msra.mxu0 %v382
    %3928 = vmatpush.msra.mxu0 %v374
    %3929 = vmatpush.msra.mxu0 %v366
    %3930 = vmatmul.f32.gmra.mxu0 %v3689
    %v3931 = vpop.f32.mrf.mxu0
    %v3932 = vadd.f32 %v3912, %v3931
    %3933 = vdwg.mxu0
    %3934 = vmatpush.msra.mxu0 %v359
    %3935 = vmatpush.msra.mxu0 %v351
    %3936 = vmatpush.msra.mxu0 %v343
    %3937 = vmatpush.msra.mxu0 %v335
    %3938 = vmatpush.msra.mxu0 %v327
    %3939 = vmatpush.msra.mxu0 %v319
    %3940 = vmatpush.msra.mxu0 %v311
    %3941 = vmatpush.msra.mxu0 %v303
    %3942 = vmatpush.msra.mxu0 %v295
    %3943 = vmatpush.msra.mxu0 %v287
    %3944 = vmatpush.msra.mxu0 %v279
    %3945 = vmatpush.msra.mxu0 %v271
    %3946 = vmatpush.msra.mxu0 %v263
    %3947 = vmatpush.msra.mxu0 %v255
    %3948 = vmatpush.msra.mxu0 %v247
    %3949 = vmatpush.msra.mxu0 %v239
    %3950 = vmatmul.f32.gmra.mxu0 %v3688
    %v3951 = vpop.f32.mrf.mxu0
    %v3952 = vadd.f32 0.0, %v3951
    %3953 = vdwg.mxu0
    %3954 = vmatpush.msra.mxu0 %v487
    %3955 = vmatpush.msra.mxu0 %v479
    %3956 = vmatpush.msra.mxu0 %v471
    %3957 = vmatpush.msra.mxu0 %v463
    %3958 = vmatpush.msra.mxu0 %v455
    %3959 = vmatpush.msra.mxu0 %v447
    %3960 = vmatpush.msra.mxu0 %v439
    %3961 = vmatpush.msra.mxu0 %v431
    %3962 = vmatpush.msra.mxu0 %v423
    %3963 = vmatpush.msra.mxu0 %v415
    %3964 = vmatpush.msra.mxu0 %v407
    %3965 = vmatpush.msra.mxu0 %v399
    %3966 = vmatpush.msra.mxu0 %v391
    %3967 = vmatpush.msra.mxu0 %v383
    %3968 = vmatpush.msra.mxu0 %v375
    %3969 = vmatpush.msra.mxu0 %v367
    %3970 = vmatmul.f32.gmra.mxu0 %v3689
    %v3971 = vpop.f32.mrf.mxu0
    %v3972 = vadd.f32 %v3952, %v3971
    %3973 = vdwg.mxu0
    %3974 = vmatpush.msra.mxu0 %v360
    %3975 = vmatpush.msra.mxu0 %v352
    %3976 = vmatpush.msra.mxu0 %v344
    %3977 = vmatpush.msra.mxu0 %v336
    %3978 = vmatpush.msra.mxu0 %v328
    %3979 = vmatpush.msra.mxu0 %v320
    %3980 = vmatpush.msra.mxu0 %v312
    %3981 = vmatpush.msra.mxu0 %v304
    %3982 = vmatpush.msra.mxu0 %v296
    %3983 = vmatpush.msra.mxu0 %v288
    %3984 = vmatpush.msra.mxu0 %v280
    %3985 = vmatpush.msra.mxu0 %v272
    %3986 = vmatpush.msra.mxu0 %v264
    %3987 = vmatpush.msra.mxu0 %v256
    %3988 = vmatpush.msra.mxu0 %v248
    %3989 = vmatpush.msra.mxu0 %v240
    %3990 = vmatmul.f32.gmra.mxu0 %v3688
    %v3991 = vpop.f32.mrf.mxu0
    %v3992 = vadd.f32 0.0, %v3991
    %3993 = vdwg.mxu0
    %3994 = vmatpush.msra.mxu0 %v488
    %3995 = vmatpush.msra.mxu0 %v480
    %3996 = vmatpush.msra.mxu0 %v472
    %3997 = vmatpush.msra.mxu0 %v464
    %3998 = vmatpush.msra.mxu0 %v456
    %3999 = vmatpush.msra.mxu0 %v448
    %4000 = vmatpush.msra.mxu0 %v440
    %4001 = vmatpush.msra.mxu0 %v432
    %4002 = vmatpush.msra.mxu0 %v424
    %4003 = vmatpush.msra.mxu0 %v416
    %4004 = vmatpush.msra.mxu0 %v408
    %4005 = vmatpush.msra.mxu0 %v400
    %4006 = vmatpush.msra.mxu0 %v392
    %4007 = vmatpush.msra.mxu0 %v384
    %4008 = vmatpush.msra.mxu0 %v376
    %4009 = vmatpush.msra.mxu0 %v368
    %4010 = vmatmul.f32.gmra.mxu0 %v3689
    %v4011 = vpop.f32.mrf.mxu0
    %v4012 = vadd.f32 %v3992, %v4011
    %4013 = vdwg.mxu0
    %v4014 = vadd.f32 %v91, %v3732
    %v4015 = vadd.f32 %v111, %v3772
    %v4016 = vadd.f32 %v131, %v3812
    %v4017 = vadd.f32 %v151, %v3852
    %v4018 = vadd.f32 %v171, %v3892
    %v4019 = vadd.f32 %v191, %v3932
    %v4020 = vadd.f32 %v211, %v3972
    %v4021 = vadd.f32 %v231, %v4012
    %v4022 = vxor.u32 %v4014, 2147483648
    %v4023 = vxor.u32 %v4015, 2147483648
    %v4024 = vxor.u32 %v4016, 2147483648
    %v4025 = vxor.u32 %v4017, 2147483648
    %v4026 = vxor.u32 %v4018, 2147483648
    %v4027 = vxor.u32 %v4019, 2147483648
    %v4028 = vmul.f32 %v4022, 1.442695
    %v4029 = vpow.pop %v4028
    %v4030 = vmul.f32 %v4023, 1.442695
    %v4031 = vpow.pop %v4030
    %v4032 = vmul.f32 %v4024, 1.442695
    %v4033 = vpow.pop %v4032
    %v4034 = vmul.f32 %v4025, 1.442695
    %v4035 = vpow.pop %v4034
    %v4036 = vmul.f32 %v4026, 1.442695
    %v4037 = vpow.pop %v4036
    %v4038 = vmul.f32 %v4027, 1.442695
    %v4039 = vpow.pop %v4038
    %v4040 = vadd.f32 %v4029, 1.0
    %v4041 = vadd.f32 %v4031, 1.0
    %v4042 = vadd.f32 %v4033, 1.0
    %v4043 = vadd.f32 %v4035, 1.0
    %v4044 = vadd.f32 %v4037, 1.0
    %v4045 = vadd.f32 %v4039, 1.0
    %v4046 = vrcp.pop %v4040
    %v4047 = vmul.f32 %v4040, %v4046
    %v4048 = vsub.f32 1.0, %v4047
    %v4049 = vmul.f32 %v4046, %v4048
    %v4050 = vadd.f32 %v4046, %v4049
    %vm4051 = vweird.f32 %v4040
    %vm4052 = vweird.f32 %v4046
    %vm4053 = vmor %vm4051, %vm4052
    %v4054 = vsel %vm4053, %v4046, %v4050
    %v4055 = vand.u32 2147483647, %v4040
    %vm4056 = vcmp.eq.f32.partialorder %v4055, 8.507059e+37
    %v4057 = vand.u32 %v4040, 2147483648
    %v4058 = vor.u32 1.1754944e-38, %v4057
    %v4059 = vsel %vm4056, %v4058, %v4054
    %v4060 = vmul.f32 1.0, %v4059
    %v4061 = vrcp.pop %v4041
    %v4062 = vmul.f32 %v4041, %v4061
    %v4063 = vsub.f32 1.0, %v4062
    %v4064 = vmul.f32 %v4061, %v4063
    %v4065 = vadd.f32 %v4061, %v4064
    %vm4066 = vweird.f32 %v4041
    %vm4067 = vweird.f32 %v4061
    %vm4068 = vmor %vm4066, %vm4067
    %v4069 = vsel %vm4068, %v4061, %v4065
    %v4070 = vand.u32 2147483647, %v4041
    %vm4071 = vcmp.eq.f32.partialorder %v4070, 8.507059e+37
    %v4072 = vand.u32 %v4041, 2147483648
    %v4073 = vor.u32 1.1754944e-38, %v4072
    %v4074 = vsel %vm4071, %v4073, %v4069
    %v4075 = vmul.f32 1.0, %v4074
    %v4076 = vrcp.pop %v4042
    %v4077 = vmul.f32 %v4042, %v4076
    %v4078 = vsub.f32 1.0, %v4077
    %v4079 = vmul.f32 %v4076, %v4078
    %v4080 = vadd.f32 %v4076, %v4079
    %vm4081 = vweird.f32 %v4042
    %vm4082 = vweird.f32 %v4076
    %vm4083 = vmor %vm4081, %vm4082
    %v4084 = vsel %vm4083, %v4076, %v4080
    %v4085 = vand.u32 2147483647, %v4042
    %vm4086 = vcmp.eq.f32.partialorder %v4085, 8.507059e+37
    %v4087 = vand.u32 %v4042, 2147483648
    %v4088 = vor.u32 1.1754944e-38, %v4087
    %v4089 = vsel %vm4086, %v4088, %v4084
    %v4090 = vmul.f32 1.0, %v4089
    %v4091 = vrcp.pop %v4043
    %v4092 = vmul.f32 %v4043, %v4091
    %v4093 = vsub.f32 1.0, %v4092
    %v4094 = vmul.f32 %v4091, %v4093
    %v4095 = vadd.f32 %v4091, %v4094
    %vm4096 = vweird.f32 %v4043
    %vm4097 = vweird.f32 %v4091
    %vm4098 = vmor %vm4096, %vm4097
    %v4099 = vsel %vm4098, %v4091, %v4095
    %v4100 = vand.u32 2147483647, %v4043
    %vm4101 = vcmp.eq.f32.partialorder %v4100, 8.507059e+37
    %v4102 = vand.u32 %v4043, 2147483648
    %v4103 = vor.u32 1.1754944e-38, %v4102
    %v4104 = vsel %vm4101, %v4103, %v4099
    %v4105 = vmul.f32 1.0, %v4104
    %v4106 = vrcp.pop %v4044
    %v4107 = vmul.f32 %v4044, %v4106
    %v4108 = vsub.f32 1.0, %v4107
    %v4109 = vmul.f32 %v4106, %v4108
    %v4110 = vadd.f32 %v4106, %v4109
    %vm4111 = vweird.f32 %v4044
    %vm4112 = vweird.f32 %v4106
    %vm4113 = vmor %vm4111, %vm4112
    %v4114 = vsel %vm4113, %v4106, %v4110
    %v4115 = vand.u32 2147483647, %v4044
    %vm4116 = vcmp.eq.f32.partialorder %v4115, 8.507059e+37
    %v4117 = vand.u32 %v4044, 2147483648
    %v4118 = vor.u32 1.1754944e-38, %v4117
    %v4119 = vsel %vm4116, %v4118, %v4114
    %v4120 = vmul.f32 1.0, %v4119
    %v4121 = vrcp.pop %v4045
    %v4122 = vmul.f32 %v4045, %v4121
    %v4123 = vsub.f32 1.0, %v4122
    %v4124 = vmul.f32 %v4121, %v4123
    %v4125 = vadd.f32 %v4121, %v4124
    %vm4126 = vweird.f32 %v4045
    %vm4127 = vweird.f32 %v4121
    %vm4128 = vmor %vm4126, %vm4127
    %v4129 = vsel %vm4128, %v4121, %v4125
    %v4130 = vand.u32 2147483647, %v4045
    %vm4131 = vcmp.eq.f32.partialorder %v4130, 8.507059e+37
    %v4132 = vand.u32 %v4045, 2147483648
    %v4133 = vor.u32 1.1754944e-38, %v4132
    %v4134 = vsel %vm4131, %v4133, %v4129
    %v4135 = vmul.f32 1.0, %v4134
    %v4136 = vtanh.pop %v4020
    %v4137 = vtanh.pop %v4021
    %v4138 = vmul.f32 %v4090, %v3684
    %v4139 = vmul.f32 %v4105, %v3685
    %v4140 = vmul.f32 %v4060, %v4136
    %v4141 = vmul.f32 %v4075, %v4137
    %v4142 = vadd.f32 %v4138, %v4140
    %v4143 = vadd.f32 %v4139, %v4141
    %v4144 = vtanh.pop %v4142
    %v4145 = vtanh.pop %v4143
    %v4146 = vmul.f32 %v4120, %v4144
    %v4147 = vmul.f32 %v4135, %v4145
    %s4148 = scalar_lea.vmem [#allocation2], 14
    %4149 = vst [vmem:[%s4148] sm:$0x3] %v4146
    %4150 = vst [vmem:[#allocation3] sm:$0x3] %v4147
    %v4151 = vld [vmem:[#allocation2] sm:$0x3]
    %v4152 = vld [vmem:[#allocation2 + $0x2] sm:$0x3]
    %v4153 = vld [vmem:[#allocation2 + $0x4] sm:$0x3]
    %v4154 = vld [vmem:[#allocation2 + $0x6] sm:$0x3]
    %v4155 = vld [vmem:[#allocation2 + $0x8] sm:$0x3]
    %v4156 = vld [vmem:[#allocation2 + $0xa] sm:$0x3]
    %v4157 = vld [vmem:[#allocation2 + $0xc] sm:$0x3]
    %v4158 = vld [vmem:[#allocation2 + $0xe] sm:$0x3]
    %v4159 = vld [vmem:[#allocation3] sm:$0x3]
    %v4160 = vld [vmem:[#allocation3 + $0x2] sm:$0x3]
    %v4161 = vld [vmem:[#allocation3 + $0x4] sm:$0x3]
    %v4162 = vld [vmem:[#allocation3 + $0x6] sm:$0x3]
    %v4163 = vld [vmem:[#allocation3 + $0x8] sm:$0x3]
    %v4164 = vld [vmem:[#allocation3 + $0xa] sm:$0x3]
    %v4165 = vld [vmem:[#allocation3 + $0xc] sm:$0x3]
    %v4166 = vld [vmem:[#allocation3 + $0xe] sm:$0x3]
    %v4167 = vxor.u32 %v4151, 2147483648
    %v4168 = vxor.u32 %v4152, 2147483648
    %v4169 = vxor.u32 %v4153, 2147483648
    %v4170 = vxor.u32 %v4154, 2147483648
    %v4171 = vxor.u32 %v4155, 2147483648
    %v4172 = vxor.u32 %v4156, 2147483648
    %v4173 = vxor.u32 %v4157, 2147483648
    %v4174 = vxor.u32 %v4158, 2147483648
    %v4175 = vmul.f32 %v4167, 1.442695
    %v4176 = vpow.pop %v4175
    %v4177 = vmul.f32 %v4168, 1.442695
    %v4178 = vpow.pop %v4177
    %v4179 = vmul.f32 %v4169, 1.442695
    %v4180 = vpow.pop %v4179
    %v4181 = vmul.f32 %v4170, 1.442695
    %v4182 = vpow.pop %v4181
    %v4183 = vmul.f32 %v4171, 1.442695
    %v4184 = vpow.pop %v4183
    %v4185 = vmul.f32 %v4172, 1.442695
    %v4186 = vpow.pop %v4185
    %v4187 = vmul.f32 %v4173, 1.442695
    %v4188 = vpow.pop %v4187
    %v4189 = vmul.f32 %v4174, 1.442695
    %v4190 = vpow.pop %v4189
    %v4191 = vadd.f32 %v4176, 1.0
    %v4192 = vadd.f32 %v4178, 1.0
    %v4193 = vadd.f32 %v4180, 1.0
    %v4194 = vadd.f32 %v4182, 1.0
    %v4195 = vadd.f32 %v4184, 1.0
    %v4196 = vadd.f32 %v4186, 1.0
    %v4197 = vadd.f32 %v4188, 1.0
    %v4198 = vadd.f32 %v4190, 1.0
    %v4199 = vrcp.pop %v4191
    %v4200 = vmul.f32 %v4191, %v4199
    %v4201 = vsub.f32 1.0, %v4200
    %v4202 = vmul.f32 %v4199, %v4201
    %v4203 = vadd.f32 %v4199, %v4202
    %vm4204 = vweird.f32 %v4191
    %vm4205 = vweird.f32 %v4199
    %vm4206 = vmor %vm4204, %vm4205
    %v4207 = vsel %vm4206, %v4199, %v4203
    %v4208 = vand.u32 2147483647, %v4191
    %vm4209 = vcmp.eq.f32.partialorder %v4208, 8.507059e+37
    %v4210 = vand.u32 %v4191, 2147483648
    %v4211 = vor.u32 1.1754944e-38, %v4210
    %v4212 = vsel %vm4209, %v4211, %v4207
    %v4213 = vmul.f32 1.0, %v4212
    %v4214 = vrcp.pop %v4192
    %v4215 = vmul.f32 %v4192, %v4214
    %v4216 = vsub.f32 1.0, %v4215
    %v4217 = vmul.f32 %v4214, %v4216
    %v4218 = vadd.f32 %v4214, %v4217
    %vm4219 = vweird.f32 %v4192
    %vm4220 = vweird.f32 %v4214
    %vm4221 = vmor %vm4219, %vm4220
    %v4222 = vsel %vm4221, %v4214, %v4218
    %v4223 = vand.u32 2147483647, %v4192
    %vm4224 = vcmp.eq.f32.partialorder %v4223, 8.507059e+37
    %v4225 = vand.u32 %v4192, 2147483648
    %v4226 = vor.u32 1.1754944e-38, %v4225
    %v4227 = vsel %vm4224, %v4226, %v4222
    %v4228 = vmul.f32 1.0, %v4227
    %v4229 = vrcp.pop %v4193
    %v4230 = vmul.f32 %v4193, %v4229
    %v4231 = vsub.f32 1.0, %v4230
    %v4232 = vmul.f32 %v4229, %v4231
    %v4233 = vadd.f32 %v4229, %v4232
    %vm4234 = vweird.f32 %v4193
    %vm4235 = vweird.f32 %v4229
    %vm4236 = vmor %vm4234, %vm4235
    %v4237 = vsel %vm4236, %v4229, %v4233
    %v4238 = vand.u32 2147483647, %v4193
    %vm4239 = vcmp.eq.f32.partialorder %v4238, 8.507059e+37
    %v4240 = vand.u32 %v4193, 2147483648
    %v4241 = vor.u32 1.1754944e-38, %v4240
    %v4242 = vsel %vm4239, %v4241, %v4237
    %v4243 = vmul.f32 1.0, %v4242
    %v4244 = vrcp.pop %v4194
    %v4245 = vmul.f32 %v4194, %v4244
    %v4246 = vsub.f32 1.0, %v4245
    %v4247 = vmul.f32 %v4244, %v4246
    %v4248 = vadd.f32 %v4244, %v4247
    %vm4249 = vweird.f32 %v4194
    %vm4250 = vweird.f32 %v4244
    %vm4251 = vmor %vm4249, %vm4250
    %v4252 = vsel %vm4251, %v4244, %v4248
    %v4253 = vand.u32 2147483647, %v4194
    %vm4254 = vcmp.eq.f32.partialorder %v4253, 8.507059e+37
    %v4255 = vand.u32 %v4194, 2147483648
    %v4256 = vor.u32 1.1754944e-38, %v4255
    %v4257 = vsel %vm4254, %v4256, %v4252
    %v4258 = vmul.f32 1.0, %v4257
    %v4259 = vrcp.pop %v4195
    %v4260 = vmul.f32 %v4195, %v4259
    %v4261 = vsub.f32 1.0, %v4260
    %v4262 = vmul.f32 %v4259, %v4261
    %v4263 = vadd.f32 %v4259, %v4262
    %vm4264 = vweird.f32 %v4195
    %vm4265 = vweird.f32 %v4259
    %vm4266 = vmor %vm4264, %vm4265
    %v4267 = vsel %vm4266, %v4259, %v4263
    %v4268 = vand.u32 2147483647, %v4195
    %vm4269 = vcmp.eq.f32.partialorder %v4268, 8.507059e+37
    %v4270 = vand.u32 %v4195, 2147483648
    %v4271 = vor.u32 1.1754944e-38, %v4270
    %v4272 = vsel %vm4269, %v4271, %v4267
    %v4273 = vmul.f32 1.0, %v4272
    %v4274 = vrcp.pop %v4196
    %v4275 = vmul.f32 %v4196, %v4274
    %v4276 = vsub.f32 1.0, %v4275
    %v4277 = vmul.f32 %v4274, %v4276
    %v4278 = vadd.f32 %v4274, %v4277
    %vm4279 = vweird.f32 %v4196
    %vm4280 = vweird.f32 %v4274
    %vm4281 = vmor %vm4279, %vm4280
    %v4282 = vsel %vm4281, %v4274, %v4278
    %v4283 = vand.u32 2147483647, %v4196
    %vm4284 = vcmp.eq.f32.partialorder %v4283, 8.507059e+37
    %v4285 = vand.u32 %v4196, 2147483648
    %v4286 = vor.u32 1.1754944e-38, %v4285
    %v4287 = vsel %vm4284, %v4286, %v4282
    %v4288 = vmul.f32 1.0, %v4287
    %v4289 = vrcp.pop %v4197
    %v4290 = vmul.f32 %v4197, %v4289
    %v4291 = vsub.f32 1.0, %v4290
    %v4292 = vmul.f32 %v4289, %v4291
    %v4293 = vadd.f32 %v4289, %v4292
    %vm4294 = vweird.f32 %v4197
    %vm4295 = vweird.f32 %v4289
    %vm4296 = vmor %vm4294, %vm4295
    %v4297 = vsel %vm4296, %v4289, %v4293
    %v4298 = vand.u32 2147483647, %v4197
    %vm4299 = vcmp.eq.f32.partialorder %v4298, 8.507059e+37
    %v4300 = vand.u32 %v4197, 2147483648
    %v4301 = vor.u32 1.1754944e-38, %v4300
    %v4302 = vsel %vm4299, %v4301, %v4297
    %v4303 = vmul.f32 1.0, %v4302
    %v4304 = vrcp.pop %v4198
    %v4305 = vmul.f32 %v4198, %v4304
    %v4306 = vsub.f32 1.0, %v4305
    %v4307 = vmul.f32 %v4304, %v4306
    %v4308 = vadd.f32 %v4304, %v4307
    %vm4309 = vweird.f32 %v4198
    %vm4310 = vweird.f32 %v4304
    %vm4311 = vmor %vm4309, %vm4310
    %v4312 = vsel %vm4311, %v4304, %v4308
    %v4313 = vand.u32 2147483647, %v4198
    %vm4314 = vcmp.eq.f32.partialorder %v4313, 8.507059e+37
    %v4315 = vand.u32 %v4198, 2147483648
    %v4316 = vor.u32 1.1754944e-38, %v4315
    %v4317 = vsel %vm4314, %v4316, %v4312
    %v4318 = vmul.f32 1.0, %v4317
    %v4319 = vmul.f32 %v4151, %v4213
    %v4320 = vmul.f32 %v4152, %v4228
    %v4321 = vmul.f32 %v4153, %v4243
    %v4322 = vmul.f32 %v4154, %v4258
    %v4323 = vmul.f32 %v4155, %v4273
    %v4324 = vmul.f32 %v4156, %v4288
    %v4325 = vmul.f32 %v4157, %v4303
    %v4326 = vmul.f32 %v4158, %v4318
    %v4327 = vxor.u32 %v4159, 2147483648
    %v4328 = vxor.u32 %v4160, 2147483648
    %v4329 = vxor.u32 %v4161, 2147483648
    %v4330 = vxor.u32 %v4162, 2147483648
    %v4331 = vxor.u32 %v4163, 2147483648
    %v4332 = vxor.u32 %v4164, 2147483648
    %v4333 = vxor.u32 %v4165, 2147483648
    %v4334 = vxor.u32 %v4166, 2147483648
    %v4335 = vmul.f32 %v4327, 1.442695
    %v4336 = vpow.pop %v4335
    %v4337 = vmul.f32 %v4328, 1.442695
    %v4338 = vpow.pop %v4337
    %v4339 = vmul.f32 %v4329, 1.442695
    %v4340 = vpow.pop %v4339
    %v4341 = vmul.f32 %v4330, 1.442695
    %v4342 = vpow.pop %v4341
    %v4343 = vmul.f32 %v4331, 1.442695
    %v4344 = vpow.pop %v4343
    %v4345 = vmul.f32 %v4332, 1.442695
    %v4346 = vpow.pop %v4345
    %v4347 = vmul.f32 %v4333, 1.442695
    %v4348 = vpow.pop %v4347
    %v4349 = vmul.f32 %v4334, 1.442695
    %v4350 = vpow.pop %v4349
    %v4351 = vadd.f32 %v4336, 1.0
    %v4352 = vadd.f32 %v4338, 1.0
    %v4353 = vadd.f32 %v4340, 1.0
    %v4354 = vadd.f32 %v4342, 1.0
    %v4355 = vadd.f32 %v4344, 1.0
    %v4356 = vadd.f32 %v4346, 1.0
    %v4357 = vadd.f32 %v4348, 1.0
    %v4358 = vadd.f32 %v4350, 1.0
    %v4359 = vrcp.pop %v4351
    %v4360 = vmul.f32 %v4351, %v4359
    %v4361 = vsub.f32 1.0, %v4360
    %v4362 = vmul.f32 %v4359, %v4361
    %v4363 = vadd.f32 %v4359, %v4362
    %vm4364 = vweird.f32 %v4351
    %vm4365 = vweird.f32 %v4359
    %vm4366 = vmor %vm4364, %vm4365
    %v4367 = vsel %vm4366, %v4359, %v4363
    %v4368 = vand.u32 2147483647, %v4351
    %vm4369 = vcmp.eq.f32.partialorder %v4368, 8.507059e+37
    %v4370 = vand.u32 %v4351, 2147483648
    %v4371 = vor.u32 1.1754944e-38, %v4370
    %v4372 = vsel %vm4369, %v4371, %v4367
    %v4373 = vmul.f32 1.0, %v4372
    %v4374 = vrcp.pop %v4352
    %v4375 = vmul.f32 %v4352, %v4374
    %v4376 = vsub.f32 1.0, %v4375
    %v4377 = vmul.f32 %v4374, %v4376
    %v4378 = vadd.f32 %v4374, %v4377
    %vm4379 = vweird.f32 %v4352
    %vm4380 = vweird.f32 %v4374
    %vm4381 = vmor %vm4379, %vm4380
    %v4382 = vsel %vm4381, %v4374, %v4378
    %v4383 = vand.u32 2147483647, %v4352
    %vm4384 = vcmp.eq.f32.partialorder %v4383, 8.507059e+37
    %v4385 = vand.u32 %v4352, 2147483648
    %v4386 = vor.u32 1.1754944e-38, %v4385
    %v4387 = vsel %vm4384, %v4386, %v4382
    %v4388 = vmul.f32 1.0, %v4387
    %v4389 = vrcp.pop %v4353
    %v4390 = vmul.f32 %v4353, %v4389
    %v4391 = vsub.f32 1.0, %v4390
    %v4392 = vmul.f32 %v4389, %v4391
    %v4393 = vadd.f32 %v4389, %v4392
    %vm4394 = vweird.f32 %v4353
    %vm4395 = vweird.f32 %v4389
    %vm4396 = vmor %vm4394, %vm4395
    %v4397 = vsel %vm4396, %v4389, %v4393
    %v4398 = vand.u32 2147483647, %v4353
    %vm4399 = vcmp.eq.f32.partialorder %v4398, 8.507059e+37
    %v4400 = vand.u32 %v4353, 2147483648
    %v4401 = vor.u32 1.1754944e-38, %v4400
    %v4402 = vsel %vm4399, %v4401, %v4397
    %v4403 = vmul.f32 1.0, %v4402
    %v4404 = vrcp.pop %v4354
    %v4405 = vmul.f32 %v4354, %v4404
    %v4406 = vsub.f32 1.0, %v4405
    %v4407 = vmul.f32 %v4404, %v4406
    %v4408 = vadd.f32 %v4404, %v4407
    %vm4409 = vweird.f32 %v4354
    %vm4410 = vweird.f32 %v4404
    %vm4411 = vmor %vm4409, %vm4410
    %v4412 = vsel %vm4411, %v4404, %v4408
    %v4413 = vand.u32 2147483647, %v4354
    %vm4414 = vcmp.eq.f32.partialorder %v4413, 8.507059e+37
    %v4415 = vand.u32 %v4354, 2147483648
    %v4416 = vor.u32 1.1754944e-38, %v4415
    %v4417 = vsel %vm4414, %v4416, %v4412
    %v4418 = vmul.f32 1.0, %v4417
    %v4419 = vrcp.pop %v4355
    %v4420 = vmul.f32 %v4355, %v4419
    %v4421 = vsub.f32 1.0, %v4420
    %v4422 = vmul.f32 %v4419, %v4421
    %v4423 = vadd.f32 %v4419, %v4422
    %vm4424 = vweird.f32 %v4355
    %vm4425 = vweird.f32 %v4419
    %vm4426 = vmor %vm4424, %vm4425
    %v4427 = vsel %vm4426, %v4419, %v4423
    %v4428 = vand.u32 2147483647, %v4355
    %vm4429 = vcmp.eq.f32.partialorder %v4428, 8.507059e+37
    %v4430 = vand.u32 %v4355, 2147483648
    %v4431 = vor.u32 1.1754944e-38, %v4430
    %v4432 = vsel %vm4429, %v4431, %v4427
    %v4433 = vmul.f32 1.0, %v4432
    %v4434 = vrcp.pop %v4356
    %v4435 = vmul.f32 %v4356, %v4434
    %v4436 = vsub.f32 1.0, %v4435
    %v4437 = vmul.f32 %v4434, %v4436
    %v4438 = vadd.f32 %v4434, %v4437
    %vm4439 = vweird.f32 %v4356
    %vm4440 = vweird.f32 %v4434
    %vm4441 = vmor %vm4439, %vm4440
    %v4442 = vsel %vm4441, %v4434, %v4438
    %v4443 = vand.u32 2147483647, %v4356
    %vm4444 = vcmp.eq.f32.partialorder %v4443, 8.507059e+37
    %v4445 = vand.u32 %v4356, 2147483648
    %v4446 = vor.u32 1.1754944e-38, %v4445
    %v4447 = vsel %vm4444, %v4446, %v4442
    %v4448 = vmul.f32 1.0, %v4447
    %v4449 = vrcp.pop %v4357
    %v4450 = vmul.f32 %v4357, %v4449
    %v4451 = vsub.f32 1.0, %v4450
    %v4452 = vmul.f32 %v4449, %v4451
    %v4453 = vadd.f32 %v4449, %v4452
    %vm4454 = vweird.f32 %v4357
    %vm4455 = vweird.f32 %v4449
    %vm4456 = vmor %vm4454, %vm4455
    %v4457 = vsel %vm4456, %v4449, %v4453
    %v4458 = vand.u32 2147483647, %v4357
    %vm4459 = vcmp.eq.f32.partialorder %v4458, 8.507059e+37
    %v4460 = vand.u32 %v4357, 2147483648
    %v4461 = vor.u32 1.1754944e-38, %v4460
    %v4462 = vsel %vm4459, %v4461, %v4457
    %v4463 = vmul.f32 1.0, %v4462
    %v4464 = vrcp.pop %v4358
    %v4465 = vmul.f32 %v4358, %v4464
    %v4466 = vsub.f32 1.0, %v4465
    %v4467 = vmul.f32 %v4464, %v4466
    %v4468 = vadd.f32 %v4464, %v4467
    %vm4469 = vweird.f32 %v4358
    %vm4470 = vweird.f32 %v4464
    %vm4471 = vmor %vm4469, %vm4470
    %v4472 = vsel %vm4471, %v4464, %v4468
    %v4473 = vand.u32 2147483647, %v4358
    %vm4474 = vcmp.eq.f32.partialorder %v4473, 8.507059e+37
    %v4475 = vand.u32 %v4358, 2147483648
    %v4476 = vor.u32 1.1754944e-38, %v4475
    %v4477 = vsel %vm4474, %v4476, %v4472
    %v4478 = vmul.f32 1.0, %v4477
    %v4479 = vmul.f32 %v4159, %v4373
    %v4480 = vmul.f32 %v4160, %v4388
    %v4481 = vmul.f32 %v4161, %v4403
    %v4482 = vmul.f32 %v4162, %v4418
    %v4483 = vmul.f32 %v4163, %v4433
    %v4484 = vmul.f32 %v4164, %v4448
    %v4485 = vmul.f32 %v4165, %v4463
    %v4486 = vmul.f32 %v4166, %v4478
    %v4487 = vld [vmem:[%s4] sm:$0xff]
    %v4488 = vld [vmem:[%s4 + $0x8] sm:$0xff]
    %v4489 = vld [vmem:[%s4 + $0x10] sm:$0xff]
    %v4490 = vld [vmem:[%s4 + $0x18] sm:$0xff]
    %v4491 = vld [vmem:[%s4 + $0x20] sm:$0xff]
    %v4492 = vld [vmem:[%s4 + $0x28] sm:$0xff]
    %v4493 = vld [vmem:[%s4 + $0x30] sm:$0xff]
    %v4494 = vld [vmem:[%s4 + $0x38] sm:$0xff]
    %v4495 = vld [vmem:[%s4 + $0x40] sm:$0xff]
    %v4496 = vld [vmem:[%s4 + $0x48] sm:$0xff]
    %v4497 = vld [vmem:[%s4 + $0x50] sm:$0xff]
    %v4498 = vld [vmem:[%s4 + $0x58] sm:$0xff]
    %v4499 = vld [vmem:[%s4 + $0x60] sm:$0xff]
    %v4500 = vld [vmem:[%s4 + $0x68] sm:$0xff]
    %v4501 = vld [vmem:[%s4 + $0x70] sm:$0xff]
    %v4502 = vld [vmem:[%s4 + $0x78] sm:$0xff]
    %v4503 = vld [vmem:[%s5] sm:$0xff]
    %v4504 = vld [vmem:[%s5 + $0x8] sm:$0xff]
    %v4505 = vld [vmem:[%s5 + $0x10] sm:$0xff]
    %v4506 = vld [vmem:[%s5 + $0x18] sm:$0xff]
    %v4507 = vld [vmem:[%s5 + $0x20] sm:$0xff]
    %v4508 = vld [vmem:[%s5 + $0x28] sm:$0xff]
    %v4509 = vld [vmem:[%s5 + $0x30] sm:$0xff]
    %v4510 = vld [vmem:[%s5 + $0x38] sm:$0xff]
    %v4511 = vld [vmem:[%s5 + $0x40] sm:$0xff]
    %v4512 = vld [vmem:[%s5 + $0x48] sm:$0xff]
    %v4513 = vld [vmem:[%s5 + $0x50] sm:$0xff]
    %v4514 = vld [vmem:[%s5 + $0x58] sm:$0xff]
    %v4515 = vld [vmem:[%s5 + $0x60] sm:$0xff]
    %v4516 = vld [vmem:[%s5 + $0x68] sm:$0xff]
    %v4517 = vld [vmem:[%s5 + $0x70] sm:$0xff]
    %v4518 = vld [vmem:[%s5 + $0x78] sm:$0xff]
    %4527 = vst [vmem:[#allocation1] ss:$4 sm:$0xff] %v4479
    %s4528 = scalar_lea.vmem [#allocation1], 1
    %4529 = vst [vmem:[%s4528] ss:$4 sm:$0xff] %v4480
    %s4530 = scalar_lea.vmem [#allocation1], 2
    %4531 = vst [vmem:[%s4530] ss:$4 sm:$0xff] %v4481
    %s4532 = scalar_lea.vmem [#allocation1], 3
    %4533 = vst [vmem:[%s4532] ss:$4 sm:$0xff] %v4482
    %s4534 = scalar_lea.vmem [#allocation1], 32
    %4535 = vst [vmem:[%s4534] ss:$4 sm:$0xff] %v4483
    %s4536 = scalar_lea.vmem [#allocation1], 33
    %4537 = vst [vmem:[%s4536] ss:$4 sm:$0xff] %v4484
    %s4538 = scalar_lea.vmem [#allocation1], 34
    %4539 = vst [vmem:[%s4538] ss:$4 sm:$0xff] %v4485
    %s4540 = scalar_lea.vmem [#allocation1], 35
    %4541 = vst [vmem:[%s4540] ss:$4 sm:$0xff] %v4486
    %v4542 = vld.sshfl [vmem:[#allocation1] sm:$0xff pattern:$0x73625140]
    %v4543 = vld.sshfl [vmem:[#allocation1 + $0x20] sm:$0xff pattern:$0x73625140]
    %4546 = vmatpush.msra.mxu0 %v4518
    %4547 = vmatpush.msra.mxu0 %v4517
    %4548 = vmatpush.msra.mxu0 %v4516
    %4549 = vmatpush.msra.mxu0 %v4515
    %4550 = vmatpush.msra.mxu0 %v4514
    %4551 = vmatpush.msra.mxu0 %v4513
    %4552 = vmatpush.msra.mxu0 %v4512
    %4553 = vmatpush.msra.mxu0 %v4511
    %4554 = vmatpush.msra.mxu0 %v4510
    %4555 = vmatpush.msra.mxu0 %v4509
    %4556 = vmatpush.msra.mxu0 %v4508
    %4557 = vmatpush.msra.mxu0 %v4507
    %4558 = vmatpush.msra.mxu0 %v4506
    %4559 = vmatpush.msra.mxu0 %v4505
    %4560 = vmatpush.msra.mxu0 %v4504
    %4561 = vmatpush.msra.mxu0 %v4503
    %4562 = vmatmul.f32.gmra.mxu0 %v4542
    %v4563 = vpop.f32.mrf.mxu0
    %v4564 = vadd.f32 0.0, %v4563
    %4565 = vmatmul.f32.gmra.mxu0 %v4543
    %v4566 = vpop.f32.mrf.mxu0
    %v4567 = vadd.f32 0.0, %v4566
    %4568 = vdwg.mxu0
    %4577 = vst [vmem:[#allocation1] ss:$4 sm:$0xff] %v4319
    %s4578 = scalar_lea.vmem [#allocation1], 1
    %4579 = vst [vmem:[%s4578] ss:$4 sm:$0xff] %v4320
    %s4580 = scalar_lea.vmem [#allocation1], 2
    %4581 = vst [vmem:[%s4580] ss:$4 sm:$0xff] %v4321
    %s4582 = scalar_lea.vmem [#allocation1], 3
    %4583 = vst [vmem:[%s4582] ss:$4 sm:$0xff] %v4322
    %s4584 = scalar_lea.vmem [#allocation1], 32
    %4585 = vst [vmem:[%s4584] ss:$4 sm:$0xff] %v4323
    %s4586 = scalar_lea.vmem [#allocation1], 33
    %4587 = vst [vmem:[%s4586] ss:$4 sm:$0xff] %v4324
    %s4588 = scalar_lea.vmem [#allocation1], 34
    %4589 = vst [vmem:[%s4588] ss:$4 sm:$0xff] %v4325
    %s4590 = scalar_lea.vmem [#allocation1], 35
    %4591 = vst [vmem:[%s4590] ss:$4 sm:$0xff] %v4326
    %v4592 = vld.sshfl [vmem:[#allocation1] sm:$0xff pattern:$0x73625140]
    %v4593 = vld.sshfl [vmem:[#allocation1 + $0x20] sm:$0xff pattern:$0x73625140]
    %4596 = vmatpush.msra.mxu0 %v4502
    %4597 = vmatpush.msra.mxu0 %v4501
    %4598 = vmatpush.msra.mxu0 %v4500
    %4599 = vmatpush.msra.mxu0 %v4499
    %4600 = vmatpush.msra.mxu0 %v4498
    %4601 = vmatpush.msra.mxu0 %v4497
    %4602 = vmatpush.msra.mxu0 %v4496
    %4603 = vmatpush.msra.mxu0 %v4495
    %4604 = vmatpush.msra.mxu0 %v4494
    %4605 = vmatpush.msra.mxu0 %v4493
    %4606 = vmatpush.msra.mxu0 %v4492
    %4607 = vmatpush.msra.mxu0 %v4491
    %4608 = vmatpush.msra.mxu0 %v4490
    %4609 = vmatpush.msra.mxu0 %v4489
    %4610 = vmatpush.msra.mxu0 %v4488
    %4611 = vmatpush.msra.mxu0 %v4487
    %4612 = vmatmul.f32.gmra.mxu0 %v4592
    %v4613 = vpop.f32.mrf.mxu0
    %v4614 = vadd.f32 %v4564, %v4613
    %4615 = vmatmul.f32.gmra.mxu0 %v4593
    %v4616 = vpop.f32.mrf.mxu0
    %v4617 = vadd.f32 %v4567, %v4616
    %4618 = vdwg.mxu0
    %v4619 = vld [vmem:[%s6] sm:$0x1]
    %v4621 = vperm.slane %v4619, 0
    %v4623 = vadd.f32 %v4614, %v4621
    %v4624 = vadd.f32 %v4617, %v4621
    %v4627 = vrot.slane %v4623, 2
    %v4628 = vrot.slane %v4623, 4
    %v4629 = vrot.slane %v4623, 6
    %v4630 = vrot.slane %v4624, 2
    %v4631 = vrot.slane %v4624, 4
    %v4632 = vrot.slane %v4624, 6
    %vm4639 = vcmask 25600
    %4640 = vst.msk [vmem:[%s7] sm:$0x3] %vm4639, %v4623
    %4641 = vst.msk [vmem:[%s7 + $0x2] sm:$0x3] %vm4639, %v4627
    %4642 = vst.msk [vmem:[%s7 + $0x4] sm:$0x3] %vm4639, %v4628
    %4643 = vst.msk [vmem:[%s7 + $0x6] sm:$0x3] %vm4639, %v4629
    %4644 = vst.msk [vmem:[%s7 + $0x8] sm:$0x3] %vm4639, %v4624
    %4645 = vst.msk [vmem:[%s7 + $0xa] sm:$0x3] %vm4639, %v4630
    %4646 = vst.msk [vmem:[%s7 + $0xc] sm:$0x3] %vm4639, %v4631
    %4647 = vst.msk [vmem:[%s7 + $0xe] sm:$0x3] %vm4639, %v4632
    // Predicated region
    $region34: #{decoder_forward.1} parent=1 // pred_check
      _
    $region35: #{decoder_forward.1} parent=1 // pred_check_branch
      %4649 = sbr.rel (0) target = $region37
    $region36: #{decoder_forward.1} parent=1 // pred_region
      _
    $region37: #{decoder_forward.1} parent=1 // pred_fallthru
      _
    // Predicated region
    $region38: #{decoder_forward.1} parent=1 // pred_check
      _
    $region39: #{decoder_forward.1} parent=1 // pred_check_branch
      %4651 = sbr.rel (0) target = $region41
    $region40: #{decoder_forward.1} parent=1 // pred_region
      _
    $region41: #{decoder_forward.1} parent=1 // pred_fallthru
      _
    %4652 = vsyncpa [#allocation5], 1

</llo_original>
